<compile_context>
chip_gen: v6e
topology: v6e:2x2x1
jax: 0.10.0
libtpu: 0.0.40
codegen_flags: <defaults>
</compile_context>

<pallas_src>
import functools
import math

import jax
import jax.numpy as jnp
import numpy as np
from jax.experimental import pallas as pl
from jax.experimental.pallas import tpu as pltpu


_VMEM_LIMIT = 32 * 1024 * 1024   # safe scoped-VMEM request on v5e / v6e / v7x


def _pick_tile(total: int, target: int) -> int:
    """Largest divisor of `total` that is <= target and a multiple of 8 (else full)."""
    if total <= target:
        return total
    for d in range(target, 7, -1):
        if total % d == 0 and d % 8 == 0:
            return d
    return total


# --------------------------------------------------------------------------- #
# Kernel 1: GroupNorm statistics (per batch, tiled over T, reduction axis last)#
# --------------------------------------------------------------------------- #
def _gn_stats_kernel(x_ref, gmat_ref, gmatT_ref, mean_ref, inv_ref,
                     ssum, ssq, *, n_elems, eps):
    t = pl.program_id(1)

    @pl.when(t == 0)
    def _():
        ssum[...] = jnp.zeros_like(ssum)
        ssq[...] = jnp.zeros_like(ssq)

    x = x_ref[...]                                     # (tstat, C) f32
    ssum[...] += jnp.sum(x, axis=0, keepdims=True)     # (1, C)
    ssq[...] += jnp.sum(x * x, axis=0, keepdims=True)  # (1, C)

    @pl.when(t == pl.num_programs(1) - 1)
    def _():
        # one-hot (C, G) matmul folds channels into groups; (G, C) broadcasts back
        gsum = jnp.dot(ssum[...], gmat_ref[...], preferred_element_type=jnp.float32)
        gsq = jnp.dot(ssq[...], gmat_ref[...], preferred_element_type=jnp.float32)
        gmean = gsum / n_elems
        gvar = gsq / n_elems - gmean * gmean           # biased variance (torch GroupNorm)
        ginv = jax.lax.rsqrt(gvar + eps)
        mean_ref[...] = jnp.dot(gmean, gmatT_ref[...], preferred_element_type=jnp.float32)
        inv_ref[...] = jnp.dot(ginv, gmatT_ref[...], preferred_element_type=jnp.float32)


# --------------------------------------------------------------------------- #
# Kernel 2: fused GroupNorm normalize+affine and per-head qkv projection.      #
# --------------------------------------------------------------------------- #
def _norm_qkv_kernel(x_ref, mean_ref, inv_ref, gw_ref, gb_ref,
                     wq_ref, wk_ref, wv_ref, bq_ref, bk_ref, bv_ref,
                     q_ref, k_ref, v_ref):
    xn = (x_ref[...] - mean_ref[...]) * inv_ref[...] * gw_ref[...] + gb_ref[...]
    xn = xn.astype(jnp.bfloat16)                       # bf16 MXU operands, f32 accumulate
    q = jnp.dot(xn, wq_ref[...], preferred_element_type=jnp.float32) + bq_ref[...]
    k = jnp.dot(xn, wk_ref[...], preferred_element_type=jnp.float32) + bk_ref[...]
    v = jnp.dot(xn, wv_ref[...], preferred_element_type=jnp.float32) + bv_ref[...]
    q_ref[...] = q.astype(q_ref.dtype)
    k_ref[...] = k.astype(k_ref.dtype)
    v_ref[...] = v.astype(v_ref.dtype)


# --------------------------------------------------------------------------- #
# Kernel 3: flash attention (online softmax; k-tile grid axis is "arbitrary"). #
# --------------------------------------------------------------------------- #
def _flash_attn_kernel(q_ref, k_ref, v_ref, o_ref, m_sc, l_sc, acc_sc):
    ki = pl.program_id(3)

    @pl.when(ki == 0)
    def _():
        m_sc[...] = jnp.full_like(m_sc, -jnp.inf)
        l_sc[...] = jnp.zeros_like(l_sc)
        acc_sc[...] = jnp.zeros_like(acc_sc)

    # (tq, dh) x (tk, dh) contracting dh -> (tq, tk); no explicit k transpose.
    # Scale is already folded into the q projection weights (scale^2 = 1/sqrt(dh)).
    s = jax.lax.dot_general(q_ref[...], k_ref[...], (((1,), (1,)), ((), ())),
                            preferred_element_type=jnp.float32)
    m_prev = m_sc[...]
    m_new = jnp.maximum(m_prev, jnp.max(s, axis=-1, keepdims=True))
    alpha = jnp.exp(m_prev - m_new)
    p = jnp.exp(s - m_new)
    l_sc[...] = alpha * l_sc[...] + jnp.sum(p, axis=-1, keepdims=True)
    acc_sc[...] = alpha * acc_sc[...] + jnp.dot(
        p.astype(jnp.bfloat16), v_ref[...], preferred_element_type=jnp.float32)
    m_sc[...] = m_new

    @pl.when(ki == pl.num_programs(3) - 1)
    def _():
        o_ref[...] = (acc_sc[...] * pl.reciprocal(l_sc[...], approx=True)
                      ).astype(o_ref.dtype)


# --------------------------------------------------------------------------- #
# Kernel 4: proj_out (accumulated over the head grid axis) + residual add.     #
# --------------------------------------------------------------------------- #
def _proj_residual_kernel(att_ref, wp_ref, x_ref, bp_ref, o_ref, acc_ref):
    h = pl.program_id(2)

    @pl.when(h == 0)
    def _():
        acc_ref[...] = jnp.zeros_like(acc_ref)

    acc_ref[...] += jnp.dot(att_ref[...], wp_ref[...],
                            preferred_element_type=jnp.float32)

    @pl.when(h == pl.num_programs(2) - 1)
    def _():
        o_ref[...] = (x_ref[...] + acc_ref[...] + bp_ref[...]).astype(o_ref.dtype)


# --------------------------------------------------------------------------- #
# Wrapper                                                                      #
# --------------------------------------------------------------------------- #
def quant_attention_block(x_nchw, params, *, num_heads, num_groups=32, eps=1e-5,
                          q_tile=256, k_tile=256, stat_tile=512):
    """QuantAttentionBlock forward.  x_nchw: (B, C, H, W) f32 -> (B, C, H, W) f32.

    Expected parameter layouts (all f32):
      gn_w, gn_b : (C,)
      w_qkv      : (C_in, 3*C_out) with output channels in QKVAttentionLegacy order
                   (per head: [q(dh), k(dh), v(dh)])
      b_qkv      : (3C,)
      w_proj     : (C_in, C_out)
      b_proj     : (C,)
    NOTE: a PyTorch Conv1d checkpoint stores weights as (C_out, C_in, 1); transpose
    them with `w.squeeze(-1).T` before passing in.
    """
    B, C, Hs, Ws = x_nchw.shape
    T = Hs * Ws
    G = num_groups
    nh = num_heads
    assert C % G == 0 and C % nh == 0
    dh = C // nh
    cpg = C // G

    # ---- host-side parameter prep (one-time, tiny) --------------------------
    qscale = 1.0 / math.sqrt(dh)                     # == (dh**-0.25)**2, folded into q only
    w_r = params["w_qkv"].reshape(C, nh, 3, dh)
    w_q = (jnp.transpose(w_r[:, :, 0, :], (1, 0, 2)) * qscale).astype(jnp.bfloat16)  # (nh, C, dh)
    w_k = jnp.transpose(w_r[:, :, 1, :], (1, 0, 2)).astype(jnp.bfloat16)
    w_v = jnp.transpose(w_r[:, :, 2, :], (1, 0, 2)).astype(jnp.bfloat16)
    b_r = params["b_qkv"].reshape(nh, 3, dh)
    b_q = (b_r[:, 0, :] * qscale).reshape(nh, 1, dh).astype(jnp.float32)
    b_k = b_r[:, 1, :].reshape(nh, 1, dh).astype(jnp.float32)
    b_v = b_r[:, 2, :].reshape(nh, 1, dh).astype(jnp.float32)
    w_proj_h = params["w_proj"].reshape(nh, dh, C).astype(jnp.bfloat16)               # (nh, dh, C)
    b_proj = params["b_proj"].reshape(1, C).astype(jnp.float32)
    gn_w = params["gn_w"].reshape(1, C).astype(jnp.float32)
    gn_b = params["gn_b"].reshape(1, C).astype(jnp.float32)

    # one-hot channel<->group matrices for the GroupNorm reduction on the MXU
    ch = np.arange(C)
    gmat_np = np.zeros((C, G), np.float32)
    gmat_np[ch, ch // cpg] = 1.0
    gmat = jnp.asarray(gmat_np)
    gmat_t = jnp.asarray(gmat_np.T)

    # channels-last activation layout (channels on the 128-lane axis)
    # TODO(synk): at production shapes fuse this transpose into the kernels
    # (read (C, T) blocks + in-kernel relayout) to save one HBM round trip of x.
    x_btc = jnp.transpose(x_nchw.reshape(B, C, T), (0, 2, 1)).astype(jnp.float32)

    tstat = _pick_tile(T, stat_tile)
    tq = _pick_tile(T, q_tile)
    tk = _pick_tile(T, k_tile)

    # ---- (1) GroupNorm statistics -------------------------------------------
    mean_c, inv_c = pl.pallas_call(
        functools.partial(_gn_stats_kernel, n_elems=float(T * cpg), eps=eps),
        out_shape=(jax.ShapeDtypeStruct((B, 1, C), jnp.float32),
                   jax.ShapeDtypeStruct((B, 1, C), jnp.float32)),
        grid=(B, T // tstat),
        in_specs=[
            pl.BlockSpec((None, tstat, C), lambda b, t: (b, t, 0)),
            pl.BlockSpec((C, G), lambda b, t: (0, 0)),
            pl.BlockSpec((G, C), lambda b, t: (0, 0)),
        ],
        out_specs=(
            pl.BlockSpec((None, 1, C), lambda b, t: (b, 0, 0)),
            pl.BlockSpec((None, 1, C), lambda b, t: (b, 0, 0)),
        ),
        scratch_shapes=[pltpu.VMEM((1, C), jnp.float32),
                        pltpu.VMEM((1, C), jnp.float32)],
        compiler_params=pltpu.CompilerParams(
            dimension_semantics=("parallel", "arbitrary"),
            vmem_limit_bytes=_VMEM_LIMIT),
    )(x_btc, gmat, gmat_t)

    # ---- (2) normalize + qkv projection, per head -> (B, nh, T, dh) bf16 -----
    q, k, v = pl.pallas_call(
        _norm_qkv_kernel,
        out_shape=tuple(jax.ShapeDtypeStruct((B, nh, T, dh), jnp.bfloat16)
                        for _ in range(3)),
        grid=(B, nh, T // tq),
        in_specs=[
            pl.BlockSpec((None, tq, C), lambda b, h, t: (b, t, 0)),   # x
            pl.BlockSpec((None, 1, C), lambda b, h, t: (b, 0, 0)),    # mean
            pl.BlockSpec((None, 1, C), lambda b, h, t: (b, 0, 0)),    # rsqrt(var)
            pl.BlockSpec((1, C), lambda b, h, t: (0, 0)),             # gn weight
            pl.BlockSpec((1, C), lambda b, h, t: (0, 0)),             # gn bias
            pl.BlockSpec((None, C, dh), lambda b, h, t: (h, 0, 0)),   # w_q (per head)
            pl.BlockSpec((None, C, dh), lambda b, h, t: (h, 0, 0)),   # w_k
            pl.BlockSpec((None, C, dh), lambda b, h, t: (h, 0, 0)),   # w_v
            pl.BlockSpec((None, 1, dh), lambda b, h, t: (h, 0, 0)),   # b_q
            pl.BlockSpec((None, 1, dh), lambda b, h, t: (h, 0, 0)),   # b_k
            pl.BlockSpec((None, 1, dh), lambda b, h, t: (h, 0, 0)),   # b_v
        ],
        out_specs=tuple(
            pl.BlockSpec((None, None, tq, dh), lambda b, h, t: (b, h, t, 0))
            for _ in range(3)),
        compiler_params=pltpu.CompilerParams(
            dimension_semantics=("parallel", "parallel", "parallel"),
            vmem_limit_bytes=_VMEM_LIMIT),
    )(x_btc, mean_c, inv_c, gn_w, gn_b, w_q, w_k, w_v, b_q, b_k, b_v)

    # ---- (3) flash attention --------------------------------------------------
    att = pl.pallas_call(
        _flash_attn_kernel,
        out_shape=jax.ShapeDtypeStruct((B, nh, T, dh), jnp.bfloat16),
        grid=(B, nh, T // tq, T // tk),
        in_specs=[
            pl.BlockSpec((None, None, tq, dh), lambda b, h, qi, ki: (b, h, qi, 0)),
            pl.BlockSpec((None, None, tk, dh), lambda b, h, qi, ki: (b, h, ki, 0)),
            pl.BlockSpec((None, None, tk, dh), lambda b, h, qi, ki: (b, h, ki, 0)),
        ],
        out_specs=pl.BlockSpec((None, None, tq, dh), lambda b, h, qi, ki: (b, h, qi, 0)),
        scratch_shapes=[pltpu.VMEM((tq, 1), jnp.float32),     # running max
                        pltpu.VMEM((tq, 1), jnp.float32),     # running denominator
                        pltpu.VMEM((tq, dh), jnp.float32)],   # output accumulator
        compiler_params=pltpu.CompilerParams(
            dimension_semantics=("parallel", "parallel", "parallel", "arbitrary"),
            vmem_limit_bytes=_VMEM_LIMIT),
    )(q, k, v)

    # ---- (4) proj_out (accumulate over heads) + residual ----------------------
    out_btc = pl.pallas_call(
        _proj_residual_kernel,
        out_shape=jax.ShapeDtypeStruct((B, T, C), jnp.float32),
        grid=(B, T // tq, nh),
        in_specs=[
            pl.BlockSpec((None, None, tq, dh), lambda b, t, h: (b, h, t, 0)),  # attention out
            pl.BlockSpec((None, dh, C), lambda b, t, h: (h, 0, 0)),            # proj weight slice
            pl.BlockSpec((None, tq, C), lambda b, t, h: (b, t, 0)),            # residual x
            pl.BlockSpec((1, C), lambda b, t, h: (0, 0)),                      # proj bias
        ],
        out_specs=pl.BlockSpec((None, tq, C), lambda b, t, h: (b, t, 0)),
        scratch_shapes=[pltpu.VMEM((tq, C), jnp.float32)],
        compiler_params=pltpu.CompilerParams(
            dimension_semantics=("parallel", "parallel", "arbitrary"),
            vmem_limit_bytes=_VMEM_LIMIT),
    )(att, w_proj_h, x_btc, b_proj)

    return jnp.transpose(out_btc, (0, 2, 1)).reshape(B, C, Hs, Ws)


# --------------------------------------------------------------------------- #
# Plain-JAX f32 reference (mirror of AttentionBlock._forward / QKVAttentionLegacy)
# --------------------------------------------------------------------------- #
def _reference(x_nchw, params, *, num_heads, num_groups, eps=1e-5):
    B, C, H, W = x_nchw.shape
    T = H * W
    G = num_groups
    xr = x_nchw.reshape(B, C, T).astype(jnp.float32)

    xg = xr.reshape(B, G, C // G, T)
    mean = xg.mean(axis=(2, 3), keepdims=True)
    var = xg.var(axis=(2, 3), keepdims=True)
    xn = ((xg - mean) / jnp.sqrt(var + eps)).reshape(B, C, T)
    xn = xn * params["gn_w"][None, :, None] + params["gn_b"][None, :, None]

    qkv = jnp.einsum("co,bct->bot", params["w_qkv"], xn) + params["b_qkv"][None, :, None]

    dh = C // num_heads
    scale = 1.0 / math.sqrt(math.sqrt(dh))
    qkv_h = qkv.reshape(B * num_heads, 3 * dh, T)
    q, k, v = qkv_h[:, :dh], qkv_h[:, dh:2 * dh], qkv_h[:, 2 * dh:]
    w = jnp.einsum("bct,bcs->bts", q * scale, k * scale)
    w = jax.nn.softmax(w, axis=-1)
    a = jnp.einsum("bts,bcs->bct", w, v).reshape(B, C, T)

    h = jnp.einsum("co,bct->bot", params["w_proj"], a) + params["b_proj"][None, :, None]
    return (xr + h).reshape(B, C, H, W)


if __name__ == "__main__":
    # Small shapes consistent with the module: GroupNorm32 needs C divisible by 32.
    B, C, Hs, Ws = 2, 32, 8, 8
    NUM_HEADS = 4
    NUM_GROUPS = 32

    key = jax.random.PRNGKey(0)
    kx, k1, k2, k3, k4, k5, k6 = jax.random.split(key, 7)

    x = jax.random.normal(kx, (B, C, Hs, Ws), jnp.float32)

    # Deterministic synthetic parameters (proj_out is zero-init in the original
    # AttentionBlock; small random values here so the path is exercised).
    params = {
        "gn_w":   1.0 + 0.1 * jax.random.normal(k1, (C,), jnp.float32),
        "gn_b":   0.1 * jax.random.normal(k2, (C,), jnp.float32),
        "w_qkv":  0.2 * jax.random.normal(k3, (C, 3 * C), jnp.float32),  # (c_in, c_out), legacy order
        "b_qkv":  0.1 * jax.random.normal(k4, (3 * C,), jnp.float32),
        "w_proj": 0.2 * jax.random.normal(k5, (C, C), jnp.float32),      # (c_in, c_out)
        "b_proj": 0.1 * jax.random.normal(k6, (C,), jnp.float32),
    }

    fwd = jax.jit(functools.partial(quant_attention_block,
                                    num_heads=NUM_HEADS, num_groups=NUM_GROUPS))
    out = jax.block_until_ready(fwd(x, params))

    ref = _reference(x, params, num_heads=NUM_HEADS, num_groups=NUM_GROUPS)
    # bf16 MXU operands + approx reciprocal => loose tolerance; layout/logic bugs
    # would produce O(1) errors and still fail this check.
    np.testing.assert_allclose(np.asarray(out), np.asarray(ref), rtol=1e-1, atol=1e-1)

    print("KERNEL_OK")
</pallas_src>

<mosaic_0001>
module attributes {stable_mosaic.version = 11 : i64} {
  func.func @_gn_stats_kernel(%arg0: i32, %arg1: i32, %arg2: memref<1x64x32xf32, #tpu.memory_space<vmem>>, %arg3: memref<32x32xf32, #tpu.memory_space<vmem>>, %arg4: memref<32x32xf32, #tpu.memory_space<vmem>>, %arg5: memref<1x1x32xf32, #tpu.memory_space<vmem>>, %arg6: memref<1x1x32xf32, #tpu.memory_space<vmem>>, %arg7: memref<1x32xf32, #tpu.memory_space<vmem>>, %arg8: memref<1x32xf32, #tpu.memory_space<vmem>>) attributes {dimension_semantics = [#tpu.dimension_semantics<parallel>, #tpu.dimension_semantics<arbitrary>], iteration_bounds = array<i64: 2, 1>, scalar_prefetch = 0 : i64, scratch_operands = 2 : i64, tpu.core_type = #tpu.core_type<tc>, window_params = [{transform_indices = @transform_0, window_bounds = array<i64: 1, 64, 32>}, {pipeline_mode = #tpu.pipeline_mode<synchronous>, transform_indices = @transform_1, window_bounds = array<i64: 32, 32>}, {pipeline_mode = #tpu.pipeline_mode<synchronous>, transform_indices = @transform_2, window_bounds = array<i64: 32, 32>}, {transform_indices = @transform_3, window_bounds = array<i64: 1, 1, 32>}, {transform_indices = @transform_4, window_bounds = array<i64: 1, 1, 32>}]} {
    %c0_i32 = arith.constant 0 : i32
    %0 = arith.cmpi eq, %arg1, %c0_i32 : i32
    %1 = arith.extui %0 : i1 to i32
    %c0_i32_0 = arith.constant 0 : i32
    %2 = arith.cmpi ne, %1, %c0_i32_0 : i32
    scf.if %2 {
      %cst_14 = arith.constant 0.000000e+00 : f32
      %19 = vector.broadcast %cst_14 : f32 to vector<1x32xf32>
      %c0_15 = arith.constant 0 : index
      %c0_16 = arith.constant 0 : index
      %20 = vector.load %arg7[%c0_15, %c0_16] : memref<1x32xf32, #tpu.memory_space<vmem>>, vector<1x32xf32>
      tpu.vector_store %arg7[%c0_15, %c0_16], %19 {strides = array<i32>} : memref<1x32xf32, #tpu.memory_space<vmem>>, vector<1x32xf32>,
      %cst_17 = arith.constant 0.000000e+00 : f32
      %21 = vector.broadcast %cst_17 : f32 to vector<1x32xf32>
      %c0_18 = arith.constant 0 : index
      %c0_19 = arith.constant 0 : index
      %22 = vector.load %arg8[%c0_18, %c0_19] : memref<1x32xf32, #tpu.memory_space<vmem>>, vector<1x32xf32>
      tpu.vector_store %arg8[%c0_18, %c0_19], %21 {strides = array<i32>} : memref<1x32xf32, #tpu.memory_space<vmem>>, vector<1x32xf32>,
    } else {
    }
    %c0 = arith.constant 0 : index
    %c0_1 = arith.constant 0 : index
    %c0_2 = arith.constant 0 : index
    %3 = vector.load %arg2[%c0, %c0_1, %c0_2] : memref<1x64x32xf32, #tpu.memory_space<vmem>>, vector<1x64x32xf32>
    %4 = vector.shape_cast %3 : vector<1x64x32xf32> to vector<64x32xf32>
    %c0_3 = arith.constant 0 : index
    %c0_4 = arith.constant 0 : index
    %5 = vector.load %arg7[%c0_3, %c0_4] : memref<1x32xf32, #tpu.memory_space<vmem>>, vector<1x32xf32>
    %cst = arith.constant dense<0.000000e+00> : vector<32xf32>
    %6 = vector.multi_reduction <add>, %4, %cst [0] : vector<64x32xf32> to vector<32xf32>
    %7 = vector.shape_cast %6 : vector<32xf32> to vector<1x32xf32>
    %8 = arith.addf %5, %7 : vector<1x32xf32>
    %c0_5 = arith.constant 0 : index
    %c0_6 = arith.constant 0 : index
    %9 = vector.load %arg7[%c0_5, %c0_6] : memref<1x32xf32, #tpu.memory_space<vmem>>, vector<1x32xf32>
    tpu.vector_store %arg7[%c0_5, %c0_6], %8 {strides = array<i32>} : memref<1x32xf32, #tpu.memory_space<vmem>>, vector<1x32xf32>,
    %c0_7 = arith.constant 0 : index
    %c0_8 = arith.constant 0 : index
    %10 = vector.load %arg8[%c0_7, %c0_8] : memref<1x32xf32, #tpu.memory_space<vmem>>, vector<1x32xf32>
    %11 = arith.mulf %4, %4 : vector<64x32xf32>
    %cst_9 = arith.constant dense<0.000000e+00> : vector<32xf32>
    %12 = vector.multi_reduction <add>, %11, %cst_9 [0] : vector<64x32xf32> to vector<32xf32>
    %13 = vector.shape_cast %12 : vector<32xf32> to vector<1x32xf32>
    %14 = arith.addf %10, %13 : vector<1x32xf32>
    %c0_10 = arith.constant 0 : index
    %c0_11 = arith.constant 0 : index
    %15 = vector.load %arg8[%c0_10, %c0_11] : memref<1x32xf32, #tpu.memory_space<vmem>>, vector<1x32xf32>
    tpu.vector_store %arg8[%c0_10, %c0_11], %14 {strides = array<i32>} : memref<1x32xf32, #tpu.memory_space<vmem>>, vector<1x32xf32>,
    %c0_i32_12 = arith.constant 0 : i32
    %16 = arith.cmpi eq, %arg1, %c0_i32_12 : i32
    %17 = arith.extui %16 : i1 to i32
    %c0_i32_13 = arith.constant 0 : i32
    %18 = arith.cmpi ne, %17, %c0_i32_13 : i32
    scf.if %18 {
      %c0_14 = arith.constant 0 : index
      %c0_15 = arith.constant 0 : index
      %19 = vector.load %arg7[%c0_14, %c0_15] : memref<1x32xf32, #tpu.memory_space<vmem>>, vector<1x32xf32>
      %c0_16 = arith.constant 0 : index
      %c0_17 = arith.constant 0 : index
      %20 = vector.load %arg3[%c0_16, %c0_17] : memref<32x32xf32, #tpu.memory_space<vmem>>, vector<32x32xf32>
      %cst_18 = arith.constant dense<0.000000e+00> : vector<1x32xf32>
      %21 = tpu.matmul %19, %20, %cst_18 {dimension_numbers = #tpu.dot_dimension_numbers<[1], [0], [0], [1], [0, 0, 1, 1], [], []>} : vector<1x32xf32>, vector<32x32xf32>, vector<1x32xf32> -> vector<1x32xf32>
      %c0_19 = arith.constant 0 : index
      %c0_20 = arith.constant 0 : index
      %22 = vector.load %arg8[%c0_19, %c0_20] : memref<1x32xf32, #tpu.memory_space<vmem>>, vector<1x32xf32>
      %c0_21 = arith.constant 0 : index
      %c0_22 = arith.constant 0 : index
      %23 = vector.load %arg3[%c0_21, %c0_22] : memref<32x32xf32, #tpu.memory_space<vmem>>, vector<32x32xf32>
      %cst_23 = arith.constant dense<0.000000e+00> : vector<1x32xf32>
      %24 = tpu.matmul %22, %23, %cst_23 {dimension_numbers = #tpu.dot_dimension_numbers<[1], [0], [0], [1], [0, 0, 1, 1], [], []>} : vector<1x32xf32>, vector<32x32xf32>, vector<1x32xf32> -> vector<1x32xf32>
      %cst_24 = arith.constant 6.400000e+01 : f32
      %25 = vector.broadcast %cst_24 : f32 to vector<1x32xf32>
      %26 = arith.divf %21, %25 : vector<1x32xf32>
      %cst_25 = arith.constant 6.400000e+01 : f32
      %27 = vector.broadcast %cst_25 : f32 to vector<1x32xf32>
      %28 = arith.divf %24, %27 : vector<1x32xf32>
      %29 = arith.mulf %26, %26 : vector<1x32xf32>
      %30 = arith.subf %28, %29 : vector<1x32xf32>
      %cst_26 = arith.constant 9.99999974E-6 : f32
      %31 = vector.broadcast %cst_26 : f32 to vector<1x32xf32>
      %32 = arith.addf %30, %31 : vector<1x32xf32>
      %33 = math.rsqrt %32 : vector<1x32xf32>
      %c0_27 = arith.constant 0 : index
      %c0_28 = arith.constant 0 : index
      %34 = vector.load %arg4[%c0_27, %c0_28] : memref<32x32xf32, #tpu.memory_space<vmem>>, vector<32x32xf32>
      %cst_29 = arith.constant dense<0.000000e+00> : vector<1x32xf32>
      %35 = tpu.matmul %26, %34, %cst_29 {dimension_numbers = #tpu.dot_dimension_numbers<[1], [0], [0], [1], [0, 0, 1, 1], [], []>} : vector<1x32xf32>, vector<32x32xf32>, vector<1x32xf32> -> vector<1x32xf32>
      %c0_30 = arith.constant 0 : index
      %c0_31 = arith.constant 0 : index
      %c0_32 = arith.constant 0 : index
      %36 = vector.load %arg5[%c0_30, %c0_31, %c0_32] : memref<1x1x32xf32, #tpu.memory_space<vmem>>, vector<1x1x32xf32>
      %37 = vector.shape_cast %36 : vector<1x1x32xf32> to vector<1x32xf32>
      %38 = vector.shape_cast %35 : vector<1x32xf32> to vector<1x1x32xf32>
      tpu.vector_store %arg5[%c0_30, %c0_31, %c0_32], %38 {strides = array<i32>} : memref<1x1x32xf32, #tpu.memory_space<vmem>>, vector<1x1x32xf32>,
      %c0_33 = arith.constant 0 : index
      %c0_34 = arith.constant 0 : index
      %39 = vector.load %arg4[%c0_33, %c0_34] : memref<32x32xf32, #tpu.memory_space<vmem>>, vector<32x32xf32>
      %cst_35 = arith.constant dense<0.000000e+00> : vector<1x32xf32>
      %40 = tpu.matmul %33, %39, %cst_35 {dimension_numbers = #tpu.dot_dimension_numbers<[1], [0], [0], [1], [0, 0, 1, 1], [], []>} : vector<1x32xf32>, vector<32x32xf32>, vector<1x32xf32> -> vector<1x32xf32>
      %c0_36 = arith.constant 0 : index
      %c0_37 = arith.constant 0 : index
      %c0_38 = arith.constant 0 : index
      %41 = vector.load %arg6[%c0_36, %c0_37, %c0_38] : memref<1x1x32xf32, #tpu.memory_space<vmem>>, vector<1x1x32xf32>
      %42 = vector.shape_cast %41 : vector<1x1x32xf32> to vector<1x32xf32>
      %43 = vector.shape_cast %40 : vector<1x32xf32> to vector<1x1x32xf32>
      tpu.vector_store %arg6[%c0_36, %c0_37, %c0_38], %43 {strides = array<i32>} : memref<1x1x32xf32, #tpu.memory_space<vmem>>, vector<1x1x32xf32>,
    } else {
    }
    return
  }
  func.func @transform_0(%arg0: i32, %arg1: i32) -> (i32, i32, i32) {
    %c0_i32 = arith.constant 0 : i32
    %c0_i32_0 = arith.constant 0 : i32
    return %arg0, %arg1, %c0_i32 : i32, i32, i32
  }
  func.func @transform_1(%arg0: i32, %arg1: i32) -> (i32, i32) {
    %c0_i32 = arith.constant 0 : i32
    %c0_i32_0 = arith.constant 0 : i32
    %c0_i32_1 = arith.constant 0 : i32
    return %c0_i32, %c0_i32_0 : i32, i32
  }
  func.func @transform_2(%arg0: i32, %arg1: i32) -> (i32, i32) {
    %c0_i32 = arith.constant 0 : i32
    %c0_i32_0 = arith.constant 0 : i32
    %c0_i32_1 = arith.constant 0 : i32
    return %c0_i32, %c0_i32_0 : i32, i32
  }
  func.func @transform_3(%arg0: i32, %arg1: i32) -> (i32, i32, i32) {
    %c0_i32 = arith.constant 0 : i32
    %c0_i32_0 = arith.constant 0 : i32
    %c0_i32_1 = arith.constant 0 : i32
    return %arg0, %c0_i32, %c0_i32_0 : i32, i32, i32
  }
  func.func @transform_4(%arg0: i32, %arg1: i32) -> (i32, i32, i32) {
    %c0_i32 = arith.constant 0 : i32
    %c0_i32_0 = arith.constant 0 : i32
    %c0_i32_1 = arith.constant 0 : i32
    return %arg0, %c0_i32, %c0_i32_0 : i32, i32, i32
  }
}

module attributes {stable_mosaic.version = 11 : i64} {
  func.func @_norm_qkv_kernel(%arg0: i32, %arg1: i32, %arg2: i32, %arg3: memref<1x64x32xf32, #tpu.memory_space<vmem>>, %arg4: memref<1x1x32xf32, #tpu.memory_space<vmem>>, %arg5: memref<1x1x32xf32, #tpu.memory_space<vmem>>, %arg6: memref<1x32xf32, #tpu.memory_space<vmem>>, %arg7: memref<1x32xf32, #tpu.memory_space<vmem>>, %arg8: memref<1x32x8xbf16, #tpu.memory_space<vmem>>, %arg9: memref<1x32x8xbf16, #tpu.memory_space<vmem>>, %arg10: memref<1x32x8xbf16, #tpu.memory_space<vmem>>, %arg11: memref<1x1x8xf32, #tpu.memory_space<vmem>>, %arg12: memref<1x1x8xf32, #tpu.memory_space<vmem>>, %arg13: memref<1x1x8xf32, #tpu.memory_space<vmem>>, %arg14: memref<1x1x64x8xbf16, #tpu.memory_space<vmem>>, %arg15: memref<1x1x64x8xbf16, #tpu.memory_space<vmem>>, %arg16: memref<1x1x64x8xbf16, #tpu.memory_space<vmem>>) attributes {dimension_semantics = [#tpu.dimension_semantics<parallel>, #tpu.dimension_semantics<parallel>, #tpu.dimension_semantics<parallel>], iteration_bounds = array<i64: 2, 4, 1>, scalar_prefetch = 0 : i64, scratch_operands = 0 : i64, tpu.core_type = #tpu.core_type<tc>, window_params = [{transform_indices = @transform_0, window_bounds = array<i64: 1, 64, 32>}, {transform_indices = @transform_1, window_bounds = array<i64: 1, 1, 32>}, {transform_indices = @transform_2, window_bounds = array<i64: 1, 1, 32>}, {pipeline_mode = #tpu.pipeline_mode<synchronous>, transform_indices = @transform_3, window_bounds = array<i64: 1, 32>}, {pipeline_mode = #tpu.pipeline_mode<synchronous>, transform_indices = @transform_4, window_bounds = array<i64: 1, 32>}, {transform_indices = @transform_5, window_bounds = array<i64: 1, 32, 8>}, {transform_indices = @transform_6, window_bounds = array<i64: 1, 32, 8>}, {transform_indices = @transform_7, window_bounds = array<i64: 1, 32, 8>}, {transform_indices = @transform_8, window_bounds = array<i64: 1, 1, 8>}, {transform_indices = @transform_9, window_bounds = array<i64: 1, 1, 8>}, {transform_indices = @transform_10, window_bounds = array<i64: 1, 1, 8>}, {transform_indices = @transform_11, window_bounds = array<i64: 1, 1, 64, 8>}, {transform_indices = @transform_12, window_bounds = array<i64: 1, 1, 64, 8>}, {transform_indices = @transform_13, window_bounds = array<i64: 1, 1, 64, 8>}]} {
    %c0 = arith.constant 0 : index
    %c0_0 = arith.constant 0 : index
    %c0_1 = arith.constant 0 : index
    %0 = vector.load %arg3[%c0, %c0_0, %c0_1] : memref<1x64x32xf32, #tpu.memory_space<vmem>>, vector<1x64x32xf32>
    %1 = vector.shape_cast %0 : vector<1x64x32xf32> to vector<64x32xf32>
    %c0_2 = arith.constant 0 : index
    %c0_3 = arith.constant 0 : index
    %c0_4 = arith.constant 0 : index
    %2 = vector.load %arg4[%c0_2, %c0_3, %c0_4] : memref<1x1x32xf32, #tpu.memory_space<vmem>>, vector<1x1x32xf32>
    %3 = vector.shape_cast %2 : vector<1x1x32xf32> to vector<1x32xf32>
    %4 = vector.broadcast %3 : vector<1x32xf32> to vector<64x32xf32>
    %5 = arith.subf %1, %4 : vector<64x32xf32>
    %c0_5 = arith.constant 0 : index
    %c0_6 = arith.constant 0 : index
    %c0_7 = arith.constant 0 : index
    %6 = vector.load %arg5[%c0_5, %c0_6, %c0_7] : memref<1x1x32xf32, #tpu.memory_space<vmem>>, vector<1x1x32xf32>
    %7 = vector.shape_cast %6 : vector<1x1x32xf32> to vector<1x32xf32>
    %8 = vector.broadcast %7 : vector<1x32xf32> to vector<64x32xf32>
    %9 = arith.mulf %5, %8 : vector<64x32xf32>
    %c0_8 = arith.constant 0 : index
    %c0_9 = arith.constant 0 : index
    %10 = vector.load %arg6[%c0_8, %c0_9] : memref<1x32xf32, #tpu.memory_space<vmem>>, vector<1x32xf32>
    %11 = vector.broadcast %10 : vector<1x32xf32> to vector<64x32xf32>
    %12 = arith.mulf %9, %11 : vector<64x32xf32>
    %c0_10 = arith.constant 0 : index
    %c0_11 = arith.constant 0 : index
    %13 = vector.load %arg7[%c0_10, %c0_11] : memref<1x32xf32, #tpu.memory_space<vmem>>, vector<1x32xf32>
    %14 = vector.broadcast %13 : vector<1x32xf32> to vector<64x32xf32>
    %15 = arith.addf %12, %14 : vector<64x32xf32>
    %16 = arith.truncf %15 : vector<64x32xf32> to vector<64x32xbf16>
    %c0_12 = arith.constant 0 : index
    %c0_13 = arith.constant 0 : index
    %c0_14 = arith.constant 0 : index
    %17 = vector.load %arg8[%c0_12, %c0_13, %c0_14] : memref<1x32x8xbf16, #tpu.memory_space<vmem>>, vector<1x32x8xbf16>
    %18 = vector.shape_cast %17 : vector<1x32x8xbf16> to vector<32x8xbf16>
    %cst = arith.constant dense<0.000000e+00> : vector<64x8xf32>
    %19 = tpu.matmul %16, %18, %cst {dimension_numbers = #tpu.dot_dimension_numbers<[1], [0], [0], [1], [0, 0, 1, 1], [], []>} : vector<64x32xbf16>, vector<32x8xbf16>, vector<64x8xf32> -> vector<64x8xf32>
    %c0_15 = arith.constant 0 : index
    %c0_16 = arith.constant 0 : index
    %c0_17 = arith.constant 0 : index
    %20 = vector.load %arg11[%c0_15, %c0_16, %c0_17] : memref<1x1x8xf32, #tpu.memory_space<vmem>>, vector<1x1x8xf32>
    %21 = vector.shape_cast %20 : vector<1x1x8xf32> to vector<1x8xf32>
    %22 = vector.broadcast %21 : vector<1x8xf32> to vector<64x8xf32>
    %23 = arith.addf %19, %22 : vector<64x8xf32>
    %c0_18 = arith.constant 0 : index
    %c0_19 = arith.constant 0 : index
    %c0_20 = arith.constant 0 : index
    %24 = vector.load %arg9[%c0_18, %c0_19, %c0_20] : memref<1x32x8xbf16, #tpu.memory_space<vmem>>, vector<1x32x8xbf16>
    %25 = vector.shape_cast %24 : vector<1x32x8xbf16> to vector<32x8xbf16>
    %cst_21 = arith.constant dense<0.000000e+00> : vector<64x8xf32>
    %26 = tpu.matmul %16, %25, %cst_21 {dimension_numbers = #tpu.dot_dimension_numbers<[1], [0], [0], [1], [0, 0, 1, 1], [], []>} : vector<64x32xbf16>, vector<32x8xbf16>, vector<64x8xf32> -> vector<64x8xf32>
    %c0_22 = arith.constant 0 : index
    %c0_23 = arith.constant 0 : index
    %c0_24 = arith.constant 0 : index
    %27 = vector.load %arg12[%c0_22, %c0_23, %c0_24] : memref<1x1x8xf32, #tpu.memory_space<vmem>>, vector<1x1x8xf32>
    %28 = vector.shape_cast %27 : vector<1x1x8xf32> to vector<1x8xf32>
    %29 = vector.broadcast %28 : vector<1x8xf32> to vector<64x8xf32>
    %30 = arith.addf %26, %29 : vector<64x8xf32>
    %c0_25 = arith.constant 0 : index
    %c0_26 = arith.constant 0 : index
    %c0_27 = arith.constant 0 : index
    %31 = vector.load %arg10[%c0_25, %c0_26, %c0_27] : memref<1x32x8xbf16, #tpu.memory_space<vmem>>, vector<1x32x8xbf16>
    %32 = vector.shape_cast %31 : vector<1x32x8xbf16> to vector<32x8xbf16>
    %cst_28 = arith.constant dense<0.000000e+00> : vector<64x8xf32>
    %33 = tpu.matmul %16, %32, %cst_28 {dimension_numbers = #tpu.dot_dimension_numbers<[1], [0], [0], [1], [0, 0, 1, 1], [], []>} : vector<64x32xbf16>, vector<32x8xbf16>, vector<64x8xf32> -> vector<64x8xf32>
    %c0_29 = arith.constant 0 : index
    %c0_30 = arith.constant 0 : index
    %c0_31 = arith.constant 0 : index
    %34 = vector.load %arg13[%c0_29, %c0_30, %c0_31] : memref<1x1x8xf32, #tpu.memory_space<vmem>>, vector<1x1x8xf32>
    %35 = vector.shape_cast %34 : vector<1x1x8xf32> to vector<1x8xf32>
    %36 = vector.broadcast %35 : vector<1x8xf32> to vector<64x8xf32>
    %37 = arith.addf %33, %36 : vector<64x8xf32>
    %38 = arith.truncf %23 : vector<64x8xf32> to vector<64x8xbf16>
    %c0_32 = arith.constant 0 : index
    %c0_33 = arith.constant 0 : index
    %c0_34 = arith.constant 0 : index
    %c0_35 = arith.constant 0 : index
    %39 = vector.load %arg14[%c0_32, %c0_33, %c0_34, %c0_35] : memref<1x1x64x8xbf16, #tpu.memory_space<vmem>>, vector<1x1x64x8xbf16>
    %40 = vector.shape_cast %39 : vector<1x1x64x8xbf16> to vector<64x8xbf16>
    %41 = vector.shape_cast %38 : vector<64x8xbf16> to vector<1x1x64x8xbf16>
    tpu.vector_store %arg14[%c0_32, %c0_33, %c0_34, %c0_35], %41 {strides = array<i32>} : memref<1x1x64x8xbf16, #tpu.memory_space<vmem>>, vector<1x1x64x8xbf16>,
    %42 = arith.truncf %30 : vector<64x8xf32> to vector<64x8xbf16>
    %c0_36 = arith.constant 0 : index
    %c0_37 = arith.constant 0 : index
    %c0_38 = arith.constant 0 : index
    %c0_39 = arith.constant 0 : index
    %43 = vector.load %arg15[%c0_36, %c0_37, %c0_38, %c0_39] : memref<1x1x64x8xbf16, #tpu.memory_space<vmem>>, vector<1x1x64x8xbf16>
    %44 = vector.shape_cast %43 : vector<1x1x64x8xbf16> to vector<64x8xbf16>
    %45 = vector.shape_cast %42 : vector<64x8xbf16> to vector<1x1x64x8xbf16>
    tpu.vector_store %arg15[%c0_36, %c0_37, %c0_38, %c0_39], %45 {strides = array<i32>} : memref<1x1x64x8xbf16, #tpu.memory_space<vmem>>, vector<1x1x64x8xbf16>,
    %46 = arith.truncf %37 : vector<64x8xf32> to vector<64x8xbf16>
    %c0_40 = arith.constant 0 : index
    %c0_41 = arith.constant 0 : index
    %c0_42 = arith.constant 0 : index
    %c0_43 = arith.constant 0 : index
    %47 = vector.load %arg16[%c0_40, %c0_41, %c0_42, %c0_43] : memref<1x1x64x8xbf16, #tpu.memory_space<vmem>>, vector<1x1x64x8xbf16>
    %48 = vector.shape_cast %47 : vector<1x1x64x8xbf16> to vector<64x8xbf16>
    %49 = vector.shape_cast %46 : vector<64x8xbf16> to vector<1x1x64x8xbf16>
    tpu.vector_store %arg16[%c0_40, %c0_41, %c0_42, %c0_43], %49 {strides = array<i32>} : memref<1x1x64x8xbf16, #tpu.memory_space<vmem>>, vector<1x1x64x8xbf16>,
    return
  }
  func.func @transform_0(%arg0: i32, %arg1: i32, %arg2: i32) -> (i32, i32, i32) {
    %c0_i32 = arith.constant 0 : i32
    %c0_i32_0 = arith.constant 0 : i32
    return %arg0, %arg2, %c0_i32 : i32, i32, i32
  }
  func.func @transform_1(%arg0: i32, %arg1: i32, %arg2: i32) -> (i32, i32, i32) {
    %c0_i32 = arith.constant 0 : i32
    %c0_i32_0 = arith.constant 0 : i32
    %c0_i32_1 = arith.constant 0 : i32
    return %arg0, %c0_i32, %c0_i32_0 : i32, i32, i32
  }
  func.func @transform_2(%arg0: i32, %arg1: i32, %arg2: i32) -> (i32, i32, i32) {
    %c0_i32 = arith.constant 0 : i32
    %c0_i32_0 = arith.constant 0 : i32
    %c0_i32_1 = arith.constant 0 : i32
    return %arg0, %c0_i32, %c0_i32_0 : i32, i32, i32
  }
  func.func @transform_3(%arg0: i32, %arg1: i32, %arg2: i32) -> (i32, i32) {
    %c0_i32 = arith.constant 0 : i32
    %c0_i32_0 = arith.constant 0 : i32
    %c0_i32_1 = arith.constant 0 : i32
    return %c0_i32, %c0_i32_0 : i32, i32
  }
  func.func @transform_4(%arg0: i32, %arg1: i32, %arg2: i32) -> (i32, i32) {
    %c0_i32 = arith.constant 0 : i32
    %c0_i32_0 = arith.constant 0 : i32
    %c0_i32_1 = arith.constant 0 : i32
    return %c0_i32, %c0_i32_0 : i32, i32
  }
  func.func @transform_5(%arg0: i32, %arg1: i32, %arg2: i32) -> (i32, i32, i32) {
    %c0_i32 = arith.constant 0 : i32
    %c0_i32_0 = arith.constant 0 : i32
    %c0_i32_1 = arith.constant 0 : i32
    return %arg1, %c0_i32, %c0_i32_0 : i32, i32, i32
  }
  func.func @transform_6(%arg0: i32, %arg1: i32, %arg2: i32) -> (i32, i32, i32) {
    %c0_i32 = arith.constant 0 : i32
    %c0_i32_0 = arith.constant 0 : i32
    %c0_i32_1 = arith.constant 0 : i32
    return %arg1, %c0_i32, %c0_i32_0 : i32, i32, i32
  }
  func.func @transform_7(%arg0: i32, %arg1: i32, %arg2: i32) -> (i32, i32, i32) {
    %c0_i32 = arith.constant 0 : i32
    %c0_i32_0 = arith.constant 0 : i32
    %c0_i32_1 = arith.constant 0 : i32
    return %arg1, %c0_i32, %c0_i32_0 : i32, i32, i32
  }
  func.func @transform_8(%arg0: i32, %arg1: i32, %arg2: i32) -> (i32, i32, i32) {
    %c0_i32 = arith.constant 0 : i32
    %c0_i32_0 = arith.constant 0 : i32
    %c0_i32_1 = arith.constant 0 : i32
    return %arg1, %c0_i32, %c0_i32_0 : i32, i32, i32
  }
  func.func @transform_9(%arg0: i32, %arg1: i32, %arg2: i32) -> (i32, i32, i32) {
    %c0_i32 = arith.constant 0 : i32
    %c0_i32_0 = arith.constant 0 : i32
    %c0_i32_1 = arith.constant 0 : i32
    return %arg1, %c0_i32, %c0_i32_0 : i32, i32, i32
  }
  func.func @transform_10(%arg0: i32, %arg1: i32, %arg2: i32) -> (i32, i32, i32) {
    %c0_i32 = arith.constant 0 : i32
    %c0_i32_0 = arith.constant 0 : i32
    %c0_i32_1 = arith.constant 0 : i32
    return %arg1, %c0_i32, %c0_i32_0 : i32, i32, i32
  }
  func.func @transform_11(%arg0: i32, %arg1: i32, %arg2: i32) -> (i32, i32, i32, i32) {
    %c0_i32 = arith.constant 0 : i32
    %c0_i32_0 = arith.constant 0 : i32
    return %arg0, %arg1, %arg2, %c0_i32 : i32, i32, i32, i32
  }
  func.func @transform_12(%arg0: i32, %arg1: i32, %arg2: i32) -> (i32, i32, i32, i32) {
    %c0_i32 = arith.constant 0 : i32
    %c0_i32_0 = arith.constant 0 : i32
    return %arg0, %arg1, %arg2, %c0_i32 : i32, i32, i32, i32
  }
  func.func @transform_13(%arg0: i32, %arg1: i32, %arg2: i32) -> (i32, i32, i32, i32) {
    %c0_i32 = arith.constant 0 : i32
    %c0_i32_0 = arith.constant 0 : i32
    return %arg0, %arg1, %arg2, %c0_i32 : i32, i32, i32, i32
  }
}

module attributes {stable_mosaic.version = 11 : i64} {
  func.func @_flash_attn_kernel(%arg0: i32, %arg1: i32, %arg2: i32, %arg3: i32, %arg4: memref<1x1x64x8xbf16, #tpu.memory_space<vmem>>, %arg5: memref<1x1x64x8xbf16, #tpu.memory_space<vmem>>, %arg6: memref<1x1x64x8xbf16, #tpu.memory_space<vmem>>, %arg7: memref<1x1x64x8xbf16, #tpu.memory_space<vmem>>, %arg8: memref<64x1xf32, #tpu.memory_space<vmem>>, %arg9: memref<64x1xf32, #tpu.memory_space<vmem>>, %arg10: memref<64x8xf32, #tpu.memory_space<vmem>>) attributes {dimension_semantics = [#tpu.dimension_semantics<parallel>, #tpu.dimension_semantics<parallel>, #tpu.dimension_semantics<parallel>, #tpu.dimension_semantics<arbitrary>], iteration_bounds = array<i64: 2, 4, 1, 1>, scalar_prefetch = 0 : i64, scratch_operands = 3 : i64, tpu.core_type = #tpu.core_type<tc>, window_params = [{transform_indices = @transform_0, window_bounds = array<i64: 1, 1, 64, 8>}, {transform_indices = @transform_1, window_bounds = array<i64: 1, 1, 64, 8>}, {transform_indices = @transform_2, window_bounds = array<i64: 1, 1, 64, 8>}, {transform_indices = @transform_3, window_bounds = array<i64: 1, 1, 64, 8>}]} {
    %c0_i32 = arith.constant 0 : i32
    %0 = arith.cmpi eq, %arg3, %c0_i32 : i32
    %1 = arith.extui %0 : i1 to i32
    %c0_i32_0 = arith.constant 0 : i32
    %2 = arith.cmpi ne, %1, %c0_i32_0 : i32
    scf.if %2 {
      %cst_29 = arith.constant 0xFF800000 : f32
      %36 = vector.broadcast %cst_29 : f32 to vector<64x1xf32>
      %c0_30 = arith.constant 0 : index
      %c0_31 = arith.constant 0 : index
      %37 = vector.load %arg8[%c0_30, %c0_31] : memref<64x1xf32, #tpu.memory_space<vmem>>, vector<64x1xf32>
      tpu.vector_store %arg8[%c0_30, %c0_31], %36 {strides = array<i32>} : memref<64x1xf32, #tpu.memory_space<vmem>>, vector<64x1xf32>,
      %cst_32 = arith.constant 0.000000e+00 : f32
      %38 = vector.broadcast %cst_32 : f32 to vector<64x1xf32>
      %c0_33 = arith.constant 0 : index
      %c0_34 = arith.constant 0 : index
      %39 = vector.load %arg9[%c0_33, %c0_34] : memref<64x1xf32, #tpu.memory_space<vmem>>, vector<64x1xf32>
      tpu.vector_store %arg9[%c0_33, %c0_34], %38 {strides = array<i32>} : memref<64x1xf32, #tpu.memory_space<vmem>>, vector<64x1xf32>,
      %cst_35 = arith.constant 0.000000e+00 : f32
      %40 = vector.broadcast %cst_35 : f32 to vector<64x8xf32>
      %c0_36 = arith.constant 0 : index
      %c0_37 = arith.constant 0 : index
      %41 = vector.load %arg10[%c0_36, %c0_37] : memref<64x8xf32, #tpu.memory_space<vmem>>, vector<64x8xf32>
      tpu.vector_store %arg10[%c0_36, %c0_37], %40 {strides = array<i32>} : memref<64x8xf32, #tpu.memory_space<vmem>>, vector<64x8xf32>,
    } else {
    }
    %c0 = arith.constant 0 : index
    %c0_1 = arith.constant 0 : index
    %c0_2 = arith.constant 0 : index
    %c0_3 = arith.constant 0 : index
    %3 = vector.load %arg4[%c0, %c0_1, %c0_2, %c0_3] : memref<1x1x64x8xbf16, #tpu.memory_space<vmem>>, vector<1x1x64x8xbf16>
    %4 = vector.shape_cast %3 : vector<1x1x64x8xbf16> to vector<64x8xbf16>
    %c0_4 = arith.constant 0 : index
    %c0_5 = arith.constant 0 : index
    %c0_6 = arith.constant 0 : index
    %c0_7 = arith.constant 0 : index
    %5 = vector.load %arg5[%c0_4, %c0_5, %c0_6, %c0_7] : memref<1x1x64x8xbf16, #tpu.memory_space<vmem>>, vector<1x1x64x8xbf16>
    %6 = vector.shape_cast %5 : vector<1x1x64x8xbf16> to vector<64x8xbf16>
    %cst = arith.constant dense<0.000000e+00> : vector<64x64xf32>
    %7 = tpu.matmul %4, %6, %cst {dimension_numbers = #tpu.dot_dimension_numbers<[1], [1], [0], [0], [0, 0, 1, 0], [], []>} : vector<64x8xbf16>, vector<64x8xbf16>, vector<64x64xf32> -> vector<64x64xf32>
    %c0_8 = arith.constant 0 : index
    %c0_9 = arith.constant 0 : index
    %8 = vector.load %arg8[%c0_8, %c0_9] : memref<64x1xf32, #tpu.memory_space<vmem>>, vector<64x1xf32>
    %cst_10 = arith.constant dense<0xFF800000> : vector<64xf32>
    %9 = vector.multi_reduction <maximumf>, %7, %cst_10 [1] : vector<64x64xf32> to vector<64xf32>
    %10 = vector.shape_cast %9 : vector<64xf32> to vector<64x1xf32>
    %11 = arith.maximumf %8, %10 : vector<64x1xf32>
    %12 = arith.subf %8, %11 : vector<64x1xf32>
    %13 = math.exp %12 : vector<64x1xf32>
    %14 = vector.broadcast %11 : vector<64x1xf32> to vector<64x64xf32>
    %15 = arith.subf %7, %14 : vector<64x64xf32>
    %16 = math.exp %15 : vector<64x64xf32>
    %c0_11 = arith.constant 0 : index
    %c0_12 = arith.constant 0 : index
    %17 = vector.load %arg9[%c0_11, %c0_12] : memref<64x1xf32, #tpu.memory_space<vmem>>, vector<64x1xf32>
    %18 = arith.mulf %13, %17 : vector<64x1xf32>
    %cst_13 = arith.constant dense<0.000000e+00> : vector<64xf32>
    %19 = vector.multi_reduction <add>, %16, %cst_13 [1] : vector<64x64xf32> to vector<64xf32>
    %20 = vector.shape_cast %19 : vector<64xf32> to vector<64x1xf32>
    %21 = arith.addf %18, %20 : vector<64x1xf32>
    %c0_14 = arith.constant 0 : index
    %c0_15 = arith.constant 0 : index
    %22 = vector.load %arg9[%c0_14, %c0_15] : memref<64x1xf32, #tpu.memory_space<vmem>>, vector<64x1xf32>
    tpu.vector_store %arg9[%c0_14, %c0_15], %21 {strides = array<i32>} : memref<64x1xf32, #tpu.memory_space<vmem>>, vector<64x1xf32>,
    %c0_16 = arith.constant 0 : index
    %c0_17 = arith.constant 0 : index
    %23 = vector.load %arg10[%c0_16, %c0_17] : memref<64x8xf32, #tpu.memory_space<vmem>>, vector<64x8xf32>
    %24 = vector.broadcast %13 : vector<64x1xf32> to vector<64x8xf32>
    %25 = arith.mulf %24, %23 : vector<64x8xf32>
    %26 = arith.truncf %16 : vector<64x64xf32> to vector<64x64xbf16>
    %c0_18 = arith.constant 0 : index
    %c0_19 = arith.constant 0 : index
    %c0_20 = arith.constant 0 : index
    %c0_21 = arith.constant 0 : index
    %27 = vector.load %arg6[%c0_18, %c0_19, %c0_20, %c0_21] : memref<1x1x64x8xbf16, #tpu.memory_space<vmem>>, vector<1x1x64x8xbf16>
    %28 = vector.shape_cast %27 : vector<1x1x64x8xbf16> to vector<64x8xbf16>
    %cst_22 = arith.constant dense<0.000000e+00> : vector<64x8xf32>
    %29 = tpu.matmul %26, %28, %cst_22 {dimension_numbers = #tpu.dot_dimension_numbers<[1], [0], [0], [1], [0, 0, 1, 1], [], []>} : vector<64x64xbf16>, vector<64x8xbf16>, vector<64x8xf32> -> vector<64x8xf32>
    %30 = arith.addf %25, %29 : vector<64x8xf32>
    %c0_23 = arith.constant 0 : index
    %c0_24 = arith.constant 0 : index
    %31 = vector.load %arg10[%c0_23, %c0_24] : memref<64x8xf32, #tpu.memory_space<vmem>>, vector<64x8xf32>
    tpu.vector_store %arg10[%c0_23, %c0_24], %30 {strides = array<i32>} : memref<64x8xf32, #tpu.memory_space<vmem>>, vector<64x8xf32>,
    %c0_25 = arith.constant 0 : index
    %c0_26 = arith.constant 0 : index
    %32 = vector.load %arg8[%c0_25, %c0_26] : memref<64x1xf32, #tpu.memory_space<vmem>>, vector<64x1xf32>
    tpu.vector_store %arg8[%c0_25, %c0_26], %11 {strides = array<i32>} : memref<64x1xf32, #tpu.memory_space<vmem>>, vector<64x1xf32>,
    %c0_i32_27 = arith.constant 0 : i32
    %33 = arith.cmpi eq, %arg3, %c0_i32_27 : i32
    %34 = arith.extui %33 : i1 to i32
    %c0_i32_28 = arith.constant 0 : i32
    %35 = arith.cmpi ne, %34, %c0_i32_28 : i32
    scf.if %35 {
      %c0_29 = arith.constant 0 : index
      %c0_30 = arith.constant 0 : index
      %36 = vector.load %arg10[%c0_29, %c0_30] : memref<64x8xf32, #tpu.memory_space<vmem>>, vector<64x8xf32>
      %c0_31 = arith.constant 0 : index
      %c0_32 = arith.constant 0 : index
      %37 = vector.load %arg9[%c0_31, %c0_32] : memref<64x1xf32, #tpu.memory_space<vmem>>, vector<64x1xf32>
      %38 = tpu.reciprocal %37 {approx = true} : vector<64x1xf32> -> vector<64x1xf32>
      %39 = vector.broadcast %38 : vector<64x1xf32> to vector<64x8xf32>
      %40 = arith.mulf %36, %39 : vector<64x8xf32>
      %41 = arith.truncf %40 : vector<64x8xf32> to vector<64x8xbf16>
      %c0_33 = arith.constant 0 : index
      %c0_34 = arith.constant 0 : index
      %c0_35 = arith.constant 0 : index
      %c0_36 = arith.constant 0 : index
      %42 = vector.load %arg7[%c0_33, %c0_34, %c0_35, %c0_36] : memref<1x1x64x8xbf16, #tpu.memory_space<vmem>>, vector<1x1x64x8xbf16>
      %43 = vector.shape_cast %42 : vector<1x1x64x8xbf16> to vector<64x8xbf16>
      %44 = vector.shape_cast %41 : vector<64x8xbf16> to vector<1x1x64x8xbf16>
      tpu.vector_store %arg7[%c0_33, %c0_34, %c0_35, %c0_36], %44 {strides = array<i32>} : memref<1x1x64x8xbf16, #tpu.memory_space<vmem>>, vector<1x1x64x8xbf16>,
    } else {
    }
    return
  }
  func.func @transform_0(%arg0: i32, %arg1: i32, %arg2: i32, %arg3: i32) -> (i32, i32, i32, i32) {
    %c0_i32 = arith.constant 0 : i32
    %c0_i32_0 = arith.constant 0 : i32
    return %arg0, %arg1, %arg2, %c0_i32 : i32, i32, i32, i32
  }
  func.func @transform_1(%arg0: i32, %arg1: i32, %arg2: i32, %arg3: i32) -> (i32, i32, i32, i32) {
    %c0_i32 = arith.constant 0 : i32
    %c0_i32_0 = arith.constant 0 : i32
    return %arg0, %arg1, %arg3, %c0_i32 : i32, i32, i32, i32
  }
  func.func @transform_2(%arg0: i32, %arg1: i32, %arg2: i32, %arg3: i32) -> (i32, i32, i32, i32) {
    %c0_i32 = arith.constant 0 : i32
    %c0_i32_0 = arith.constant 0 : i32
    return %arg0, %arg1, %arg3, %c0_i32 : i32, i32, i32, i32
  }
  func.func @transform_3(%arg0: i32, %arg1: i32, %arg2: i32, %arg3: i32) -> (i32, i32, i32, i32) {
    %c0_i32 = arith.constant 0 : i32
    %c0_i32_0 = arith.constant 0 : i32
    return %arg0, %arg1, %arg2, %c0_i32 : i32, i32, i32, i32
  }
}

module attributes {stable_mosaic.version = 11 : i64} {
  func.func @_proj_residual_kernel(%arg0: i32, %arg1: i32, %arg2: i32, %arg3: memref<1x1x64x8xbf16, #tpu.memory_space<vmem>>, %arg4: memref<1x8x32xbf16, #tpu.memory_space<vmem>>, %arg5: memref<1x64x32xf32, #tpu.memory_space<vmem>>, %arg6: memref<1x32xf32, #tpu.memory_space<vmem>>, %arg7: memref<1x64x32xf32, #tpu.memory_space<vmem>>, %arg8: memref<64x32xf32, #tpu.memory_space<vmem>>) attributes {dimension_semantics = [#tpu.dimension_semantics<parallel>, #tpu.dimension_semantics<parallel>, #tpu.dimension_semantics<arbitrary>], iteration_bounds = array<i64: 2, 1, 4>, scalar_prefetch = 0 : i64, scratch_operands = 1 : i64, tpu.core_type = #tpu.core_type<tc>, window_params = [{transform_indices = @transform_0, window_bounds = array<i64: 1, 1, 64, 8>}, {transform_indices = @transform_1, window_bounds = array<i64: 1, 8, 32>}, {transform_indices = @transform_2, window_bounds = array<i64: 1, 64, 32>}, {pipeline_mode = #tpu.pipeline_mode<synchronous>, transform_indices = @transform_3, window_bounds = array<i64: 1, 32>}, {transform_indices = @transform_4, window_bounds = array<i64: 1, 64, 32>}]} {
    %c0_i32 = arith.constant 0 : i32
    %0 = arith.cmpi eq, %arg2, %c0_i32 : i32
    %1 = arith.extui %0 : i1 to i32
    %c0_i32_0 = arith.constant 0 : i32
    %2 = arith.cmpi ne, %1, %c0_i32_0 : i32
    scf.if %2 {
      %cst_12 = arith.constant 0.000000e+00 : f32
      %14 = vector.broadcast %cst_12 : f32 to vector<64x32xf32>
      %c0_13 = arith.constant 0 : index
      %c0_14 = arith.constant 0 : index
      %15 = vector.load %arg8[%c0_13, %c0_14] : memref<64x32xf32, #tpu.memory_space<vmem>>, vector<64x32xf32>
      tpu.vector_store %arg8[%c0_13, %c0_14], %14 {strides = array<i32>} : memref<64x32xf32, #tpu.memory_space<vmem>>, vector<64x32xf32>,
    } else {
    }
    %c0 = arith.constant 0 : index
    %c0_1 = arith.constant 0 : index
    %3 = vector.load %arg8[%c0, %c0_1] : memref<64x32xf32, #tpu.memory_space<vmem>>, vector<64x32xf32>
    %c0_2 = arith.constant 0 : index
    %c0_3 = arith.constant 0 : index
    %c0_4 = arith.constant 0 : index
    %c0_5 = arith.constant 0 : index
    %4 = vector.load %arg3[%c0_2, %c0_3, %c0_4, %c0_5] : memref<1x1x64x8xbf16, #tpu.memory_space<vmem>>, vector<1x1x64x8xbf16>
    %5 = vector.shape_cast %4 : vector<1x1x64x8xbf16> to vector<64x8xbf16>
    %c0_6 = arith.constant 0 : index
    %c0_7 = arith.constant 0 : index
    %c0_8 = arith.constant 0 : index
    %6 = vector.load %arg4[%c0_6, %c0_7, %c0_8] : memref<1x8x32xbf16, #tpu.memory_space<vmem>>, vector<1x8x32xbf16>
    %7 = vector.shape_cast %6 : vector<1x8x32xbf16> to vector<8x32xbf16>
    %cst = arith.constant dense<0.000000e+00> : vector<64x32xf32>
    %8 = tpu.matmul %5, %7, %cst {dimension_numbers = #tpu.dot_dimension_numbers<[1], [0], [0], [1], [0, 0, 1, 1], [], []>} : vector<64x8xbf16>, vector<8x32xbf16>, vector<64x32xf32> -> vector<64x32xf32>
    %9 = arith.addf %3, %8 : vector<64x32xf32>
    %c0_9 = arith.constant 0 : index
    %c0_10 = arith.constant 0 : index
    %10 = vector.load %arg8[%c0_9, %c0_10] : memref<64x32xf32, #tpu.memory_space<vmem>>, vector<64x32xf32>
    tpu.vector_store %arg8[%c0_9, %c0_10], %9 {strides = array<i32>} : memref<64x32xf32, #tpu.memory_space<vmem>>, vector<64x32xf32>,
    %c3_i32 = arith.constant 3 : i32
    %11 = arith.cmpi eq, %arg2, %c3_i32 : i32
    %12 = arith.extui %11 : i1 to i32
    %c0_i32_11 = arith.constant 0 : i32
    %13 = arith.cmpi ne, %12, %c0_i32_11 : i32
    scf.if %13 {
      %c0_12 = arith.constant 0 : index
      %c0_13 = arith.constant 0 : index
      %c0_14 = arith.constant 0 : index
      %14 = vector.load %arg5[%c0_12, %c0_13, %c0_14] : memref<1x64x32xf32, #tpu.memory_space<vmem>>, vector<1x64x32xf32>
      %15 = vector.shape_cast %14 : vector<1x64x32xf32> to vector<64x32xf32>
      %c0_15 = arith.constant 0 : index
      %c0_16 = arith.constant 0 : index
      %16 = vector.load %arg8[%c0_15, %c0_16] : memref<64x32xf32, #tpu.memory_space<vmem>>, vector<64x32xf32>
      %17 = arith.addf %15, %16 : vector<64x32xf32>
      %c0_17 = arith.constant 0 : index
      %c0_18 = arith.constant 0 : index
      %18 = vector.load %arg6[%c0_17, %c0_18] : memref<1x32xf32, #tpu.memory_space<vmem>>, vector<1x32xf32>
      %19 = vector.broadcast %18 : vector<1x32xf32> to vector<64x32xf32>
      %20 = arith.addf %17, %19 : vector<64x32xf32>
      %c0_19 = arith.constant 0 : index
      %c0_20 = arith.constant 0 : index
      %c0_21 = arith.constant 0 : index
      %21 = vector.load %arg7[%c0_19, %c0_20, %c0_21] : memref<1x64x32xf32, #tpu.memory_space<vmem>>, vector<1x64x32xf32>
      %22 = vector.shape_cast %21 : vector<1x64x32xf32> to vector<64x32xf32>
      %23 = vector.shape_cast %20 : vector<64x32xf32> to vector<1x64x32xf32>
      tpu.vector_store %arg7[%c0_19, %c0_20, %c0_21], %23 {strides = array<i32>} : memref<1x64x32xf32, #tpu.memory_space<vmem>>, vector<1x64x32xf32>,
    } else {
    }
    return
  }
  func.func @transform_0(%arg0: i32, %arg1: i32, %arg2: i32) -> (i32, i32, i32, i32) {
    %c0_i32 = arith.constant 0 : i32
    %c0_i32_0 = arith.constant 0 : i32
    return %arg0, %arg2, %arg1, %c0_i32 : i32, i32, i32, i32
  }
  func.func @transform_1(%arg0: i32, %arg1: i32, %arg2: i32) -> (i32, i32, i32) {
    %c0_i32 = arith.constant 0 : i32
    %c0_i32_0 = arith.constant 0 : i32
    %c0_i32_1 = arith.constant 0 : i32
    return %arg2, %c0_i32, %c0_i32_0 : i32, i32, i32
  }
  func.func @transform_2(%arg0: i32, %arg1: i32, %arg2: i32) -> (i32, i32, i32) {
    %c0_i32 = arith.constant 0 : i32
    %c0_i32_0 = arith.constant 0 : i32
    return %arg0, %arg1, %c0_i32 : i32, i32, i32
  }
  func.func @transform_3(%arg0: i32, %arg1: i32, %arg2: i32) -> (i32, i32) {
    %c0_i32 = arith.constant 0 : i32
    %c0_i32_0 = arith.constant 0 : i32
    %c0_i32_1 = arith.constant 0 : i32
    return %c0_i32, %c0_i32_0 : i32, i32
  }
  func.func @transform_4(%arg0: i32, %arg1: i32, %arg2: i32) -> (i32, i32, i32) {
    %c0_i32 = arith.constant 0 : i32
    %c0_i32_0 = arith.constant 0 : i32
    return %arg0, %arg1, %c0_i32 : i32, i32, i32
  }
}

</mosaic_0001>

<llo_original>
// kernel: quant_attention_block.4
$region0: #{quant_attention_block.4}
  #allocation0 [shape = 'u32[]', space=smem, size = 0x4, offset = 0x4, fixed_abs, tag = 'smem constant byte address 0x4 - core index']
  #allocation1 [shape = 'u32[144,128]{1,0:T(1,128)}', space=vmem, size = 0x12000, scoped, tag = 'internal scratch']
  #allocation2 [shape = 'f32[1,32]{1,0:T(1,128)}', space=vmem, size = 0x200, scoped, tag = 'scratch operand']
  #allocation3 [shape = 'f32[1,32]{1,0:T(1,128)}', space=vmem, size = 0x200, scoped, tag = 'scratch operand']
  %s0 = inlined_call_operand.hbm [shape: f32[2,64,32], index: 0, kind: input, shape index: {}]
  %s1 = inlined_call_operand.hbm [shape: f32[32,32], index: 1, kind: input, shape index: {}, may-alias: {1,2}]
  %s2 = inlined_call_operand.hbm [shape: f32[32,32], index: 2, kind: input, shape index: {}, may-alias: {1,2}]
  %s3 = inlined_call_operand.vmem [shape: f32[2,1,32], index: 3, kind: output, shape index: {0}]
  %s4 = inlined_call_operand.vmem [shape: f32[2,1,32], index: 4, kind: output, shape index: {1}]
  %5 = xla_tuple %s3, %s4
  %s6 = sld [smem:[#allocation0]]
  $region73: #{quant_attention_block.4} parent=0
    _
  %s8 = ssub.s32 1, %s6
  %s9 = scalar_select 0, %s8, %s6
  $region1: #{quant_attention_block.4} parent=0
    #allocation4 [shape = 'u8[65536]{0}', space=vmem, size = 0x10000, scoped, tag = 'input window, operand 0']
    #allocation5 [shape = 's32[2]{0}', space=sflag, size = 0x8, scoped, tag = 'scoped memory for quant_attention_block.4']
    #allocation6 [shape = 'u8[16384]{0}', space=vmem, size = 0x4000, scoped, tag = 'input window, operand 1, single buffered']
    #allocation7 [shape = 's32[1]{0}', space=sflag, size = 0x4, scoped, tag = 'scoped memory for quant_attention_block.4']
    #allocation8 [shape = 'u8[16384]{0}', space=vmem, size = 0x4000, scoped, tag = 'input window, operand 2, single buffered']
    %10 = vsyncpa [#allocation5], 0
    %s11 = scalar_lea.sflag [#allocation5], 1
    %12 = vsyncpa %s11, 0
    %13 = vsyncpa [#allocation7], 0
    loop: start=0, step=1, limit=4
    $region2: #{quant_attention_block.4} parent=1 // loop_pre_header
      _
    $region3: #{quant_attention_block.4} parent=1 // loop_header
      %s15 = sphi 0, %s19
      %p16 = scmp.ge.s32.totalorder %s15, 4
      %s22 = sphi 0, %s34
      %s23 = sphi 0, %s30
      %s24 = sphi 0, %s22
      %s25 = sphi 0, %s23
      %s26 = sphi 0, %s24
      %s27 = sphi 0, %s25
      %s39 = sphi 0, %s41
      %s42 = sphi 0, %s39
      %s43 = sphi 0, %s42
      %s59 = sphi 0, %s43
      %s63 = sphi 0, %s63
      %s65 = sphi 0, %s63
      %s66 = sphi 0, %s65
      %s80 = sphi 0, %s66
      %s84 = sphi 0, %s84
      %s86 = sphi 0, %s84
      %s87 = sphi 0, %s86
      %s101 = sphi 0, %s87
      %s107 = sphi 0, %s109
      %s110 = sphi 0, %s107
      %s111 = sphi 0, %s110
      %s127 = sphi 0, %s111
      %s133 = sphi 0, %s135
      %s136 = sphi 0, %s133
      %s137 = sphi 0, %s136
      %s153 = sphi 0, %s137
    $region4: #{quant_attention_block.4} parent=1 // loop_header_branch
      %18 = sbr.rel (%p16) target = $region8
    $region5: #{quant_attention_block.4} parent=1 // loop_body
      %s20 = ssub.s32 %s15, 1
      %s21 = ssub.s32 %s15, 2
      %s28 = sadd.s32 1, %s23
      %p29 = scmp.ge.s32.totalorder %s28, 1
      %s30 = scalar_select %p29, 0, %s28
      %s31 = sadd.s32 1, %s22
      %s32 = scalar_select %p29, %s31, %s22
      %p33 = scmp.ge.s32.totalorder %s32, 2
      %s34 = scalar_select %p33, 0, %s32
      %s35 = ssub.s32 %s22, %s34
      %s36 = ssub.s32 %s23, %s30
      %s37 = sor.u32 %s35, %s36
      %p38 = scmp.eq.s32.totalorder %s37, 0
      %s40 = sadd.s32 %s39, 1
      %s41 = scalar_select %p38, %s39, %s40
      %p44 = pneg %p38
      %p45 = scmp.eq.s32.totalorder %s15, 1
      %p46 = por %p44, %p45
      %p47 = scmp.ne.s32.totalorder %s39, %s42
      %p48 = scmp.eq.s32.totalorder %s15, 0
      %p49 = por %p47, %p48
      %p50 = scmp.ne.s32.totalorder %s39, %s42
      %p51 = scmp.eq.s32.totalorder %s20, 1
      %p52 = por %p50, %p51
      %p53 = scmp.ne.s32.totalorder %s42, %s43
      %p54 = scmp.eq.s32.totalorder %s20, 0
      %p55 = por %p53, %p54
      %p56 = scmp.ne.s32.totalorder %s42, %s43
      %p57 = scmp.eq.s32.totalorder %s21, 1
      %p58 = por %p56, %p57
      %p60 = scmp.ne.s32.totalorder %s43, %s59
      %p61 = scmp.eq.s32.totalorder %s21, 0
      %p62 = por %p60, %p61
      %s64 = sadd.s32 %s63, 1
      %p67 = scmp.eq.s32.totalorder %s15, 1
      %p68 = scmp.ne.s32.totalorder %s63, %s65
      %p69 = scmp.eq.s32.totalorder %s15, 0
      %p70 = por %p68, %p69
      %p71 = scmp.ne.s32.totalorder %s63, %s65
      %p72 = scmp.eq.s32.totalorder %s20, 1
      %p73 = por %p71, %p72
      %p74 = scmp.ne.s32.totalorder %s65, %s66
      %p75 = scmp.eq.s32.totalorder %s20, 0
      %p76 = por %p74, %p75
      %p77 = scmp.ne.s32.totalorder %s65, %s66
      %p78 = scmp.eq.s32.totalorder %s21, 1
      %p79 = por %p77, %p78
      %p81 = scmp.ne.s32.totalorder %s66, %s80
      %p82 = scmp.eq.s32.totalorder %s21, 0
      %p83 = por %p81, %p82
      %s85 = sadd.s32 %s84, 1
      %p88 = scmp.eq.s32.totalorder %s15, 1
      %p89 = scmp.ne.s32.totalorder %s84, %s86
      %p90 = scmp.eq.s32.totalorder %s15, 0
      %p91 = por %p89, %p90
      %p92 = scmp.ne.s32.totalorder %s84, %s86
      %p93 = scmp.eq.s32.totalorder %s20, 1
      %p94 = por %p92, %p93
      %p95 = scmp.ne.s32.totalorder %s86, %s87
      %p96 = scmp.eq.s32.totalorder %s20, 0
      %p97 = por %p95, %p96
      %p98 = scmp.ne.s32.totalorder %s86, %s87
      %p99 = scmp.eq.s32.totalorder %s21, 1
      %p100 = por %p98, %p99
      %p102 = scmp.ne.s32.totalorder %s87, %s101
      %p103 = scmp.eq.s32.totalorder %s21, 0
      %p104 = por %p102, %p103
      %s105 = ssub.s32 %s22, %s34
      %p106 = scmp.eq.s32.totalorder %s105, 0
      %s108 = sadd.s32 %s107, 1
      %s109 = scalar_select %p106, %s107, %s108
      %p112 = pneg %p106
      %p113 = scmp.eq.s32.totalorder %s15, 1
      %p114 = por %p112, %p113
      %p115 = scmp.ne.s32.totalorder %s107, %s110
      %p116 = scmp.eq.s32.totalorder %s15, 0
      %p117 = por %p115, %p116
      %p118 = scmp.ne.s32.totalorder %s107, %s110
      %p119 = scmp.eq.s32.totalorder %s20, 1
      %p120 = por %p118, %p119
      %p121 = scmp.ne.s32.totalorder %s110, %s111
      %p122 = scmp.eq.s32.totalorder %s20, 0
      %p123 = por %p121, %p122
      %p124 = scmp.ne.s32.totalorder %s110, %s111
      %p125 = scmp.eq.s32.totalorder %s21, 1
      %p126 = por %p124, %p125
      %p128 = scmp.ne.s32.totalorder %s111, %s127
      %p129 = scmp.eq.s32.totalorder %s21, 0
      %p130 = por %p128, %p129
      %s131 = ssub.s32 %s22, %s34
      %p132 = scmp.eq.s32.totalorder %s131, 0
      %s134 = sadd.s32 %s133, 1
      %s135 = scalar_select %p132, %s133, %s134
      %p138 = pneg %p132
      %p139 = scmp.eq.s32.totalorder %s15, 1
      %p140 = por %p138, %p139
      %p141 = scmp.ne.s32.totalorder %s133, %s136
      %p142 = scmp.eq.s32.totalorder %s15, 0
      %p143 = por %p141, %p142
      %p144 = scmp.ne.s32.totalorder %s133, %s136
      %p145 = scmp.eq.s32.totalorder %s20, 1
      %p146 = por %p144, %p145
      %p147 = scmp.ne.s32.totalorder %s136, %s137
      %p148 = scmp.eq.s32.totalorder %s20, 0
      %p149 = por %p147, %p148
      %p150 = scmp.ne.s32.totalorder %s136, %s137
      %p151 = scmp.eq.s32.totalorder %s21, 1
      %p152 = por %p150, %p151
      %p154 = scmp.ne.s32.totalorder %s137, %s153
      %p155 = scmp.eq.s32.totalorder %s21, 0
      %p156 = por %p154, %p155
      %p157 = scmp.le.s32.totalorder 1, %s15
      %p158 = scmp.lt.s32.totalorder %s15, 3
      %p159 = pnand %p157, %p158
      %p160 = pneg %p159
      // Predicated region
      $region9: #{quant_attention_block.4} parent=5 // pred_check
        _
      $region10: #{quant_attention_block.4} parent=5 // pred_check_branch
        %162 = sbr.rel (%p159) target = $region12
      $region11: #{quant_attention_block.4} parent=5 // pred_region
        %s163 = ssub.s32 %s15, 1
        // Predicated region
        $region13: #{quant_attention_block.4} parent=11 // pred_check
          %p164 = pneg %p76
        $region14: #{quant_attention_block.4} parent=11 // pred_check_branch
          %166 = sbr.rel (%p164) target = $region16
        $region15: #{quant_attention_block.4} parent=11 // pred_region
          %s168 = ssub.s32 512, 512
          %169 = vsyncadd [#allocation7], %s168
          %s170 = sshll.u32 [#allocation6], 4
          %s171 = int_to_ptr.vmem [resolvable:$true] %s170
          %176 = dma.hbm_to_vmem [thread:$0]  %s1, 512, %s171, [#allocation7], 128, 128, 8
        $region16: #{quant_attention_block.4} parent=11 // pred_fallthru
          _
        // Predicated region
        $region17: #{quant_attention_block.4} parent=11 // pred_check
          %p177 = pneg %p97
        $region18: #{quant_attention_block.4} parent=11 // pred_check_branch
          %179 = sbr.rel (%p177) target = $region20
        $region19: #{quant_attention_block.4} parent=11 // pred_region
          %s181 = ssub.s32 512, 512
          %182 = vsyncadd [#allocation7], %s181
          %s183 = sshll.u32 [#allocation8], 4
          %s184 = int_to_ptr.vmem [resolvable:$true] %s183
          %189 = dma.hbm_to_vmem [thread:$0]  %s2, 512, %s184, [#allocation7], 128, 128, 8
        $region20: #{quant_attention_block.4} parent=11 // pred_fallthru
          _
      $region12: #{quant_attention_block.4} parent=5 // pred_fallthru
        _
      %p190 = scmp.lt.s32.totalorder %s15, 2
      // Predicated region
      $region21: #{quant_attention_block.4} parent=5 // pred_check
        %p191 = pneg %p190
      $region22: #{quant_attention_block.4} parent=5 // pred_check_branch
        %193 = sbr.rel (%p191) target = $region24
      $region23: #{quant_attention_block.4} parent=5 // pred_region
        // Predicated region
        $region25: #{quant_attention_block.4} parent=23 // pred_check
          %p194 = pneg %p49
        $region26: #{quant_attention_block.4} parent=23 // pred_check_branch
          %196 = sbr.rel (%p194) target = $region28
        $region27: #{quant_attention_block.4} parent=23 // pred_region
          %s197 = sand.u32 %s39, 1
          %s198 = scalar_lea.sflag [#allocation5], %s197
          %s199 = sand.u32 %s39, 1
          %s200 = smul.addr %s199, 64
          %s201 = scalar_lea.vmem [#allocation4], %s200
          %s202 = smul.u32 8, %s23
          %s204 = ssub.s32 1024, 1024
          %205 = vsyncadd %s198, %s204
          %s206 = smul.addr %s22, 8
          %s207 = sadd.s32 %s202, %s206
          %s208 = smul.addr %s207, 128
          %s209 = scalar_lea.hbm %s0, %s208
          %s210 = sshll.u32 %s201, 4
          %s211 = int_to_ptr.vmem [resolvable:$true] %s210
          %216 = dma.hbm_to_vmem [thread:$0]  %s209, 1024, %s211, %s198, 128, 128, 8
        $region28: #{quant_attention_block.4} parent=23 // pred_fallthru
          _
      $region24: #{quant_attention_block.4} parent=5 // pred_fallthru
        _
      %p217 = scmp.le.s32.totalorder 1, %s15
      %p218 = scmp.lt.s32.totalorder %s15, 3
      %p219 = pnand %p217, %p218
      %p220 = pneg %p219
      // Predicated region
      $region29: #{quant_attention_block.4} parent=5 // pred_check
        _
      $region30: #{quant_attention_block.4} parent=5 // pred_check_branch
        %222 = sbr.rel (%p219) target = $region32
      $region31: #{quant_attention_block.4} parent=5 // pred_region
        %s223 = ssub.s32 %s15, 1
        %s224 = sand.u32 %s42, 1
        %s225 = scalar_lea.sflag [#allocation5], %s224
        %s226 = sand.u32 %s42, 1
        %s227 = smul.addr %s226, 64
        %s228 = scalar_lea.vmem [#allocation4], %s227
        // Predicated region
        $region33: #{quant_attention_block.4} parent=31 // pred_check
          %p229 = pneg %p55
        $region34: #{quant_attention_block.4} parent=31 // pred_check_branch
          %231 = sbr.rel (%p229) target = $region36
        $region35: #{quant_attention_block.4} parent=31 // pred_region
          %232 = dma.done %s225, 1024
        $region36: #{quant_attention_block.4} parent=31 // pred_fallthru
          _
        // Predicated region
        $region37: #{quant_attention_block.4} parent=31 // pred_check
          %p233 = pneg %p76
        $region38: #{quant_attention_block.4} parent=31 // pred_check_branch
          %235 = sbr.rel (%p233) target = $region40
        $region39: #{quant_attention_block.4} parent=31 // pred_region
          %236 = dma.done [#allocation7], 512
        $region40: #{quant_attention_block.4} parent=31 // pred_fallthru
          _
        // Predicated region
        $region41: #{quant_attention_block.4} parent=31 // pred_check
          %p237 = pneg %p97
        $region42: #{quant_attention_block.4} parent=31 // pred_check_branch
          %239 = sbr.rel (%p237) target = $region44
        $region43: #{quant_attention_block.4} parent=31 // pred_region
          %240 = dma.done [#allocation7], 512
        $region44: #{quant_attention_block.4} parent=31 // pred_fallthru
          _
        %s241 = sand.u32 %s42, 1
        %s242 = scalar_lea.sflag [#allocation5], %s241
        %s243 = sand.u32 %s42, 1
        %s244 = smul.addr %s243, 64
        %s245 = scalar_lea.vmem [#allocation4], %s244
        %p246 = pneg %p55
        %p247 = pneg %p52
        %p248 = pneg %p76
        %p249 = pneg %p73
        %p250 = pneg %p97
        %p251 = pneg %p94
        %p252 = pneg %p123
        %p253 = pneg %p120
        %p254 = scmp.lt.s32.totalorder %s24, 1
        %s255 = scalar_select %p254, %s24, 1
        %s256 = scalar_lea.vmem %s3, %s255
        %p257 = pneg %p149
        %p258 = pneg %p146
        %p259 = scmp.lt.s32.totalorder %s24, 1
        %s260 = scalar_select %p259, %s24, 1
        %s261 = scalar_lea.vmem %s4, %s260
        %s262 = smul.u32 8, %s25
        %p263 = scmp.lt.s32.totalorder %s24, 1
        %s264 = scalar_select %p263, %s24, 1
        %s265 = scalar_lea.vmem %s3, %s264
        %p266 = scmp.lt.s32.totalorder %s24, 1
        %s267 = scalar_select %p266, %s24, 1
        %s268 = scalar_lea.vmem %s4, %s267
        %p269 = scmp.eq.s32.totalorder %s25, 0
        // Predicated region
        $region45: #{quant_attention_block.4} parent=31 // pred_check
          %p270 = pneg %p269
        $region46: #{quant_attention_block.4} parent=31 // pred_check_branch
          %272 = sbr.rel (%p270) target = $region48
        $region47: #{quant_attention_block.4} parent=31 // pred_region
          %vm273 = vcmask 253952
          %274 = vst.msk [vmem:[#allocation2] sm:$0x1] %vm273, 0.0
          %275 = vst.msk [vmem:[#allocation3] sm:$0x1] %vm273, 0.0
        $region48: #{quant_attention_block.4} parent=31 // pred_fallthru
          _
        %v276 = vld [vmem:[%s228] sm:$0xff]
        %v277 = vld [vmem:[%s228 + $0x8] sm:$0xff]
        %v278 = vld [vmem:[%s228 + $0x10] sm:$0xff]
        %v279 = vld [vmem:[%s228 + $0x18] sm:$0xff]
        %v280 = vld [vmem:[%s228 + $0x20] sm:$0xff]
        %v281 = vld [vmem:[%s228 + $0x28] sm:$0xff]
        %v282 = vld [vmem:[%s228 + $0x30] sm:$0xff]
        %v283 = vld [vmem:[%s228 + $0x38] sm:$0xff]
        %v284 = vld [vmem:[#allocation2] sm:$0x1]
        %vm285 = vcmask 261120
        %v286 = vsel %vm285, %v276, 0.0
        %v287 = vsel %vm285, %v277, 0.0
        %v288 = vadd.f32 %v286, %v287
        %v289 = vsel %vm285, %v278, 0.0
        %v290 = vadd.f32 %v288, %v289
        %v291 = vsel %vm285, %v279, 0.0
        %v292 = vadd.f32 %v290, %v291
        %v293 = vsel %vm285, %v280, 0.0
        %v294 = vadd.f32 %v292, %v293
        %v295 = vsel %vm285, %v281, 0.0
        %v296 = vadd.f32 %v294, %v295
        %v297 = vsel %vm285, %v282, 0.0
        %v298 = vadd.f32 %v296, %v297
        %v299 = vsel %vm285, %v283, 0.0
        %v300 = vadd.f32 %v298, %v299
        %v301 = vrot.slane %v300, 4
        %v302 = vadd.f32 %v300, %v301
        %v303 = vrot.slane %v302, 2
        %v304 = vadd.f32 %v302, %v303
        %v305 = vrot.slane %v304, 1
        %v306 = vadd.f32 %v304, %v305
        %v307 = vadd.f32 %v284, %v306
        %vm308 = vcmask 253952
        %309 = vst.msk [vmem:[#allocation2] sm:$0x1] %vm308, %v307
        %v310 = vld [vmem:[#allocation3] sm:$0x1]
        %v311 = vmul.f32 %v276, %v276
        %v312 = vmul.f32 %v277, %v277
        %v313 = vmul.f32 %v278, %v278
        %v314 = vmul.f32 %v279, %v279
        %v315 = vmul.f32 %v280, %v280
        %v316 = vmul.f32 %v281, %v281
        %v317 = vmul.f32 %v282, %v282
        %v318 = vmul.f32 %v283, %v283
        %v319 = vsel %vm285, %v311, 0.0
        %v320 = vsel %vm285, %v312, 0.0
        %v321 = vadd.f32 %v319, %v320
        %v322 = vsel %vm285, %v313, 0.0
        %v323 = vadd.f32 %v321, %v322
        %v324 = vsel %vm285, %v314, 0.0
        %v325 = vadd.f32 %v323, %v324
        %v326 = vsel %vm285, %v315, 0.0
        %v327 = vadd.f32 %v325, %v326
        %v328 = vsel %vm285, %v316, 0.0
        %v329 = vadd.f32 %v327, %v328
        %v330 = vsel %vm285, %v317, 0.0
        %v331 = vadd.f32 %v329, %v330
        %v332 = vsel %vm285, %v318, 0.0
        %v333 = vadd.f32 %v331, %v332
        %v334 = vrot.slane %v333, 4
        %v335 = vadd.f32 %v333, %v334
        %v336 = vrot.slane %v335, 2
        %v337 = vadd.f32 %v335, %v336
        %v338 = vrot.slane %v337, 1
        %v339 = vadd.f32 %v337, %v338
        %v340 = vadd.f32 %v310, %v339
        %341 = vst.msk [vmem:[#allocation3] sm:$0x1] %vm308, %v340
        // Predicated region
        $region49: #{quant_attention_block.4} parent=31 // pred_check
          %p342 = pneg %p269
        $region50: #{quant_attention_block.4} parent=31 // pred_check_branch
          %344 = sbr.rel (%p342) target = $region52
        $region51: #{quant_attention_block.4} parent=31 // pred_region
          %v345 = vld [vmem:[#allocation2] sm:$0x1]
          %v346 = vld [vmem:[#allocation6] sm:$0xff]
          %v347 = vld [vmem:[#allocation6 + $0x8] sm:$0xff]
          %v348 = vld [vmem:[#allocation6 + $0x10] sm:$0xff]
          %v349 = vld [vmem:[#allocation6 + $0x18] sm:$0xff]
          %v351 = vsel %vm285, %v345, 0
          %353 = vmatprep.subr.mxu0 0.0
          %354 = vmatpush1.msra.mxu0 0.0
          %355 = vmatprep.subr.mxu0 0.0
          %356 = vmatpush1.msra.mxu0 0.0
          %357 = vmatprep.subr.mxu0 0.0
          %358 = vmatpush1.msra.mxu0 0.0
          %359 = vmatprep.subr.mxu0 0.0
          %360 = vmatpush1.msra.mxu0 0.0
          %361 = vmatprep.subr.mxu0 0.0
          %362 = vmatpush1.msra.mxu0 0.0
          %363 = vmatprep.subr.mxu0 0.0
          %364 = vmatpush1.msra.mxu0 0.0
          %365 = vmatprep.subr.mxu0 0.0
          %366 = vmatpush1.msra.mxu0 0.0
          %367 = vmatprep.subr.mxu0 0.0
          %368 = vmatpush1.msra.mxu0 0.0
          %369 = vmatprep.subr.mxu0 0.0
          %370 = vmatpush1.msra.mxu0 0.0
          %371 = vmatprep.subr.mxu0 0.0
          %372 = vmatpush1.msra.mxu0 0.0
          %373 = vmatprep.subr.mxu0 0.0
          %374 = vmatpush1.msra.mxu0 0.0
          %375 = vmatprep.subr.mxu0 0.0
          %376 = vmatpush1.msra.mxu0 0.0
          %377 = vmatprep.subr.mxu0 0.0
          %378 = vmatpush1.msra.mxu0 %v349
          %379 = vmatprep.subr.mxu0 0.0
          %380 = vmatpush1.msra.mxu0 %v348
          %381 = vmatprep.subr.mxu0 0.0
          %382 = vmatpush1.msra.mxu0 %v347
          %383 = vmatprep.subr.mxu0 0.0
          %384 = vmatpush1.msra.mxu0 %v346
          %385 = vmatprep.subr.mxu0 0.0
          %386 = vmatpush2.msra.mxu0 0.0
          %387 = vmatprep.subr.mxu0 0.0
          %388 = vmatpush2.msra.mxu0 0.0
          %389 = vmatprep.subr.mxu0 0.0
          %390 = vmatpush2.msra.mxu0 0.0
          %391 = vmatprep.subr.mxu0 0.0
          %392 = vmatpush2.msra.mxu0 0.0
          %393 = vmatprep.subr.mxu0 0.0
          %394 = vmatpush2.msra.mxu0 0.0
          %395 = vmatprep.subr.mxu0 0.0
          %396 = vmatpush2.msra.mxu0 0.0
          %397 = vmatprep.subr.mxu0 0.0
          %398 = vmatpush2.msra.mxu0 0.0
          %399 = vmatprep.subr.mxu0 0.0
          %400 = vmatpush2.msra.mxu0 0.0
          %401 = vmatprep.subr.mxu0 0.0
          %402 = vmatpush2.msra.mxu0 0.0
          %403 = vmatprep.subr.mxu0 0.0
          %404 = vmatpush2.msra.mxu0 0.0
          %405 = vmatprep.subr.mxu0 0.0
          %406 = vmatpush2.msra.mxu0 0.0
          %407 = vmatprep.subr.mxu0 0.0
          %408 = vmatpush2.msra.mxu0 0.0
          %409 = vmatprep.subr.mxu0 0.0
          %410 = vmatpush2.msra.mxu0 0.0
          %411 = vmatprep.subr.mxu0 0.0
          %412 = vmatpush2.msra.mxu0 0.0
          %413 = vmatprep.subr.mxu0 0.0
          %414 = vmatpush2.msra.mxu0 0.0
          %415 = vmatprep.subr.mxu0 0.0
          %416 = vmatpush2.msra.mxu0 0.0
          %417 = vmatprep.mubr.f32.mxu0 0.0
          %418 = vmatmul.mubr.f32.gmra.mxu0 %v351
          %v419 = vpop.f32.mrf.mxu0
          %v420 = vadd.f32 0.0, %v419
          %v421 = vpop.f32.mrf.mxu0
          %422 = vdwg.mxu0
          %v423 = vld [vmem:[#allocation3] sm:$0x1]
          %v425 = vsel %vm285, %v423, 0
          %427 = vmatprep.subr.mxu0 0.0
          %428 = vmatpush1.msra.mxu0 0.0
          %429 = vmatprep.subr.mxu0 0.0
          %430 = vmatpush1.msra.mxu0 0.0
          %431 = vmatprep.subr.mxu0 0.0
          %432 = vmatpush1.msra.mxu0 0.0
          %433 = vmatprep.subr.mxu0 0.0
          %434 = vmatpush1.msra.mxu0 0.0
          %435 = vmatprep.subr.mxu0 0.0
          %436 = vmatpush1.msra.mxu0 0.0
          %437 = vmatprep.subr.mxu0 0.0
          %438 = vmatpush1.msra.mxu0 0.0
          %439 = vmatprep.subr.mxu0 0.0
          %440 = vmatpush1.msra.mxu0 0.0
          %441 = vmatprep.subr.mxu0 0.0
          %442 = vmatpush1.msra.mxu0 0.0
          %443 = vmatprep.subr.mxu0 0.0
          %444 = vmatpush1.msra.mxu0 0.0
          %445 = vmatprep.subr.mxu0 0.0
          %446 = vmatpush1.msra.mxu0 0.0
          %447 = vmatprep.subr.mxu0 0.0
          %448 = vmatpush1.msra.mxu0 0.0
          %449 = vmatprep.subr.mxu0 0.0
          %450 = vmatpush1.msra.mxu0 0.0
          %451 = vmatprep.subr.mxu0 0.0
          %452 = vmatpush1.msra.mxu0 %v349
          %453 = vmatprep.subr.mxu0 0.0
          %454 = vmatpush1.msra.mxu0 %v348
          %455 = vmatprep.subr.mxu0 0.0
          %456 = vmatpush1.msra.mxu0 %v347
          %457 = vmatprep.subr.mxu0 0.0
          %458 = vmatpush1.msra.mxu0 %v346
          %459 = vmatprep.subr.mxu0 0.0
          %460 = vmatpush2.msra.mxu0 0.0
          %461 = vmatprep.subr.mxu0 0.0
          %462 = vmatpush2.msra.mxu0 0.0
          %463 = vmatprep.subr.mxu0 0.0
          %464 = vmatpush2.msra.mxu0 0.0
          %465 = vmatprep.subr.mxu0 0.0
          %466 = vmatpush2.msra.mxu0 0.0
          %467 = vmatprep.subr.mxu0 0.0
          %468 = vmatpush2.msra.mxu0 0.0
          %469 = vmatprep.subr.mxu0 0.0
          %470 = vmatpush2.msra.mxu0 0.0
          %471 = vmatprep.subr.mxu0 0.0
          %472 = vmatpush2.msra.mxu0 0.0
          %473 = vmatprep.subr.mxu0 0.0
          %474 = vmatpush2.msra.mxu0 0.0
          %475 = vmatprep.subr.mxu0 0.0
          %476 = vmatpush2.msra.mxu0 0.0
          %477 = vmatprep.subr.mxu0 0.0
          %478 = vmatpush2.msra.mxu0 0.0
          %479 = vmatprep.subr.mxu0 0.0
          %480 = vmatpush2.msra.mxu0 0.0
          %481 = vmatprep.subr.mxu0 0.0
          %482 = vmatpush2.msra.mxu0 0.0
          %483 = vmatprep.subr.mxu0 0.0
          %484 = vmatpush2.msra.mxu0 0.0
          %485 = vmatprep.subr.mxu0 0.0
          %486 = vmatpush2.msra.mxu0 0.0
          %487 = vmatprep.subr.mxu0 0.0
          %488 = vmatpush2.msra.mxu0 0.0
          %489 = vmatprep.subr.mxu0 0.0
          %490 = vmatpush2.msra.mxu0 0.0
          %491 = vmatprep.mubr.f32.mxu0 0.0
          %492 = vmatmul.mubr.f32.gmra.mxu0 %v425
          %v493 = vpop.f32.mrf.mxu0
          %v494 = vadd.f32 0.0, %v493
          %v495 = vpop.f32.mrf.mxu0
          %496 = vdwg.mxu0
          %v497 = vrcp.pop 64.0
          %v498 = vmul.f32 %v420, %v497
          %v499 = vmul.f32 %v494, %v497
          %v500 = vmul.f32 %v498, %v498
          %v501 = vsub.f32 %v499, %v500
          %v502 = vadd.f32 %v501, 1e-05
          %v503 = vrsqrt.pop %v502
          %v504 = vld [vmem:[#allocation8] sm:$0xff]
          %v505 = vld [vmem:[#allocation8 + $0x8] sm:$0xff]
          %v506 = vld [vmem:[#allocation8 + $0x10] sm:$0xff]
          %v507 = vld [vmem:[#allocation8 + $0x18] sm:$0xff]
          %v509 = vsel %vm285, %v498, 0
          %511 = vmatprep.subr.mxu0 0.0
          %512 = vmatpush1.msra.mxu0 0.0
          %513 = vmatprep.subr.mxu0 0.0
          %514 = vmatpush1.msra.mxu0 0.0
          %515 = vmatprep.subr.mxu0 0.0
          %516 = vmatpush1.msra.mxu0 0.0
          %517 = vmatprep.subr.mxu0 0.0
          %518 = vmatpush1.msra.mxu0 0.0
          %519 = vmatprep.subr.mxu0 0.0
          %520 = vmatpush1.msra.mxu0 0.0
          %521 = vmatprep.subr.mxu0 0.0
          %522 = vmatpush1.msra.mxu0 0.0
          %523 = vmatprep.subr.mxu0 0.0
          %524 = vmatpush1.msra.mxu0 0.0
          %525 = vmatprep.subr.mxu0 0.0
          %526 = vmatpush1.msra.mxu0 0.0
          %527 = vmatprep.subr.mxu0 0.0
          %528 = vmatpush1.msra.mxu0 0.0
          %529 = vmatprep.subr.mxu0 0.0
          %530 = vmatpush1.msra.mxu0 0.0
          %531 = vmatprep.subr.mxu0 0.0
          %532 = vmatpush1.msra.mxu0 0.0
          %533 = vmatprep.subr.mxu0 0.0
          %534 = vmatpush1.msra.mxu0 0.0
          %535 = vmatprep.subr.mxu0 0.0
          %536 = vmatpush1.msra.mxu0 %v507
          %537 = vmatprep.subr.mxu0 0.0
          %538 = vmatpush1.msra.mxu0 %v506
          %539 = vmatprep.subr.mxu0 0.0
          %540 = vmatpush1.msra.mxu0 %v505
          %541 = vmatprep.subr.mxu0 0.0
          %542 = vmatpush1.msra.mxu0 %v504
          %543 = vmatprep.subr.mxu0 0.0
          %544 = vmatpush2.msra.mxu0 0.0
          %545 = vmatprep.subr.mxu0 0.0
          %546 = vmatpush2.msra.mxu0 0.0
          %547 = vmatprep.subr.mxu0 0.0
          %548 = vmatpush2.msra.mxu0 0.0
          %549 = vmatprep.subr.mxu0 0.0
          %550 = vmatpush2.msra.mxu0 0.0
          %551 = vmatprep.subr.mxu0 0.0
          %552 = vmatpush2.msra.mxu0 0.0
          %553 = vmatprep.subr.mxu0 0.0
          %554 = vmatpush2.msra.mxu0 0.0
          %555 = vmatprep.subr.mxu0 0.0
          %556 = vmatpush2.msra.mxu0 0.0
          %557 = vmatprep.subr.mxu0 0.0
          %558 = vmatpush2.msra.mxu0 0.0
          %559 = vmatprep.subr.mxu0 0.0
          %560 = vmatpush2.msra.mxu0 0.0
          %561 = vmatprep.subr.mxu0 0.0
          %562 = vmatpush2.msra.mxu0 0.0
          %563 = vmatprep.subr.mxu0 0.0
          %564 = vmatpush2.msra.mxu0 0.0
          %565 = vmatprep.subr.mxu0 0.0
          %566 = vmatpush2.msra.mxu0 0.0
          %567 = vmatprep.subr.mxu0 0.0
          %568 = vmatpush2.msra.mxu0 0.0
          %569 = vmatprep.subr.mxu0 0.0
          %570 = vmatpush2.msra.mxu0 0.0
          %571 = vmatprep.subr.mxu0 0.0
          %572 = vmatpush2.msra.mxu0 0.0
          %573 = vmatprep.subr.mxu0 0.0
          %574 = vmatpush2.msra.mxu0 0.0
          %575 = vmatprep.mubr.f32.mxu0 0.0
          %576 = vmatmul.mubr.f32.gmra.mxu0 %v509
          %v577 = vpop.f32.mrf.mxu0
          %v578 = vadd.f32 0.0, %v577
          %v579 = vpop.f32.mrf.mxu0
          %580 = vdwg.mxu0
          %581 = vst.msk [vmem:[%s265] sm:$0x1] %vm308, %v578
          %v582 = vld [vmem:[#allocation8] sm:$0xff]
          %v583 = vld [vmem:[#allocation8 + $0x8] sm:$0xff]
          %v584 = vld [vmem:[#allocation8 + $0x10] sm:$0xff]
          %v585 = vld [vmem:[#allocation8 + $0x18] sm:$0xff]
          %v587 = vsel %vm285, %v503, 0
          %589 = vmatprep.subr.mxu0 0.0
          %590 = vmatpush1.msra.mxu0 0.0
          %591 = vmatprep.subr.mxu0 0.0
          %592 = vmatpush1.msra.mxu0 0.0
          %593 = vmatprep.subr.mxu0 0.0
          %594 = vmatpush1.msra.mxu0 0.0
          %595 = vmatprep.subr.mxu0 0.0
          %596 = vmatpush1.msra.mxu0 0.0
          %597 = vmatprep.subr.mxu0 0.0
          %598 = vmatpush1.msra.mxu0 0.0
          %599 = vmatprep.subr.mxu0 0.0
          %600 = vmatpush1.msra.mxu0 0.0
          %601 = vmatprep.subr.mxu0 0.0
          %602 = vmatpush1.msra.mxu0 0.0
          %603 = vmatprep.subr.mxu0 0.0
          %604 = vmatpush1.msra.mxu0 0.0
          %605 = vmatprep.subr.mxu0 0.0
          %606 = vmatpush1.msra.mxu0 0.0
          %607 = vmatprep.subr.mxu0 0.0
          %608 = vmatpush1.msra.mxu0 0.0
          %609 = vmatprep.subr.mxu0 0.0
          %610 = vmatpush1.msra.mxu0 0.0
          %611 = vmatprep.subr.mxu0 0.0
          %612 = vmatpush1.msra.mxu0 0.0
          %613 = vmatprep.subr.mxu0 0.0
          %614 = vmatpush1.msra.mxu0 %v585
          %615 = vmatprep.subr.mxu0 0.0
          %616 = vmatpush1.msra.mxu0 %v584
          %617 = vmatprep.subr.mxu0 0.0
          %618 = vmatpush1.msra.mxu0 %v583
          %619 = vmatprep.subr.mxu0 0.0
          %620 = vmatpush1.msra.mxu0 %v582
          %621 = vmatprep.subr.mxu0 0.0
          %622 = vmatpush2.msra.mxu0 0.0
          %623 = vmatprep.subr.mxu0 0.0
          %624 = vmatpush2.msra.mxu0 0.0
          %625 = vmatprep.subr.mxu0 0.0
          %626 = vmatpush2.msra.mxu0 0.0
          %627 = vmatprep.subr.mxu0 0.0
          %628 = vmatpush2.msra.mxu0 0.0
          %629 = vmatprep.subr.mxu0 0.0
          %630 = vmatpush2.msra.mxu0 0.0
          %631 = vmatprep.subr.mxu0 0.0
          %632 = vmatpush2.msra.mxu0 0.0
          %633 = vmatprep.subr.mxu0 0.0
          %634 = vmatpush2.msra.mxu0 0.0
          %635 = vmatprep.subr.mxu0 0.0
          %636 = vmatpush2.msra.mxu0 0.0
          %637 = vmatprep.subr.mxu0 0.0
          %638 = vmatpush2.msra.mxu0 0.0
          %639 = vmatprep.subr.mxu0 0.0
          %640 = vmatpush2.msra.mxu0 0.0
          %641 = vmatprep.subr.mxu0 0.0
          %642 = vmatpush2.msra.mxu0 0.0
          %643 = vmatprep.subr.mxu0 0.0
          %644 = vmatpush2.msra.mxu0 0.0
          %645 = vmatprep.subr.mxu0 0.0
          %646 = vmatpush2.msra.mxu0 0.0
          %647 = vmatprep.subr.mxu0 0.0
          %648 = vmatpush2.msra.mxu0 0.0
          %649 = vmatprep.subr.mxu0 0.0
          %650 = vmatpush2.msra.mxu0 0.0
          %651 = vmatprep.subr.mxu0 0.0
          %652 = vmatpush2.msra.mxu0 0.0
          %653 = vmatprep.mubr.f32.mxu0 0.0
          %654 = vmatmul.mubr.f32.gmra.mxu0 %v587
          %v655 = vpop.f32.mrf.mxu0
          %v656 = vadd.f32 0.0, %v655
          %v657 = vpop.f32.mrf.mxu0
          %658 = vdwg.mxu0
          %659 = vst.msk [vmem:[%s268] sm:$0x1] %vm308, %v656
        $region52: #{quant_attention_block.4} parent=31 // pred_fallthru
          _
        %p660 = scmp.lt.s32.totalorder %s24, 1
        %s661 = scalar_select %p660, %s24, 1
        %s662 = scalar_lea.vmem %s3, %s661
        %p663 = scmp.lt.s32.totalorder %s24, 1
        %s664 = scalar_select %p663, %s24, 1
        %s665 = scalar_lea.vmem %s4, %s664
        // Predicated region
        $region53: #{quant_attention_block.4} parent=31 // pred_check
          %p666 = pneg %p120
        $region54: #{quant_attention_block.4} parent=31 // pred_check_branch
          %668 = sbr.rel (%p666) target = $region56
        $region55: #{quant_attention_block.4} parent=31 // pred_region
          _
        $region56: #{quant_attention_block.4} parent=31 // pred_fallthru
          _
        // Predicated region
        $region57: #{quant_attention_block.4} parent=31 // pred_check
          %p669 = pneg %p146
        $region58: #{quant_attention_block.4} parent=31 // pred_check_branch
          %671 = sbr.rel (%p669) target = $region60
        $region59: #{quant_attention_block.4} parent=31 // pred_region
          _
        $region60: #{quant_attention_block.4} parent=31 // pred_fallthru
          _
      $region32: #{quant_attention_block.4} parent=5 // pred_fallthru
        _
      %p672 = scmp.le.s32.totalorder 2, %s15
      // Predicated region
      $region61: #{quant_attention_block.4} parent=5 // pred_check
        %p673 = pneg %p672
      $region62: #{quant_attention_block.4} parent=5 // pred_check_branch
        %675 = sbr.rel (%p673) target = $region64
      $region63: #{quant_attention_block.4} parent=5 // pred_region
        %s676 = ssub.s32 %s15, 2
        // Predicated region
        $region65: #{quant_attention_block.4} parent=63 // pred_check
          %p677 = pneg %p126
        $region66: #{quant_attention_block.4} parent=63 // pred_check_branch
          %679 = sbr.rel (%p677) target = $region68
        $region67: #{quant_attention_block.4} parent=63 // pred_region
          %p680 = scmp.lt.s32.totalorder %s26, 1
          %s681 = scalar_select %p680, %s26, 1
          %s682 = scalar_lea.vmem %s3, %s681
        $region68: #{quant_attention_block.4} parent=63 // pred_fallthru
          _
        // Predicated region
        $region69: #{quant_attention_block.4} parent=63 // pred_check
          %p683 = pneg %p152
        $region70: #{quant_attention_block.4} parent=63 // pred_check_branch
          %685 = sbr.rel (%p683) target = $region72
        $region71: #{quant_attention_block.4} parent=63 // pred_region
          %p686 = scmp.lt.s32.totalorder %s26, 1
          %s687 = scalar_select %p686, %s26, 1
          %s688 = scalar_lea.vmem %s4, %s687
        $region72: #{quant_attention_block.4} parent=63 // pred_fallthru
          _
      $region64: #{quant_attention_block.4} parent=5 // pred_fallthru
        _
    $region6: #{quant_attention_block.4} parent=1 // loop_footer
      %s19 = sadd.s32 1, %s15
    $region7: #{quant_attention_block.4} parent=1 // loop_footer_branch
      %14 = sbr.rel target = $region3
    $region8: #{quant_attention_block.4} parent=1 // loop_exit
      _
    %689 = vsyncpa [#allocation5], 1
    %s690 = scalar_lea.sflag [#allocation5], 1
    %691 = vsyncpa %s690, 1
    %692 = vsyncpa [#allocation7], 1

// kernel: quant_attention_block.7
$region0: #{quant_attention_block.7}
  #allocation0 [shape = 'u32[]', space=smem, size = 0x4, offset = 0x4, fixed_abs, tag = 'smem constant byte address 0x4 - core index']
  #allocation1 [shape = 'u32[144,128]{1,0:T(1,128)}', space=vmem, size = 0x12000, scoped, tag = 'internal scratch']
  #allocation2 [shape = 'f32[64,32]{1,0:T(8,128)}', space=vmem, size = 0x8000, scoped, tag = 'scratch operand']
  %s0 = inlined_call_operand.vmem [shape: bf16[2,4,64,8], index: 0, kind: input, shape index: {}]
  %s1 = inlined_call_operand.vmem [shape: bf16[4,8,32], index: 1, kind: input, shape index: {}]
  %s2 = inlined_call_operand.vmem [shape: f32[2,64,32], index: 2, kind: input, shape index: {}]
  %s3 = inlined_call_operand.vmem [shape: f32[1,32], index: 3, kind: input, shape index: {}]
  %s4 = inlined_call_operand.hbm [shape: f32[2,64,32], index: 4, kind: output, shape index: {}]
  %s5 = sld [smem:[#allocation0]]
  $region57: #{quant_attention_block.7} parent=0
    _
  %s7 = ssub.s32 1, %s5
  %s8 = scalar_select 0, %s7, %s5
  $region1: #{quant_attention_block.7} parent=0
    #allocation3 [shape = 'u8[65536]{0}', space=vmem, size = 0x10000, scoped, tag = 'output window, operand 0']
    #allocation4 [shape = 's32[2]{0}', space=sflag, size = 0x8, scoped, tag = 'scoped memory for quant_attention_block.7']
    %9 = vsyncpa [#allocation4], 0
    %s10 = scalar_lea.sflag [#allocation4], 1
    %11 = vsyncpa %s10, 0
    loop: start=0, step=1, limit=10
    $region2: #{quant_attention_block.7} parent=1 // loop_pre_header
      _
    $region3: #{quant_attention_block.7} parent=1 // loop_header
      %s13 = sphi 0, %s17
      %p14 = scmp.ge.s32.totalorder %s13, 10
      %s20 = sphi 0, %s39
      %s21 = sphi 0, %s35
      %s22 = sphi 0, %s31
      %s23 = sphi 0, %s20
      %s24 = sphi 0, %s21
      %s25 = sphi 0, %s22
      %s26 = sphi 0, %s23
      %s27 = sphi 0, %s24
      %s28 = sphi 0, %s25
      %s46 = sphi 0, %s48
      %s49 = sphi 0, %s46
      %s50 = sphi 0, %s49
      %s66 = sphi 0, %s50
      %s72 = sphi 0, %s74
      %s75 = sphi 0, %s72
      %s76 = sphi 0, %s75
      %s92 = sphi 0, %s76
      %s100 = sphi 0, %s102
      %s103 = sphi 0, %s100
      %s104 = sphi 0, %s103
      %s120 = sphi 0, %s104
      %s124 = sphi 0, %s124
      %s126 = sphi 0, %s124
      %s127 = sphi 0, %s126
      %s141 = sphi 0, %s127
      %s149 = sphi 0, %s151
      %s152 = sphi 0, %s149
      %s153 = sphi 0, %s152
      %s169 = sphi 0, %s153
    $region4: #{quant_attention_block.7} parent=1 // loop_header_branch
      %16 = sbr.rel (%p14) target = $region8
    $region5: #{quant_attention_block.7} parent=1 // loop_body
      %s18 = ssub.s32 %s13, 1
      %s19 = ssub.s32 %s13, 2
      %s29 = sadd.s32 1, %s22
      %p30 = scmp.ge.s32.totalorder %s29, 4
      %s31 = scalar_select %p30, 0, %s29
      %s32 = sadd.s32 1, %s21
      %s33 = scalar_select %p30, %s32, %s21
      %p34 = scmp.ge.s32.totalorder %s33, 1
      %s35 = scalar_select %p34, 0, %s33
      %s36 = sadd.s32 1, %s20
      %s37 = scalar_select %p34, %s36, %s20
      %p38 = scmp.ge.s32.totalorder %s37, 2
      %s39 = scalar_select %p38, 0, %s37
      %s40 = ssub.s32 %s20, %s39
      %s41 = ssub.s32 %s22, %s31
      %s42 = sor.u32 %s40, %s41
      %s43 = ssub.s32 %s21, %s35
      %s44 = sor.u32 %s42, %s43
      %p45 = scmp.eq.s32.totalorder %s44, 0
      %s47 = sadd.s32 %s46, 1
      %s48 = scalar_select %p45, %s46, %s47
      %p51 = pneg %p45
      %p52 = scmp.eq.s32.totalorder %s13, 7
      %p53 = por %p51, %p52
      %p54 = scmp.ne.s32.totalorder %s46, %s49
      %p55 = scmp.eq.s32.totalorder %s13, 0
      %p56 = por %p54, %p55
      %p57 = scmp.ne.s32.totalorder %s46, %s49
      %p58 = scmp.eq.s32.totalorder %s18, 7
      %p59 = por %p57, %p58
      %p60 = scmp.ne.s32.totalorder %s49, %s50
      %p61 = scmp.eq.s32.totalorder %s18, 0
      %p62 = por %p60, %p61
      %p63 = scmp.ne.s32.totalorder %s49, %s50
      %p64 = scmp.eq.s32.totalorder %s19, 7
      %p65 = por %p63, %p64
      %p67 = scmp.ne.s32.totalorder %s50, %s66
      %p68 = scmp.eq.s32.totalorder %s19, 0
      %p69 = por %p67, %p68
      %s70 = ssub.s32 %s22, %s31
      %p71 = scmp.eq.s32.totalorder %s70, 0
      %s73 = sadd.s32 %s72, 1
      %s74 = scalar_select %p71, %s72, %s73
      %p77 = pneg %p71
      %p78 = scmp.eq.s32.totalorder %s13, 7
      %p79 = por %p77, %p78
      %p80 = scmp.ne.s32.totalorder %s72, %s75
      %p81 = scmp.eq.s32.totalorder %s13, 0
      %p82 = por %p80, %p81
      %p83 = scmp.ne.s32.totalorder %s72, %s75
      %p84 = scmp.eq.s32.totalorder %s18, 7
      %p85 = por %p83, %p84
      %p86 = scmp.ne.s32.totalorder %s75, %s76
      %p87 = scmp.eq.s32.totalorder %s18, 0
      %p88 = por %p86, %p87
      %p89 = scmp.ne.s32.totalorder %s75, %s76
      %p90 = scmp.eq.s32.totalorder %s19, 7
      %p91 = por %p89, %p90
      %p93 = scmp.ne.s32.totalorder %s76, %s92
      %p94 = scmp.eq.s32.totalorder %s19, 0
      %p95 = por %p93, %p94
      %s96 = ssub.s32 %s20, %s39
      %s97 = ssub.s32 %s21, %s35
      %s98 = sor.u32 %s96, %s97
      %p99 = scmp.eq.s32.totalorder %s98, 0
      %s101 = sadd.s32 %s100, 1
      %s102 = scalar_select %p99, %s100, %s101
      %p105 = pneg %p99
      %p106 = scmp.eq.s32.totalorder %s13, 7
      %p107 = por %p105, %p106
      %p108 = scmp.ne.s32.totalorder %s100, %s103
      %p109 = scmp.eq.s32.totalorder %s13, 0
      %p110 = por %p108, %p109
      %p111 = scmp.ne.s32.totalorder %s100, %s103
      %p112 = scmp.eq.s32.totalorder %s18, 7
      %p113 = por %p111, %p112
      %p114 = scmp.ne.s32.totalorder %s103, %s104
      %p115 = scmp.eq.s32.totalorder %s18, 0
      %p116 = por %p114, %p115
      %p117 = scmp.ne.s32.totalorder %s103, %s104
      %p118 = scmp.eq.s32.totalorder %s19, 7
      %p119 = por %p117, %p118
      %p121 = scmp.ne.s32.totalorder %s104, %s120
      %p122 = scmp.eq.s32.totalorder %s19, 0
      %p123 = por %p121, %p122
      %s125 = sadd.s32 %s124, 1
      %p128 = scmp.eq.s32.totalorder %s13, 7
      %p129 = scmp.ne.s32.totalorder %s124, %s126
      %p130 = scmp.eq.s32.totalorder %s13, 0
      %p131 = por %p129, %p130
      %p132 = scmp.ne.s32.totalorder %s124, %s126
      %p133 = scmp.eq.s32.totalorder %s18, 7
      %p134 = por %p132, %p133
      %p135 = scmp.ne.s32.totalorder %s126, %s127
      %p136 = scmp.eq.s32.totalorder %s18, 0
      %p137 = por %p135, %p136
      %p138 = scmp.ne.s32.totalorder %s126, %s127
      %p139 = scmp.eq.s32.totalorder %s19, 7
      %p140 = por %p138, %p139
      %p142 = scmp.ne.s32.totalorder %s127, %s141
      %p143 = scmp.eq.s32.totalorder %s19, 0
      %p144 = por %p142, %p143
      %s145 = ssub.s32 %s20, %s39
      %s146 = ssub.s32 %s21, %s35
      %s147 = sor.u32 %s145, %s146
      %p148 = scmp.eq.s32.totalorder %s147, 0
      %s150 = sadd.s32 %s149, 1
      %s151 = scalar_select %p148, %s149, %s150
      %p154 = pneg %p148
      %p155 = scmp.eq.s32.totalorder %s13, 7
      %p156 = por %p154, %p155
      %p157 = scmp.ne.s32.totalorder %s149, %s152
      %p158 = scmp.eq.s32.totalorder %s13, 0
      %p159 = por %p157, %p158
      %p160 = scmp.ne.s32.totalorder %s149, %s152
      %p161 = scmp.eq.s32.totalorder %s18, 7
      %p162 = por %p160, %p161
      %p163 = scmp.ne.s32.totalorder %s152, %s153
      %p164 = scmp.eq.s32.totalorder %s18, 0
      %p165 = por %p163, %p164
      %p166 = scmp.ne.s32.totalorder %s152, %s153
      %p167 = scmp.eq.s32.totalorder %s19, 7
      %p168 = por %p166, %p167
      %p170 = scmp.ne.s32.totalorder %s153, %s169
      %p171 = scmp.eq.s32.totalorder %s19, 0
      %p172 = por %p170, %p171
      %p173 = scmp.le.s32.totalorder 1, %s13
      %p174 = scmp.lt.s32.totalorder %s13, 9
      %p175 = pnand %p173, %p174
      %p176 = pneg %p175
      // Predicated region
      $region9: #{quant_attention_block.7} parent=5 // pred_check
        _
      $region10: #{quant_attention_block.7} parent=5 // pred_check_branch
        %178 = sbr.rel (%p175) target = $region12
      $region11: #{quant_attention_block.7} parent=5 // pred_region
        %s179 = ssub.s32 %s13, 1
        // Predicated region
        $region13: #{quant_attention_block.7} parent=11 // pred_check
          %p180 = pneg %p137
        $region14: #{quant_attention_block.7} parent=11 // pred_check_branch
          %182 = sbr.rel (%p180) target = $region16
        $region15: #{quant_attention_block.7} parent=11 // pred_region
          _
        $region16: #{quant_attention_block.7} parent=11 // pred_fallthru
          _
      $region12: #{quant_attention_block.7} parent=5 // pred_fallthru
        _
      %p183 = scmp.lt.s32.totalorder %s13, 8
      // Predicated region
      $region17: #{quant_attention_block.7} parent=5 // pred_check
        %p184 = pneg %p183
      $region18: #{quant_attention_block.7} parent=5 // pred_check_branch
        %186 = sbr.rel (%p184) target = $region20
      $region19: #{quant_attention_block.7} parent=5 // pred_region
        // Predicated region
        $region21: #{quant_attention_block.7} parent=19 // pred_check
          %p187 = pneg %p56
        $region22: #{quant_attention_block.7} parent=19 // pred_check_branch
          %189 = sbr.rel (%p187) target = $region24
        $region23: #{quant_attention_block.7} parent=19 // pred_region
          %s190 = smul.u32 8, %s21
          %p191 = scmp.lt.s32.totalorder %s20, 1
          %s192 = scalar_select %p191, %s20, 1
          %p193 = scmp.lt.s32.totalorder %s22, 3
          %s194 = scalar_select %p193, %s22, 3
          %p195 = scmp.lt.s32.totalorder %s190, 7
          %s196 = scalar_select %p195, %s190, 7
          %s197 = smul.addr %s194, 8
          %s198 = sadd.s32 %s196, %s197
          %s199 = smul.addr %s192, 32
          %s200 = sadd.s32 %s198, %s199
          %s201 = smul.addr %s200, 4
          %s202 = scalar_lea.vmem %s0, %s201
          %s203 = smul.u32 8, %s21
        $region24: #{quant_attention_block.7} parent=19 // pred_fallthru
          _
        // Predicated region
        $region25: #{quant_attention_block.7} parent=19 // pred_check
          %p204 = pneg %p82
        $region26: #{quant_attention_block.7} parent=19 // pred_check_branch
          %206 = sbr.rel (%p204) target = $region28
        $region27: #{quant_attention_block.7} parent=19 // pred_region
          %p207 = scmp.lt.s32.totalorder %s22, 3
          %s208 = scalar_select %p207, %s22, 3
          %s209 = smul.addr %s208, 4
          %s210 = scalar_lea.vmem %s1, %s209
        $region28: #{quant_attention_block.7} parent=19 // pred_fallthru
          _
        // Predicated region
        $region29: #{quant_attention_block.7} parent=19 // pred_check
          %p211 = pneg %p110
        $region30: #{quant_attention_block.7} parent=19 // pred_check_branch
          %213 = sbr.rel (%p211) target = $region32
        $region31: #{quant_attention_block.7} parent=19 // pred_region
          %s214 = smul.u32 8, %s21
          %p215 = scmp.lt.s32.totalorder %s20, 1
          %s216 = scalar_select %p215, %s20, 1
          %p217 = scmp.lt.s32.totalorder %s214, 7
          %s218 = scalar_select %p217, %s214, 7
          %s219 = smul.addr %s216, 8
          %s220 = sadd.s32 %s218, %s219
          %s221 = smul.addr %s220, 8
          %s222 = scalar_lea.vmem %s2, %s221
          %s223 = smul.u32 8, %s21
        $region32: #{quant_attention_block.7} parent=19 // pred_fallthru
          _
      $region20: #{quant_attention_block.7} parent=5 // pred_fallthru
        _
      %p224 = scmp.le.s32.totalorder 1, %s13
      %p225 = scmp.lt.s32.totalorder %s13, 9
      %p226 = pnand %p224, %p225
      %p227 = pneg %p226
      // Predicated region
      $region33: #{quant_attention_block.7} parent=5 // pred_check
        _
      $region34: #{quant_attention_block.7} parent=5 // pred_check_branch
        %229 = sbr.rel (%p226) target = $region36
      $region35: #{quant_attention_block.7} parent=5 // pred_region
        %s230 = ssub.s32 %s13, 1
        %s231 = smul.u32 8, %s24
        %p232 = scmp.lt.s32.totalorder %s23, 1
        %s233 = scalar_select %p232, %s23, 1
        %p234 = scmp.lt.s32.totalorder %s25, 3
        %s235 = scalar_select %p234, %s25, 3
        %p236 = scmp.lt.s32.totalorder %s231, 7
        %s237 = scalar_select %p236, %s231, 7
        %s238 = smul.addr %s235, 8
        %s239 = sadd.s32 %s237, %s238
        %s240 = smul.addr %s233, 32
        %s241 = sadd.s32 %s239, %s240
        %s242 = smul.addr %s241, 4
        %s243 = scalar_lea.vmem %s0, %s242
        %p244 = pneg %p62
        %p245 = pneg %p59
        %p246 = scmp.lt.s32.totalorder %s25, 3
        %s247 = scalar_select %p246, %s25, 3
        %s248 = smul.addr %s247, 4
        %s249 = scalar_lea.vmem %s1, %s248
        %p250 = pneg %p88
        %p251 = pneg %p85
        %s252 = smul.u32 8, %s24
        %p253 = scmp.lt.s32.totalorder %s23, 1
        %s254 = scalar_select %p253, %s23, 1
        %p255 = scmp.lt.s32.totalorder %s252, 7
        %s256 = scalar_select %p255, %s252, 7
        %s257 = smul.addr %s254, 8
        %s258 = sadd.s32 %s256, %s257
        %s259 = smul.addr %s258, 8
        %s260 = scalar_lea.vmem %s2, %s259
        %p261 = pneg %p116
        %p262 = pneg %p113
        %p263 = pneg %p137
        %p264 = pneg %p134
        %p265 = pneg %p165
        %p266 = pneg %p162
        %s267 = sand.u32 %s152, 1
        %s268 = scalar_lea.sflag [#allocation4], %s267
        %s269 = sand.u32 %s152, 1
        %s270 = smul.addr %s269, 64
        %s271 = scalar_lea.vmem [#allocation3], %s270
        %s272 = smul.u32 8, %s24
        %p273 = scmp.lt.s32.totalorder %s23, 1
        %s274 = scalar_select %p273, %s23, 1
        %p275 = scmp.lt.s32.totalorder %s25, 3
        %s276 = scalar_select %p275, %s25, 3
        %p277 = scmp.lt.s32.totalorder %s272, 7
        %s278 = scalar_select %p277, %s272, 7
        %s279 = smul.addr %s276, 8
        %s280 = sadd.s32 %s278, %s279
        %s281 = smul.addr %s274, 32
        %s282 = sadd.s32 %s280, %s281
        %s283 = smul.addr %s282, 4
        %s284 = scalar_lea.vmem %s0, %s283
        %s285 = smul.u32 8, %s24
        %p286 = scmp.lt.s32.totalorder %s25, 3
        %s287 = scalar_select %p286, %s25, 3
        %s288 = smul.addr %s287, 4
        %s289 = scalar_lea.vmem %s1, %s288
        %s290 = smul.u32 8, %s24
        %p291 = scmp.lt.s32.totalorder %s23, 1
        %s292 = scalar_select %p291, %s23, 1
        %p293 = scmp.lt.s32.totalorder %s290, 7
        %s294 = scalar_select %p293, %s290, 7
        %s295 = smul.addr %s292, 8
        %s296 = sadd.s32 %s294, %s295
        %s297 = smul.addr %s296, 8
        %s298 = scalar_lea.vmem %s2, %s297
        %s299 = smul.u32 8, %s24
        %s300 = smul.u32 8, %s24
        %p302 = scmp.eq.s32.totalorder %s25, 0
        // Predicated region
        $region37: #{quant_attention_block.7} parent=35 // pred_check
          %p303 = pneg %p302
        $region38: #{quant_attention_block.7} parent=35 // pred_check_branch
          %305 = sbr.rel (%p303) target = $region40
        $region39: #{quant_attention_block.7} parent=35 // pred_region
          %vm306 = vcmask 261120
          %307 = vst.msk [vmem:[#allocation2] sm:$0xff] %vm306, 0.0
          %308 = vst.msk [vmem:[#allocation2 + $0x8] sm:$0xff] %vm306, 0.0
          %309 = vst.msk [vmem:[#allocation2 + $0x10] sm:$0xff] %vm306, 0.0
          %310 = vst.msk [vmem:[#allocation2 + $0x18] sm:$0xff] %vm306, 0.0
          %311 = vst.msk [vmem:[#allocation2 + $0x20] sm:$0xff] %vm306, 0.0
          %312 = vst.msk [vmem:[#allocation2 + $0x28] sm:$0xff] %vm306, 0.0
          %313 = vst.msk [vmem:[#allocation2 + $0x30] sm:$0xff] %vm306, 0.0
          %314 = vst.msk [vmem:[#allocation2 + $0x38] sm:$0xff] %vm306, 0.0
        $region40: #{quant_attention_block.7} parent=35 // pred_fallthru
          _
        %v315 = vld [vmem:[#allocation2] sm:$0xff]
        %v316 = vld [vmem:[#allocation2 + $0x8] sm:$0xff]
        %v317 = vld [vmem:[#allocation2 + $0x10] sm:$0xff]
        %v318 = vld [vmem:[#allocation2 + $0x18] sm:$0xff]
        %v319 = vld [vmem:[#allocation2 + $0x20] sm:$0xff]
        %v320 = vld [vmem:[#allocation2 + $0x28] sm:$0xff]
        %v321 = vld [vmem:[#allocation2 + $0x30] sm:$0xff]
        %v322 = vld [vmem:[#allocation2 + $0x38] sm:$0xff]
        %v323 = vld [vmem:[%s284] sm:$0xf]
        %v324 = vld [vmem:[%s284 + $0x4] sm:$0xf]
        %v325 = vld [vmem:[%s284 + $0x8] sm:$0xf]
        %v326 = vld [vmem:[%s284 + $0xc] sm:$0xf]
        %v327 = vld [vmem:[%s284 + $0x10] sm:$0xf]
        %v328 = vld [vmem:[%s284 + $0x14] sm:$0xf]
        %v329 = vld [vmem:[%s284 + $0x18] sm:$0xf]
        %v330 = vld [vmem:[%s284 + $0x1c] sm:$0xf]
        %v331 = vld [vmem:[%s289] sm:$0xf]
        %v340 = vunpack.c.l.b16 %v323
        %v341 = vunpack.c.l.b16 %v324
        %v342 = vunpack.c.l.b16 %v325
        %v343 = vunpack.c.l.b16 %v326
        %v344 = vunpack.c.l.b16 %v327
        %v345 = vunpack.c.l.b16 %v328
        %v346 = vunpack.c.l.b16 %v329
        %v347 = vunpack.c.l.b16 %v330
        %v348 = vpack.c.b16 %v341, %v340
        %v349 = vpack.c.b16 %v343, %v342
        %v350 = vpack.c.b16 %v345, %v344
        %v351 = vpack.c.b16 %v347, %v346
        %vm352 = vcmask 64512
        %v354 = vsel %vm352, %v348, 0
        %v357 = vsel %vm352, %v349, 0
        %v360 = vsel %vm352, %v350, 0
        %v363 = vsel %vm352, %v351, 0
        %vm365 = vcmask 1043456
        %v367 = vsel %vm365, %v331, 0
        %369 = vmatprep.subr.bf16.mxu0 0
        %370 = vmatpush1.bf16.msra.mxu0 0
        %371 = vmatprep.subr.bf16.mxu0 0
        %372 = vmatpush1.bf16.msra.mxu0 0
        %373 = vmatprep.subr.bf16.mxu0 0
        %374 = vmatpush1.bf16.msra.mxu0 0
        %375 = vmatprep.subr.bf16.mxu0 0
        %376 = vmatpush1.bf16.msra.mxu0 0
        %377 = vmatprep.subr.bf16.mxu0 0
        %378 = vmatpush1.bf16.msra.mxu0 0
        %379 = vmatprep.subr.bf16.mxu0 0
        %380 = vmatpush1.bf16.msra.mxu0 0
        %381 = vmatprep.subr.bf16.mxu0 0
        %382 = vmatpush1.bf16.msra.mxu0 0
        %383 = vmatprep.subr.bf16.mxu0 0
        %384 = vmatpush1.bf16.msra.mxu0 %v367
        %385 = vmatprep.subr.bf16.mxu0 0
        %386 = vmatpush2.bf16.msra.mxu0 0
        %387 = vmatprep.subr.bf16.mxu0 0
        %388 = vmatpush2.bf16.msra.mxu0 0
        %389 = vmatprep.subr.bf16.mxu0 0
        %390 = vmatpush2.bf16.msra.mxu0 0
        %391 = vmatprep.subr.bf16.mxu0 0
        %392 = vmatpush2.bf16.msra.mxu0 0
        %393 = vmatprep.subr.bf16.mxu0 0
        %394 = vmatpush2.bf16.msra.mxu0 0
        %395 = vmatprep.subr.bf16.mxu0 0
        %396 = vmatpush2.bf16.msra.mxu0 0
        %397 = vmatprep.subr.bf16.mxu0 0
        %398 = vmatpush2.bf16.msra.mxu0 0
        %399 = vmatprep.subr.bf16.mxu0 0
        %400 = vmatpush2.bf16.msra.mxu0 0
        %401 = vmatprep.mubr.bf16.mxu0 0
        %402 = vmatmul.mubr.bf16.gmra.mxu0 %v354
        %v403 = vpop.f32.mrf.mxu0
        %v404 = vadd.f32 0.0, %v403
        %v405 = vpop.f32.mrf.mxu0
        %v406 = vpop.f32.mrf.mxu0
        %v407 = vadd.f32 0.0, %v406
        %v408 = vpop.f32.mrf.mxu0
        %409 = vmatprep.mubr.bf16.mxu0 0
        %410 = vmatmul.mubr.bf16.gmra.mxu0 %v357
        %v411 = vpop.f32.mrf.mxu0
        %v412 = vadd.f32 0.0, %v411
        %v413 = vpop.f32.mrf.mxu0
        %v414 = vpop.f32.mrf.mxu0
        %v415 = vadd.f32 0.0, %v414
        %v416 = vpop.f32.mrf.mxu0
        %417 = vmatprep.mubr.bf16.mxu0 0
        %418 = vmatmul.mubr.bf16.gmra.mxu0 %v360
        %v419 = vpop.f32.mrf.mxu0
        %v420 = vadd.f32 0.0, %v419
        %v421 = vpop.f32.mrf.mxu0
        %v422 = vpop.f32.mrf.mxu0
        %v423 = vadd.f32 0.0, %v422
        %v424 = vpop.f32.mrf.mxu0
        %425 = vmatprep.mubr.bf16.mxu0 0
        %426 = vmatmul.mubr.bf16.gmra.mxu0 %v363
        %v427 = vpop.f32.mrf.mxu0
        %v428 = vadd.f32 0.0, %v427
        %v429 = vpop.f32.mrf.mxu0
        %v430 = vpop.f32.mrf.mxu0
        %v431 = vadd.f32 0.0, %v430
        %v432 = vpop.f32.mrf.mxu0
        %433 = vdwg.mxu0
        %v434 = vadd.f32 %v315, %v404
        %v435 = vadd.f32 %v316, %v407
        %v436 = vadd.f32 %v317, %v412
        %v437 = vadd.f32 %v318, %v415
        %v438 = vadd.f32 %v319, %v420
        %v439 = vadd.f32 %v320, %v423
        %v440 = vadd.f32 %v321, %v428
        %v441 = vadd.f32 %v322, %v431
        %vm442 = vcmask 261120
        %443 = vst.msk [vmem:[#allocation2] sm:$0xff] %vm442, %v434
        %444 = vst.msk [vmem:[#allocation2 + $0x8] sm:$0xff] %vm442, %v435
        %445 = vst.msk [vmem:[#allocation2 + $0x10] sm:$0xff] %vm442, %v436
        %446 = vst.msk [vmem:[#allocation2 + $0x18] sm:$0xff] %vm442, %v437
        %447 = vst.msk [vmem:[#allocation2 + $0x20] sm:$0xff] %vm442, %v438
        %448 = vst.msk [vmem:[#allocation2 + $0x28] sm:$0xff] %vm442, %v439
        %449 = vst.msk [vmem:[#allocation2 + $0x30] sm:$0xff] %vm442, %v440
        %450 = vst.msk [vmem:[#allocation2 + $0x38] sm:$0xff] %vm442, %v441
        %p451 = scmp.eq.s32.totalorder %s25, 3
        // Predicated region
        $region41: #{quant_attention_block.7} parent=35 // pred_check
          %p452 = pneg %p451
        $region42: #{quant_attention_block.7} parent=35 // pred_check_branch
          %454 = sbr.rel (%p452) target = $region44
        $region43: #{quant_attention_block.7} parent=35 // pred_region
          %v455 = vld [vmem:[%s298] sm:$0xff]
          %v456 = vld [vmem:[%s298 + $0x8] sm:$0xff]
          %v457 = vld [vmem:[%s298 + $0x10] sm:$0xff]
          %v458 = vld [vmem:[%s298 + $0x18] sm:$0xff]
          %v459 = vld [vmem:[%s298 + $0x20] sm:$0xff]
          %v460 = vld [vmem:[%s298 + $0x28] sm:$0xff]
          %v461 = vld [vmem:[%s298 + $0x30] sm:$0xff]
          %v462 = vld [vmem:[%s298 + $0x38] sm:$0xff]
          %v463 = vld [vmem:[#allocation2] sm:$0xff]
          %v464 = vld [vmem:[#allocation2 + $0x8] sm:$0xff]
          %v465 = vld [vmem:[#allocation2 + $0x10] sm:$0xff]
          %v466 = vld [vmem:[#allocation2 + $0x18] sm:$0xff]
          %v467 = vld [vmem:[#allocation2 + $0x20] sm:$0xff]
          %v468 = vld [vmem:[#allocation2 + $0x28] sm:$0xff]
          %v469 = vld [vmem:[#allocation2 + $0x30] sm:$0xff]
          %v470 = vld [vmem:[#allocation2 + $0x38] sm:$0xff]
          %v471 = vadd.f32 %v455, %v463
          %v472 = vadd.f32 %v456, %v464
          %v473 = vadd.f32 %v457, %v465
          %v474 = vadd.f32 %v458, %v466
          %v475 = vadd.f32 %v459, %v467
          %v476 = vadd.f32 %v460, %v468
          %v477 = vadd.f32 %v461, %v469
          %v478 = vadd.f32 %v462, %v470
          %v479 = vld [vmem:[%s3] sm:$0x1]
          %v481 = vlaneseq
          %v482 = vshrl.u32 %v481, 7
          %v483 = vsub.s32 0, %v482
          %v484 = vrot.slane %v479, %v483
          %v486 = vadd.f32 %v471, %v484
          %v487 = vadd.f32 %v472, %v484
          %v488 = vadd.f32 %v473, %v484
          %v489 = vadd.f32 %v474, %v484
          %v490 = vadd.f32 %v475, %v484
          %v491 = vadd.f32 %v476, %v484
          %v492 = vadd.f32 %v477, %v484
          %v493 = vadd.f32 %v478, %v484
          %494 = vst.msk [vmem:[%s271] sm:$0xff] %vm442, %v486
          %495 = vst.msk [vmem:[%s271 + $0x8] sm:$0xff] %vm442, %v487
          %496 = vst.msk [vmem:[%s271 + $0x10] sm:$0xff] %vm442, %v488
          %497 = vst.msk [vmem:[%s271 + $0x18] sm:$0xff] %vm442, %v489
          %498 = vst.msk [vmem:[%s271 + $0x20] sm:$0xff] %vm442, %v490
          %499 = vst.msk [vmem:[%s271 + $0x28] sm:$0xff] %vm442, %v491
          %500 = vst.msk [vmem:[%s271 + $0x30] sm:$0xff] %vm442, %v492
          %501 = vst.msk [vmem:[%s271 + $0x38] sm:$0xff] %vm442, %v493
        $region44: #{quant_attention_block.7} parent=35 // pred_fallthru
          _
        %s502 = sand.u32 %s152, 1
        %s503 = scalar_lea.sflag [#allocation4], %s502
        %s504 = sand.u32 %s152, 1
        %s505 = smul.addr %s504, 64
        %s506 = scalar_lea.vmem [#allocation3], %s505
        // Predicated region
        $region45: #{quant_attention_block.7} parent=35 // pred_check
          %p507 = pneg %p162
        $region46: #{quant_attention_block.7} parent=35 // pred_check_branch
          %509 = sbr.rel (%p507) target = $region48
        $region47: #{quant_attention_block.7} parent=35 // pred_region
          %s510 = smul.u32 8, %s24
          %s512 = ssub.s32 1024, 1024
          %513 = vsyncadd %s503, %s512
          %s514 = smul.addr %s23, 8
          %s515 = sadd.s32 %s510, %s514
          %s516 = smul.addr %s515, 128
          %s517 = scalar_lea.hbm %s4, %s516
          %s518 = sshll.u32 %s506, 4
          %s519 = int_to_ptr.vmem [resolvable:$true] %s518
          %524 = dma.vmem_to_hbm [thread:$0]  %s519, 1024, %s517, %s503, 128, 128, 8
        $region48: #{quant_attention_block.7} parent=35 // pred_fallthru
          _
      $region36: #{quant_attention_block.7} parent=5 // pred_fallthru
        _
      %p525 = scmp.le.s32.totalorder 2, %s13
      // Predicated region
      $region49: #{quant_attention_block.7} parent=5 // pred_check
        %p526 = pneg %p525
      $region50: #{quant_attention_block.7} parent=5 // pred_check_branch
        %528 = sbr.rel (%p526) target = $region52
      $region51: #{quant_attention_block.7} parent=5 // pred_region
        %s529 = ssub.s32 %s13, 2
        // Predicated region
        $region53: #{quant_attention_block.7} parent=51 // pred_check
          %p530 = pneg %p168
        $region54: #{quant_attention_block.7} parent=51 // pred_check_branch
          %532 = sbr.rel (%p530) target = $region56
        $region55: #{quant_attention_block.7} parent=51 // pred_region
          %s533 = sand.u32 %s153, 1
          %s534 = scalar_lea.sflag [#allocation4], %s533
          %s535 = sand.u32 %s153, 1
          %s536 = smul.addr %s535, 64
          %s537 = scalar_lea.vmem [#allocation3], %s536
          %538 = dma.done %s534, 1024
        $region56: #{quant_attention_block.7} parent=51 // pred_fallthru
          _
      $region52: #{quant_attention_block.7} parent=5 // pred_fallthru
        _
    $region6: #{quant_attention_block.7} parent=1 // loop_footer
      %s17 = sadd.s32 1, %s13
    $region7: #{quant_attention_block.7} parent=1 // loop_footer_branch
      %12 = sbr.rel target = $region3
    $region8: #{quant_attention_block.7} parent=1 // loop_exit
      _
    %539 = vsyncpa [#allocation4], 1
    %s540 = scalar_lea.sflag [#allocation4], 1
    %541 = vsyncpa %s540, 1

// kernel: quant_attention_block.5
$region0: #{quant_attention_block.5}
  #allocation0 [shape = 'u32[]', space=smem, size = 0x4, offset = 0x4, fixed_abs, tag = 'smem constant byte address 0x4 - core index']
  #allocation1 [shape = 'u32[144,128]{1,0:T(1,128)}', space=vmem, size = 0x12000, scoped, tag = 'internal scratch']
  %s0 = inlined_call_operand.vmem [shape: f32[2,64,32], index: 0, kind: input, shape index: {}]
  %s1 = inlined_call_operand.vmem [shape: f32[2,1,32], index: 1, kind: input, shape index: {}]
  %s2 = inlined_call_operand.vmem [shape: f32[2,1,32], index: 2, kind: input, shape index: {}]
  %s3 = inlined_call_operand.vmem [shape: f32[1,32], index: 3, kind: input, shape index: {}]
  %s4 = inlined_call_operand.vmem [shape: f32[1,32], index: 4, kind: input, shape index: {}]
  %s5 = inlined_call_operand.vmem [shape: bf16[4,32,8], index: 5, kind: input, shape index: {}]
  %s6 = inlined_call_operand.vmem [shape: bf16[4,32,8], index: 6, kind: input, shape index: {}]
  %s7 = inlined_call_operand.vmem [shape: bf16[4,32,8], index: 7, kind: input, shape index: {}]
  %s8 = inlined_call_operand.vmem [shape: f32[4,1,8], index: 8, kind: input, shape index: {}]
  %s9 = inlined_call_operand.vmem [shape: f32[4,1,8], index: 9, kind: input, shape index: {}]
  %s10 = inlined_call_operand.vmem [shape: f32[4,1,8], index: 10, kind: input, shape index: {}]
  %s11 = inlined_call_operand.vmem [shape: bf16[2,4,64,8], index: 11, kind: output, shape index: {0}]
  %s12 = inlined_call_operand.vmem [shape: bf16[2,4,64,8], index: 12, kind: output, shape index: {1}]
  %s13 = inlined_call_operand.vmem [shape: bf16[2,4,64,8], index: 13, kind: output, shape index: {2}]
  %14 = xla_tuple %s11, %s12, %s13
  %s15 = sld [smem:[#allocation0]]
  $region93: #{quant_attention_block.5} parent=0
    _
  %s17 = ssub.s32 1, %s15
  %s18 = scalar_select 0, %s17, %s15
  loop: start=0, step=1, limit=10
  $region2: #{quant_attention_block.5} parent=0 // loop_pre_header
    _
  $region3: #{quant_attention_block.5} parent=0 // loop_header
    %s20 = sphi 0, %s24
    %p21 = scmp.ge.s32.totalorder %s20, 10
    %s27 = sphi 0, %s46
    %s28 = sphi 0, %s42
    %s29 = sphi 0, %s38
    %s30 = sphi 0, %s27
    %s31 = sphi 0, %s28
    %s32 = sphi 0, %s29
    %s33 = sphi 0, %s30
    %s34 = sphi 0, %s31
    %s35 = sphi 0, %s32
    %s51 = sphi 0, %s53
    %s54 = sphi 0, %s51
    %s55 = sphi 0, %s54
    %s71 = sphi 0, %s55
    %s77 = sphi 0, %s79
    %s80 = sphi 0, %s77
    %s81 = sphi 0, %s80
    %s97 = sphi 0, %s81
    %s103 = sphi 0, %s105
    %s106 = sphi 0, %s103
    %s107 = sphi 0, %s106
    %s123 = sphi 0, %s107
    %s127 = sphi 0, %s127
    %s129 = sphi 0, %s127
    %s130 = sphi 0, %s129
    %s144 = sphi 0, %s130
    %s148 = sphi 0, %s148
    %s150 = sphi 0, %s148
    %s151 = sphi 0, %s150
    %s165 = sphi 0, %s151
    %s171 = sphi 0, %s173
    %s174 = sphi 0, %s171
    %s175 = sphi 0, %s174
    %s191 = sphi 0, %s175
    %s197 = sphi 0, %s199
    %s200 = sphi 0, %s197
    %s201 = sphi 0, %s200
    %s217 = sphi 0, %s201
    %s223 = sphi 0, %s225
    %s226 = sphi 0, %s223
    %s227 = sphi 0, %s226
    %s243 = sphi 0, %s227
    %s249 = sphi 0, %s251
    %s252 = sphi 0, %s249
    %s253 = sphi 0, %s252
    %s269 = sphi 0, %s253
    %s275 = sphi 0, %s277
    %s278 = sphi 0, %s275
    %s279 = sphi 0, %s278
    %s295 = sphi 0, %s279
    %s301 = sphi 0, %s303
    %s304 = sphi 0, %s301
    %s305 = sphi 0, %s304
    %s321 = sphi 0, %s305
    %s331 = sphi 0, %s333
    %s334 = sphi 0, %s331
    %s335 = sphi 0, %s334
    %s351 = sphi 0, %s335
    %s361 = sphi 0, %s363
    %s364 = sphi 0, %s361
    %s365 = sphi 0, %s364
    %s381 = sphi 0, %s365
    %s391 = sphi 0, %s393
    %s394 = sphi 0, %s391
    %s395 = sphi 0, %s394
    %s411 = sphi 0, %s395
  $region4: #{quant_attention_block.5} parent=0 // loop_header_branch
    %23 = sbr.rel (%p21) target = $region8
  $region5: #{quant_attention_block.5} parent=0 // loop_body
    %s25 = ssub.s32 %s20, 1
    %s26 = ssub.s32 %s20, 2
    %s36 = sadd.s32 1, %s29
    %p37 = scmp.ge.s32.totalorder %s36, 1
    %s38 = scalar_select %p37, 0, %s36
    %s39 = sadd.s32 1, %s28
    %s40 = scalar_select %p37, %s39, %s28
    %p41 = scmp.ge.s32.totalorder %s40, 4
    %s42 = scalar_select %p41, 0, %s40
    %s43 = sadd.s32 1, %s27
    %s44 = scalar_select %p41, %s43, %s27
    %p45 = scmp.ge.s32.totalorder %s44, 2
    %s46 = scalar_select %p45, 0, %s44
    %s47 = ssub.s32 %s27, %s46
    %s48 = ssub.s32 %s29, %s38
    %s49 = sor.u32 %s47, %s48
    %p50 = scmp.eq.s32.totalorder %s49, 0
    %s52 = sadd.s32 %s51, 1
    %s53 = scalar_select %p50, %s51, %s52
    %p56 = pneg %p50
    %p57 = scmp.eq.s32.totalorder %s20, 7
    %p58 = por %p56, %p57
    %p59 = scmp.ne.s32.totalorder %s51, %s54
    %p60 = scmp.eq.s32.totalorder %s20, 0
    %p61 = por %p59, %p60
    %p62 = scmp.ne.s32.totalorder %s51, %s54
    %p63 = scmp.eq.s32.totalorder %s25, 7
    %p64 = por %p62, %p63
    %p65 = scmp.ne.s32.totalorder %s54, %s55
    %p66 = scmp.eq.s32.totalorder %s25, 0
    %p67 = por %p65, %p66
    %p68 = scmp.ne.s32.totalorder %s54, %s55
    %p69 = scmp.eq.s32.totalorder %s26, 7
    %p70 = por %p68, %p69
    %p72 = scmp.ne.s32.totalorder %s55, %s71
    %p73 = scmp.eq.s32.totalorder %s26, 0
    %p74 = por %p72, %p73
    %s75 = ssub.s32 %s27, %s46
    %p76 = scmp.eq.s32.totalorder %s75, 0
    %s78 = sadd.s32 %s77, 1
    %s79 = scalar_select %p76, %s77, %s78
    %p82 = pneg %p76
    %p83 = scmp.eq.s32.totalorder %s20, 7
    %p84 = por %p82, %p83
    %p85 = scmp.ne.s32.totalorder %s77, %s80
    %p86 = scmp.eq.s32.totalorder %s20, 0
    %p87 = por %p85, %p86
    %p88 = scmp.ne.s32.totalorder %s77, %s80
    %p89 = scmp.eq.s32.totalorder %s25, 7
    %p90 = por %p88, %p89
    %p91 = scmp.ne.s32.totalorder %s80, %s81
    %p92 = scmp.eq.s32.totalorder %s25, 0
    %p93 = por %p91, %p92
    %p94 = scmp.ne.s32.totalorder %s80, %s81
    %p95 = scmp.eq.s32.totalorder %s26, 7
    %p96 = por %p94, %p95
    %p98 = scmp.ne.s32.totalorder %s81, %s97
    %p99 = scmp.eq.s32.totalorder %s26, 0
    %p100 = por %p98, %p99
    %s101 = ssub.s32 %s27, %s46
    %p102 = scmp.eq.s32.totalorder %s101, 0
    %s104 = sadd.s32 %s103, 1
    %s105 = scalar_select %p102, %s103, %s104
    %p108 = pneg %p102
    %p109 = scmp.eq.s32.totalorder %s20, 7
    %p110 = por %p108, %p109
    %p111 = scmp.ne.s32.totalorder %s103, %s106
    %p112 = scmp.eq.s32.totalorder %s20, 0
    %p113 = por %p111, %p112
    %p114 = scmp.ne.s32.totalorder %s103, %s106
    %p115 = scmp.eq.s32.totalorder %s25, 7
    %p116 = por %p114, %p115
    %p117 = scmp.ne.s32.totalorder %s106, %s107
    %p118 = scmp.eq.s32.totalorder %s25, 0
    %p119 = por %p117, %p118
    %p120 = scmp.ne.s32.totalorder %s106, %s107
    %p121 = scmp.eq.s32.totalorder %s26, 7
    %p122 = por %p120, %p121
    %p124 = scmp.ne.s32.totalorder %s107, %s123
    %p125 = scmp.eq.s32.totalorder %s26, 0
    %p126 = por %p124, %p125
    %s128 = sadd.s32 %s127, 1
    %p131 = scmp.eq.s32.totalorder %s20, 7
    %p132 = scmp.ne.s32.totalorder %s127, %s129
    %p133 = scmp.eq.s32.totalorder %s20, 0
    %p134 = por %p132, %p133
    %p135 = scmp.ne.s32.totalorder %s127, %s129
    %p136 = scmp.eq.s32.totalorder %s25, 7
    %p137 = por %p135, %p136
    %p138 = scmp.ne.s32.totalorder %s129, %s130
    %p139 = scmp.eq.s32.totalorder %s25, 0
    %p140 = por %p138, %p139
    %p141 = scmp.ne.s32.totalorder %s129, %s130
    %p142 = scmp.eq.s32.totalorder %s26, 7
    %p143 = por %p141, %p142
    %p145 = scmp.ne.s32.totalorder %s130, %s144
    %p146 = scmp.eq.s32.totalorder %s26, 0
    %p147 = por %p145, %p146
    %s149 = sadd.s32 %s148, 1
    %p152 = scmp.eq.s32.totalorder %s20, 7
    %p153 = scmp.ne.s32.totalorder %s148, %s150
    %p154 = scmp.eq.s32.totalorder %s20, 0
    %p155 = por %p153, %p154
    %p156 = scmp.ne.s32.totalorder %s148, %s150
    %p157 = scmp.eq.s32.totalorder %s25, 7
    %p158 = por %p156, %p157
    %p159 = scmp.ne.s32.totalorder %s150, %s151
    %p160 = scmp.eq.s32.totalorder %s25, 0
    %p161 = por %p159, %p160
    %p162 = scmp.ne.s32.totalorder %s150, %s151
    %p163 = scmp.eq.s32.totalorder %s26, 7
    %p164 = por %p162, %p163
    %p166 = scmp.ne.s32.totalorder %s151, %s165
    %p167 = scmp.eq.s32.totalorder %s26, 0
    %p168 = por %p166, %p167
    %s169 = ssub.s32 %s28, %s42
    %p170 = scmp.eq.s32.totalorder %s169, 0
    %s172 = sadd.s32 %s171, 1
    %s173 = scalar_select %p170, %s171, %s172
    %p176 = pneg %p170
    %p177 = scmp.eq.s32.totalorder %s20, 7
    %p178 = por %p176, %p177
    %p179 = scmp.ne.s32.totalorder %s171, %s174
    %p180 = scmp.eq.s32.totalorder %s20, 0
    %p181 = por %p179, %p180
    %p182 = scmp.ne.s32.totalorder %s171, %s174
    %p183 = scmp.eq.s32.totalorder %s25, 7
    %p184 = por %p182, %p183
    %p185 = scmp.ne.s32.totalorder %s174, %s175
    %p186 = scmp.eq.s32.totalorder %s25, 0
    %p187 = por %p185, %p186
    %p188 = scmp.ne.s32.totalorder %s174, %s175
    %p189 = scmp.eq.s32.totalorder %s26, 7
    %p190 = por %p188, %p189
    %p192 = scmp.ne.s32.totalorder %s175, %s191
    %p193 = scmp.eq.s32.totalorder %s26, 0
    %p194 = por %p192, %p193
    %s195 = ssub.s32 %s28, %s42
    %p196 = scmp.eq.s32.totalorder %s195, 0
    %s198 = sadd.s32 %s197, 1
    %s199 = scalar_select %p196, %s197, %s198
    %p202 = pneg %p196
    %p203 = scmp.eq.s32.totalorder %s20, 7
    %p204 = por %p202, %p203
    %p205 = scmp.ne.s32.totalorder %s197, %s200
    %p206 = scmp.eq.s32.totalorder %s20, 0
    %p207 = por %p205, %p206
    %p208 = scmp.ne.s32.totalorder %s197, %s200
    %p209 = scmp.eq.s32.totalorder %s25, 7
    %p210 = por %p208, %p209
    %p211 = scmp.ne.s32.totalorder %s200, %s201
    %p212 = scmp.eq.s32.totalorder %s25, 0
    %p213 = por %p211, %p212
    %p214 = scmp.ne.s32.totalorder %s200, %s201
    %p215 = scmp.eq.s32.totalorder %s26, 7
    %p216 = por %p214, %p215
    %p218 = scmp.ne.s32.totalorder %s201, %s217
    %p219 = scmp.eq.s32.totalorder %s26, 0
    %p220 = por %p218, %p219
    %s221 = ssub.s32 %s28, %s42
    %p222 = scmp.eq.s32.totalorder %s221, 0
    %s224 = sadd.s32 %s223, 1
    %s225 = scalar_select %p222, %s223, %s224
    %p228 = pneg %p222
    %p229 = scmp.eq.s32.totalorder %s20, 7
    %p230 = por %p228, %p229
    %p231 = scmp.ne.s32.totalorder %s223, %s226
    %p232 = scmp.eq.s32.totalorder %s20, 0
    %p233 = por %p231, %p232
    %p234 = scmp.ne.s32.totalorder %s223, %s226
    %p235 = scmp.eq.s32.totalorder %s25, 7
    %p236 = por %p234, %p235
    %p237 = scmp.ne.s32.totalorder %s226, %s227
    %p238 = scmp.eq.s32.totalorder %s25, 0
    %p239 = por %p237, %p238
    %p240 = scmp.ne.s32.totalorder %s226, %s227
    %p241 = scmp.eq.s32.totalorder %s26, 7
    %p242 = por %p240, %p241
    %p244 = scmp.ne.s32.totalorder %s227, %s243
    %p245 = scmp.eq.s32.totalorder %s26, 0
    %p246 = por %p244, %p245
    %s247 = ssub.s32 %s28, %s42
    %p248 = scmp.eq.s32.totalorder %s247, 0
    %s250 = sadd.s32 %s249, 1
    %s251 = scalar_select %p248, %s249, %s250
    %p254 = pneg %p248
    %p255 = scmp.eq.s32.totalorder %s20, 7
    %p256 = por %p254, %p255
    %p257 = scmp.ne.s32.totalorder %s249, %s252
    %p258 = scmp.eq.s32.totalorder %s20, 0
    %p259 = por %p257, %p258
    %p260 = scmp.ne.s32.totalorder %s249, %s252
    %p261 = scmp.eq.s32.totalorder %s25, 7
    %p262 = por %p260, %p261
    %p263 = scmp.ne.s32.totalorder %s252, %s253
    %p264 = scmp.eq.s32.totalorder %s25, 0
    %p265 = por %p263, %p264
    %p266 = scmp.ne.s32.totalorder %s252, %s253
    %p267 = scmp.eq.s32.totalorder %s26, 7
    %p268 = por %p266, %p267
    %p270 = scmp.ne.s32.totalorder %s253, %s269
    %p271 = scmp.eq.s32.totalorder %s26, 0
    %p272 = por %p270, %p271
    %s273 = ssub.s32 %s28, %s42
    %p274 = scmp.eq.s32.totalorder %s273, 0
    %s276 = sadd.s32 %s275, 1
    %s277 = scalar_select %p274, %s275, %s276
    %p280 = pneg %p274
    %p281 = scmp.eq.s32.totalorder %s20, 7
    %p282 = por %p280, %p281
    %p283 = scmp.ne.s32.totalorder %s275, %s278
    %p284 = scmp.eq.s32.totalorder %s20, 0
    %p285 = por %p283, %p284
    %p286 = scmp.ne.s32.totalorder %s275, %s278
    %p287 = scmp.eq.s32.totalorder %s25, 7
    %p288 = por %p286, %p287
    %p289 = scmp.ne.s32.totalorder %s278, %s279
    %p290 = scmp.eq.s32.totalorder %s25, 0
    %p291 = por %p289, %p290
    %p292 = scmp.ne.s32.totalorder %s278, %s279
    %p293 = scmp.eq.s32.totalorder %s26, 7
    %p294 = por %p292, %p293
    %p296 = scmp.ne.s32.totalorder %s279, %s295
    %p297 = scmp.eq.s32.totalorder %s26, 0
    %p298 = por %p296, %p297
    %s299 = ssub.s32 %s28, %s42
    %p300 = scmp.eq.s32.totalorder %s299, 0
    %s302 = sadd.s32 %s301, 1
    %s303 = scalar_select %p300, %s301, %s302
    %p306 = pneg %p300
    %p307 = scmp.eq.s32.totalorder %s20, 7
    %p308 = por %p306, %p307
    %p309 = scmp.ne.s32.totalorder %s301, %s304
    %p310 = scmp.eq.s32.totalorder %s20, 0
    %p311 = por %p309, %p310
    %p312 = scmp.ne.s32.totalorder %s301, %s304
    %p313 = scmp.eq.s32.totalorder %s25, 7
    %p314 = por %p312, %p313
    %p315 = scmp.ne.s32.totalorder %s304, %s305
    %p316 = scmp.eq.s32.totalorder %s25, 0
    %p317 = por %p315, %p316
    %p318 = scmp.ne.s32.totalorder %s304, %s305
    %p319 = scmp.eq.s32.totalorder %s26, 7
    %p320 = por %p318, %p319
    %p322 = scmp.ne.s32.totalorder %s305, %s321
    %p323 = scmp.eq.s32.totalorder %s26, 0
    %p324 = por %p322, %p323
    %s325 = ssub.s32 %s27, %s46
    %s326 = ssub.s32 %s28, %s42
    %s327 = sor.u32 %s325, %s326
    %s328 = ssub.s32 %s29, %s38
    %s329 = sor.u32 %s327, %s328
    %p330 = scmp.eq.s32.totalorder %s329, 0
    %s332 = sadd.s32 %s331, 1
    %s333 = scalar_select %p330, %s331, %s332
    %p336 = pneg %p330
    %p337 = scmp.eq.s32.totalorder %s20, 7
    %p338 = por %p336, %p337
    %p339 = scmp.ne.s32.totalorder %s331, %s334
    %p340 = scmp.eq.s32.totalorder %s20, 0
    %p341 = por %p339, %p340
    %p342 = scmp.ne.s32.totalorder %s331, %s334
    %p343 = scmp.eq.s32.totalorder %s25, 7
    %p344 = por %p342, %p343
    %p345 = scmp.ne.s32.totalorder %s334, %s335
    %p346 = scmp.eq.s32.totalorder %s25, 0
    %p347 = por %p345, %p346
    %p348 = scmp.ne.s32.totalorder %s334, %s335
    %p349 = scmp.eq.s32.totalorder %s26, 7
    %p350 = por %p348, %p349
    %p352 = scmp.ne.s32.totalorder %s335, %s351
    %p353 = scmp.eq.s32.totalorder %s26, 0
    %p354 = por %p352, %p353
    %s355 = ssub.s32 %s27, %s46
    %s356 = ssub.s32 %s28, %s42
    %s357 = sor.u32 %s355, %s356
    %s358 = ssub.s32 %s29, %s38
    %s359 = sor.u32 %s357, %s358
    %p360 = scmp.eq.s32.totalorder %s359, 0
    %s362 = sadd.s32 %s361, 1
    %s363 = scalar_select %p360, %s361, %s362
    %p366 = pneg %p360
    %p367 = scmp.eq.s32.totalorder %s20, 7
    %p368 = por %p366, %p367
    %p369 = scmp.ne.s32.totalorder %s361, %s364
    %p370 = scmp.eq.s32.totalorder %s20, 0
    %p371 = por %p369, %p370
    %p372 = scmp.ne.s32.totalorder %s361, %s364
    %p373 = scmp.eq.s32.totalorder %s25, 7
    %p374 = por %p372, %p373
    %p375 = scmp.ne.s32.totalorder %s364, %s365
    %p376 = scmp.eq.s32.totalorder %s25, 0
    %p377 = por %p375, %p376
    %p378 = scmp.ne.s32.totalorder %s364, %s365
    %p379 = scmp.eq.s32.totalorder %s26, 7
    %p380 = por %p378, %p379
    %p382 = scmp.ne.s32.totalorder %s365, %s381
    %p383 = scmp.eq.s32.totalorder %s26, 0
    %p384 = por %p382, %p383
    %s385 = ssub.s32 %s27, %s46
    %s386 = ssub.s32 %s28, %s42
    %s387 = sor.u32 %s385, %s386
    %s388 = ssub.s32 %s29, %s38
    %s389 = sor.u32 %s387, %s388
    %p390 = scmp.eq.s32.totalorder %s389, 0
    %s392 = sadd.s32 %s391, 1
    %s393 = scalar_select %p390, %s391, %s392
    %p396 = pneg %p390
    %p397 = scmp.eq.s32.totalorder %s20, 7
    %p398 = por %p396, %p397
    %p399 = scmp.ne.s32.totalorder %s391, %s394
    %p400 = scmp.eq.s32.totalorder %s20, 0
    %p401 = por %p399, %p400
    %p402 = scmp.ne.s32.totalorder %s391, %s394
    %p403 = scmp.eq.s32.totalorder %s25, 7
    %p404 = por %p402, %p403
    %p405 = scmp.ne.s32.totalorder %s394, %s395
    %p406 = scmp.eq.s32.totalorder %s25, 0
    %p407 = por %p405, %p406
    %p408 = scmp.ne.s32.totalorder %s394, %s395
    %p409 = scmp.eq.s32.totalorder %s26, 7
    %p410 = por %p408, %p409
    %p412 = scmp.ne.s32.totalorder %s395, %s411
    %p413 = scmp.eq.s32.totalorder %s26, 0
    %p414 = por %p412, %p413
    %p415 = scmp.le.s32.totalorder 1, %s20
    %p416 = scmp.lt.s32.totalorder %s20, 9
    %p417 = pnand %p415, %p416
    %p418 = pneg %p417
    // Predicated region
    $region9: #{quant_attention_block.5} parent=5 // pred_check
      _
    $region10: #{quant_attention_block.5} parent=5 // pred_check_branch
      %420 = sbr.rel (%p417) target = $region12
    $region11: #{quant_attention_block.5} parent=5 // pred_region
      %s421 = ssub.s32 %s20, 1
      // Predicated region
      $region13: #{quant_attention_block.5} parent=11 // pred_check
        %p422 = pneg %p140
      $region14: #{quant_attention_block.5} parent=11 // pred_check_branch
        %424 = sbr.rel (%p422) target = $region16
      $region15: #{quant_attention_block.5} parent=11 // pred_region
        _
      $region16: #{quant_attention_block.5} parent=11 // pred_fallthru
        _
      // Predicated region
      $region17: #{quant_attention_block.5} parent=11 // pred_check
        %p425 = pneg %p161
      $region18: #{quant_attention_block.5} parent=11 // pred_check_branch
        %427 = sbr.rel (%p425) target = $region20
      $region19: #{quant_attention_block.5} parent=11 // pred_region
        _
      $region20: #{quant_attention_block.5} parent=11 // pred_fallthru
        _
    $region12: #{quant_attention_block.5} parent=5 // pred_fallthru
      _
    %p428 = scmp.lt.s32.totalorder %s20, 8
    // Predicated region
    $region21: #{quant_attention_block.5} parent=5 // pred_check
      %p429 = pneg %p428
    $region22: #{quant_attention_block.5} parent=5 // pred_check_branch
      %431 = sbr.rel (%p429) target = $region24
    $region23: #{quant_attention_block.5} parent=5 // pred_region
      // Predicated region
      $region25: #{quant_attention_block.5} parent=23 // pred_check
        %p432 = pneg %p61
      $region26: #{quant_attention_block.5} parent=23 // pred_check_branch
        %434 = sbr.rel (%p432) target = $region28
      $region27: #{quant_attention_block.5} parent=23 // pred_region
        %s435 = smul.u32 8, %s29
        %p436 = scmp.lt.s32.totalorder %s27, 1
        %s437 = scalar_select %p436, %s27, 1
        %p438 = scmp.lt.s32.totalorder %s435, 7
        %s439 = scalar_select %p438, %s435, 7
        %s440 = smul.addr %s437, 8
        %s441 = sadd.s32 %s439, %s440
        %s442 = smul.addr %s441, 8
        %s443 = scalar_lea.vmem %s0, %s442
        %s444 = smul.u32 8, %s29
      $region28: #{quant_attention_block.5} parent=23 // pred_fallthru
        _
      // Predicated region
      $region29: #{quant_attention_block.5} parent=23 // pred_check
        %p445 = pneg %p87
      $region30: #{quant_attention_block.5} parent=23 // pred_check_branch
        %447 = sbr.rel (%p445) target = $region32
      $region31: #{quant_attention_block.5} parent=23 // pred_region
        %p448 = scmp.lt.s32.totalorder %s27, 1
        %s449 = scalar_select %p448, %s27, 1
        %s450 = scalar_lea.vmem %s1, %s449
      $region32: #{quant_attention_block.5} parent=23 // pred_fallthru
        _
      // Predicated region
      $region33: #{quant_attention_block.5} parent=23 // pred_check
        %p451 = pneg %p113
      $region34: #{quant_attention_block.5} parent=23 // pred_check_branch
        %453 = sbr.rel (%p451) target = $region36
      $region35: #{quant_attention_block.5} parent=23 // pred_region
        %p454 = scmp.lt.s32.totalorder %s27, 1
        %s455 = scalar_select %p454, %s27, 1
        %s456 = scalar_lea.vmem %s2, %s455
      $region36: #{quant_attention_block.5} parent=23 // pred_fallthru
        _
      // Predicated region
      $region37: #{quant_attention_block.5} parent=23 // pred_check
        %p457 = pneg %p181
      $region38: #{quant_attention_block.5} parent=23 // pred_check_branch
        %459 = sbr.rel (%p457) target = $region40
      $region39: #{quant_attention_block.5} parent=23 // pred_region
        %p460 = scmp.lt.s32.totalorder %s28, 3
        %s461 = scalar_select %p460, %s28, 3
        %s462 = smul.addr %s461, 4
        %s463 = smul.addr %s462, 4
        %s464 = scalar_lea.vmem %s5, %s463
      $region40: #{quant_attention_block.5} parent=23 // pred_fallthru
        _
      // Predicated region
      $region41: #{quant_attention_block.5} parent=23 // pred_check
        %p465 = pneg %p207
      $region42: #{quant_attention_block.5} parent=23 // pred_check_branch
        %467 = sbr.rel (%p465) target = $region44
      $region43: #{quant_attention_block.5} parent=23 // pred_region
        %p468 = scmp.lt.s32.totalorder %s28, 3
        %s469 = scalar_select %p468, %s28, 3
        %s470 = smul.addr %s469, 4
        %s471 = smul.addr %s470, 4
        %s472 = scalar_lea.vmem %s6, %s471
      $region44: #{quant_attention_block.5} parent=23 // pred_fallthru
        _
      // Predicated region
      $region45: #{quant_attention_block.5} parent=23 // pred_check
        %p473 = pneg %p233
      $region46: #{quant_attention_block.5} parent=23 // pred_check_branch
        %475 = sbr.rel (%p473) target = $region48
      $region47: #{quant_attention_block.5} parent=23 // pred_region
        %p476 = scmp.lt.s32.totalorder %s28, 3
        %s477 = scalar_select %p476, %s28, 3
        %s478 = smul.addr %s477, 4
        %s479 = smul.addr %s478, 4
        %s480 = scalar_lea.vmem %s7, %s479
      $region48: #{quant_attention_block.5} parent=23 // pred_fallthru
        _
      // Predicated region
      $region49: #{quant_attention_block.5} parent=23 // pred_check
        %p481 = pneg %p259
      $region50: #{quant_attention_block.5} parent=23 // pred_check_branch
        %483 = sbr.rel (%p481) target = $region52
      $region51: #{quant_attention_block.5} parent=23 // pred_region
        %p484 = scmp.lt.s32.totalorder %s28, 3
        %s485 = scalar_select %p484, %s28, 3
        %s486 = scalar_lea.vmem %s8, %s485
      $region52: #{quant_attention_block.5} parent=23 // pred_fallthru
        _
      // Predicated region
      $region53: #{quant_attention_block.5} parent=23 // pred_check
        %p487 = pneg %p285
      $region54: #{quant_attention_block.5} parent=23 // pred_check_branch
        %489 = sbr.rel (%p487) target = $region56
      $region55: #{quant_attention_block.5} parent=23 // pred_region
        %p490 = scmp.lt.s32.totalorder %s28, 3
        %s491 = scalar_select %p490, %s28, 3
        %s492 = scalar_lea.vmem %s9, %s491
      $region56: #{quant_attention_block.5} parent=23 // pred_fallthru
        _
      // Predicated region
      $region57: #{quant_attention_block.5} parent=23 // pred_check
        %p493 = pneg %p311
      $region58: #{quant_attention_block.5} parent=23 // pred_check_branch
        %495 = sbr.rel (%p493) target = $region60
      $region59: #{quant_attention_block.5} parent=23 // pred_region
        %p496 = scmp.lt.s32.totalorder %s28, 3
        %s497 = scalar_select %p496, %s28, 3
        %s498 = scalar_lea.vmem %s10, %s497
      $region60: #{quant_attention_block.5} parent=23 // pred_fallthru
        _
    $region24: #{quant_attention_block.5} parent=5 // pred_fallthru
      _
    %p499 = scmp.le.s32.totalorder 1, %s20
    %p500 = scmp.lt.s32.totalorder %s20, 9
    %p501 = pnand %p499, %p500
    %p502 = pneg %p501
    // Predicated region
    $region61: #{quant_attention_block.5} parent=5 // pred_check
      _
    $region62: #{quant_attention_block.5} parent=5 // pred_check_branch
      %504 = sbr.rel (%p501) target = $region64
    $region63: #{quant_attention_block.5} parent=5 // pred_region
      %s505 = ssub.s32 %s20, 1
      %s506 = smul.u32 8, %s32
      %p507 = scmp.lt.s32.totalorder %s30, 1
      %s508 = scalar_select %p507, %s30, 1
      %p509 = scmp.lt.s32.totalorder %s506, 7
      %s510 = scalar_select %p509, %s506, 7
      %s511 = smul.addr %s508, 8
      %s512 = sadd.s32 %s510, %s511
      %s513 = smul.addr %s512, 8
      %s514 = scalar_lea.vmem %s0, %s513
      %p515 = pneg %p67
      %p516 = pneg %p64
      %p517 = scmp.lt.s32.totalorder %s30, 1
      %s518 = scalar_select %p517, %s30, 1
      %s519 = scalar_lea.vmem %s1, %s518
      %p520 = pneg %p93
      %p521 = pneg %p90
      %p522 = scmp.lt.s32.totalorder %s30, 1
      %s523 = scalar_select %p522, %s30, 1
      %s524 = scalar_lea.vmem %s2, %s523
      %p525 = pneg %p119
      %p526 = pneg %p116
      %p527 = pneg %p140
      %p528 = pneg %p137
      %p529 = pneg %p161
      %p530 = pneg %p158
      %p531 = scmp.lt.s32.totalorder %s31, 3
      %s532 = scalar_select %p531, %s31, 3
      %s533 = smul.addr %s532, 4
      %s534 = smul.addr %s533, 4
      %s535 = scalar_lea.vmem %s5, %s534
      %p536 = pneg %p187
      %p537 = pneg %p184
      %p538 = scmp.lt.s32.totalorder %s31, 3
      %s539 = scalar_select %p538, %s31, 3
      %s540 = smul.addr %s539, 4
      %s541 = smul.addr %s540, 4
      %s542 = scalar_lea.vmem %s6, %s541
      %p543 = pneg %p213
      %p544 = pneg %p210
      %p545 = scmp.lt.s32.totalorder %s31, 3
      %s546 = scalar_select %p545, %s31, 3
      %s547 = smul.addr %s546, 4
      %s548 = smul.addr %s547, 4
      %s549 = scalar_lea.vmem %s7, %s548
      %p550 = pneg %p239
      %p551 = pneg %p236
      %p552 = scmp.lt.s32.totalorder %s31, 3
      %s553 = scalar_select %p552, %s31, 3
      %s554 = scalar_lea.vmem %s8, %s553
      %p555 = pneg %p265
      %p556 = pneg %p262
      %p557 = scmp.lt.s32.totalorder %s31, 3
      %s558 = scalar_select %p557, %s31, 3
      %s559 = scalar_lea.vmem %s9, %s558
      %p560 = pneg %p291
      %p561 = pneg %p288
      %p562 = scmp.lt.s32.totalorder %s31, 3
      %s563 = scalar_select %p562, %s31, 3
      %s564 = scalar_lea.vmem %s10, %s563
      %p565 = pneg %p317
      %p566 = pneg %p314
      %p567 = pneg %p347
      %p568 = pneg %p344
      %s569 = smul.u32 8, %s32
      %p570 = scmp.lt.s32.totalorder %s30, 1
      %s571 = scalar_select %p570, %s30, 1
      %p572 = scmp.lt.s32.totalorder %s31, 3
      %s573 = scalar_select %p572, %s31, 3
      %p574 = scmp.lt.s32.totalorder %s569, 7
      %s575 = scalar_select %p574, %s569, 7
      %s576 = smul.addr %s573, 8
      %s577 = sadd.s32 %s575, %s576
      %s578 = smul.addr %s571, 32
      %s579 = sadd.s32 %s577, %s578
      %s580 = smul.addr %s579, 4
      %s581 = scalar_lea.vmem %s11, %s580
      %p582 = pneg %p377
      %p583 = pneg %p374
      %s584 = smul.u32 8, %s32
      %p585 = scmp.lt.s32.totalorder %s30, 1
      %s586 = scalar_select %p585, %s30, 1
      %p587 = scmp.lt.s32.totalorder %s31, 3
      %s588 = scalar_select %p587, %s31, 3
      %p589 = scmp.lt.s32.totalorder %s584, 7
      %s590 = scalar_select %p589, %s584, 7
      %s591 = smul.addr %s588, 8
      %s592 = sadd.s32 %s590, %s591
      %s593 = smul.addr %s586, 32
      %s594 = sadd.s32 %s592, %s593
      %s595 = smul.addr %s594, 4
      %s596 = scalar_lea.vmem %s12, %s595
      %p597 = pneg %p407
      %p598 = pneg %p404
      %s599 = smul.u32 8, %s32
      %p600 = scmp.lt.s32.totalorder %s30, 1
      %s601 = scalar_select %p600, %s30, 1
      %p602 = scmp.lt.s32.totalorder %s31, 3
      %s603 = scalar_select %p602, %s31, 3
      %p604 = scmp.lt.s32.totalorder %s599, 7
      %s605 = scalar_select %p604, %s599, 7
      %s606 = smul.addr %s603, 8
      %s607 = sadd.s32 %s605, %s606
      %s608 = smul.addr %s601, 32
      %s609 = sadd.s32 %s607, %s608
      %s610 = smul.addr %s609, 4
      %s611 = scalar_lea.vmem %s13, %s610
      %s612 = smul.u32 8, %s32
      %p613 = scmp.lt.s32.totalorder %s30, 1
      %s614 = scalar_select %p613, %s30, 1
      %p615 = scmp.lt.s32.totalorder %s612, 7
      %s616 = scalar_select %p615, %s612, 7
      %s617 = smul.addr %s614, 8
      %s618 = sadd.s32 %s616, %s617
      %s619 = smul.addr %s618, 8
      %s620 = scalar_lea.vmem %s0, %s619
      %s621 = smul.u32 8, %s32
      %p622 = scmp.lt.s32.totalorder %s30, 1
      %s623 = scalar_select %p622, %s30, 1
      %s624 = scalar_lea.vmem %s1, %s623
      %p625 = scmp.lt.s32.totalorder %s30, 1
      %s626 = scalar_select %p625, %s30, 1
      %s627 = scalar_lea.vmem %s2, %s626
      %p628 = scmp.lt.s32.totalorder %s31, 3
      %s629 = scalar_select %p628, %s31, 3
      %s630 = smul.addr %s629, 4
      %s631 = smul.addr %s630, 4
      %s632 = scalar_lea.vmem %s5, %s631
      %p633 = scmp.lt.s32.totalorder %s31, 3
      %s634 = scalar_select %p633, %s31, 3
      %s635 = smul.addr %s634, 4
      %s636 = smul.addr %s635, 4
      %s637 = scalar_lea.vmem %s6, %s636
      %p638 = scmp.lt.s32.totalorder %s31, 3
      %s639 = scalar_select %p638, %s31, 3
      %s640 = smul.addr %s639, 4
      %s641 = smul.addr %s640, 4
      %s642 = scalar_lea.vmem %s7, %s641
      %p643 = scmp.lt.s32.totalorder %s31, 3
      %s644 = scalar_select %p643, %s31, 3
      %s645 = scalar_lea.vmem %s8, %s644
      %p646 = scmp.lt.s32.totalorder %s31, 3
      %s647 = scalar_select %p646, %s31, 3
      %s648 = scalar_lea.vmem %s9, %s647
      %p649 = scmp.lt.s32.totalorder %s31, 3
      %s650 = scalar_select %p649, %s31, 3
      %s651 = scalar_lea.vmem %s10, %s650
      %s652 = smul.u32 8, %s32
      %p653 = scmp.lt.s32.totalorder %s30, 1
      %s654 = scalar_select %p653, %s30, 1
      %p655 = scmp.lt.s32.totalorder %s31, 3
      %s656 = scalar_select %p655, %s31, 3
      %p657 = scmp.lt.s32.totalorder %s652, 7
      %s658 = scalar_select %p657, %s652, 7
      %s659 = smul.addr %s656, 8
      %s660 = sadd.s32 %s658, %s659
      %s661 = smul.addr %s654, 32
      %s662 = sadd.s32 %s660, %s661
      %s663 = smul.addr %s662, 4
      %s664 = scalar_lea.vmem %s11, %s663
      %s665 = smul.u32 8, %s32
      %s666 = smul.u32 8, %s32
      %p667 = scmp.lt.s32.totalorder %s30, 1
      %s668 = scalar_select %p667, %s30, 1
      %p669 = scmp.lt.s32.totalorder %s31, 3
      %s670 = scalar_select %p669, %s31, 3
      %p671 = scmp.lt.s32.totalorder %s666, 7
      %s672 = scalar_select %p671, %s666, 7
      %s673 = smul.addr %s670, 8
      %s674 = sadd.s32 %s672, %s673
      %s675 = smul.addr %s668, 32
      %s676 = sadd.s32 %s674, %s675
      %s677 = smul.addr %s676, 4
      %s678 = scalar_lea.vmem %s12, %s677
      %s679 = smul.u32 8, %s32
      %s680 = smul.u32 8, %s32
      %p681 = scmp.lt.s32.totalorder %s30, 1
      %s682 = scalar_select %p681, %s30, 1
      %p683 = scmp.lt.s32.totalorder %s31, 3
      %s684 = scalar_select %p683, %s31, 3
      %p685 = scmp.lt.s32.totalorder %s680, 7
      %s686 = scalar_select %p685, %s680, 7
      %s687 = smul.addr %s684, 8
      %s688 = sadd.s32 %s686, %s687
      %s689 = smul.addr %s682, 32
      %s690 = sadd.s32 %s688, %s689
      %s691 = smul.addr %s690, 4
      %s692 = scalar_lea.vmem %s13, %s691
      %s693 = smul.u32 8, %s32
      %v695 = vld [vmem:[%s620] sm:$0xff]
      %v696 = vld [vmem:[%s620 + $0x8] sm:$0xff]
      %v697 = vld [vmem:[%s620 + $0x10] sm:$0xff]
      %v698 = vld [vmem:[%s620 + $0x18] sm:$0xff]
      %v699 = vld [vmem:[%s620 + $0x20] sm:$0xff]
      %v700 = vld [vmem:[%s620 + $0x28] sm:$0xff]
      %v701 = vld [vmem:[%s620 + $0x30] sm:$0xff]
      %v702 = vld [vmem:[%s620 + $0x38] sm:$0xff]
      %v703 = vld [vmem:[%s624] sm:$0x1]
      %v705 = vlaneseq
      %v706 = vshrl.u32 %v705, 7
      %v707 = vsub.s32 0, %v706
      %v708 = vrot.slane %v703, %v707
      %v710 = vsub.f32 %v695, %v708
      %v711 = vsub.f32 %v696, %v708
      %v712 = vsub.f32 %v697, %v708
      %v713 = vsub.f32 %v698, %v708
      %v714 = vsub.f32 %v699, %v708
      %v715 = vsub.f32 %v700, %v708
      %v716 = vsub.f32 %v701, %v708
      %v717 = vsub.f32 %v702, %v708
      %v718 = vld [vmem:[%s627] sm:$0x1]
      %v720 = vlaneseq
      %v721 = vshrl.u32 %v720, 7
      %v722 = vsub.s32 0, %v721
      %v723 = vrot.slane %v718, %v722
      %v725 = vmul.f32 %v710, %v723
      %v726 = vmul.f32 %v711, %v723
      %v727 = vmul.f32 %v712, %v723
      %v728 = vmul.f32 %v713, %v723
      %v729 = vmul.f32 %v714, %v723
      %v730 = vmul.f32 %v715, %v723
      %v731 = vmul.f32 %v716, %v723
      %v732 = vmul.f32 %v717, %v723
      %v733 = vld [vmem:[%s3] sm:$0x1]
      %v735 = vlaneseq
      %v736 = vshrl.u32 %v735, 7
      %v737 = vsub.s32 0, %v736
      %v738 = vrot.slane %v733, %v737
      %v740 = vmul.f32 %v725, %v738
      %v741 = vmul.f32 %v726, %v738
      %v742 = vmul.f32 %v727, %v738
      %v743 = vmul.f32 %v728, %v738
      %v744 = vmul.f32 %v729, %v738
      %v745 = vmul.f32 %v730, %v738
      %v746 = vmul.f32 %v731, %v738
      %v747 = vmul.f32 %v732, %v738
      %v748 = vld [vmem:[%s4] sm:$0x1]
      %v750 = vlaneseq
      %v751 = vshrl.u32 %v750, 7
      %v752 = vsub.s32 0, %v751
      %v753 = vrot.slane %v748, %v752
      %v755 = vadd.f32 %v740, %v753
      %v756 = vadd.f32 %v741, %v753
      %v757 = vadd.f32 %v742, %v753
      %v758 = vadd.f32 %v743, %v753
      %v759 = vadd.f32 %v744, %v753
      %v760 = vadd.f32 %v745, %v753
      %v761 = vadd.f32 %v746, %v753
      %v762 = vadd.f32 %v747, %v753
      %v763 = vpack.c.bf16 %v756, %v755
      %v764 = vpack.c.bf16 %v758, %v757
      %v765 = vpack.c.bf16 %v760, %v759
      %v766 = vpack.c.bf16 %v762, %v761
      %v767 = vld [vmem:[%s632] sm:$0xf]
      %v768 = vld [vmem:[%s632 + $0x4] sm:$0xf]
      %v769 = vld [vmem:[%s632 + $0x8] sm:$0xf]
      %v770 = vld [vmem:[%s632 + $0xc] sm:$0xf]
      %v771 = vld [vmem:[%s645] sm:$0x1]
      %v773 = vlaneseq
      %v774 = vshrl.u32 %v773, 7
      %v775 = vsub.s32 0, %v774
      %v776 = vrot.slane %v771, %v775
      %v782 = vunpack.c.l.b16 %v767
      %v783 = vunpack.c.l.b16 %v768
      %v784 = vunpack.c.l.b16 %v769
      %v785 = vunpack.c.l.b16 %v770
      %v786 = vpack.c.b16 %v783, %v782
      %v787 = vpack.c.b16 %v785, %v784
      %vm790 = vcmask 261120
      %v792 = vsel %vm790, %v763, 0
      %v795 = vsel %vm790, %v764, 0
      %v798 = vsel %vm790, %v765, 0
      %v801 = vsel %vm790, %v766, 0
      %803 = vmatprep.subr.bf16.mxu0 0
      %804 = vmatpush1.bf16.msra.mxu0 0
      %805 = vmatprep.subr.bf16.mxu0 0
      %806 = vmatpush1.bf16.msra.mxu0 0
      %807 = vmatprep.subr.bf16.mxu0 0
      %808 = vmatpush1.bf16.msra.mxu0 0
      %809 = vmatprep.subr.bf16.mxu0 0
      %810 = vmatpush1.bf16.msra.mxu0 0
      %811 = vmatprep.subr.bf16.mxu0 0
      %812 = vmatpush1.bf16.msra.mxu0 0
      %813 = vmatprep.subr.bf16.mxu0 0
      %814 = vmatpush1.bf16.msra.mxu0 0
      %815 = vmatprep.subr.bf16.mxu0 0
      %816 = vmatpush1.bf16.msra.mxu0 %v787
      %817 = vmatprep.subr.bf16.mxu0 0
      %818 = vmatpush1.bf16.msra.mxu0 %v786
      %819 = vmatprep.subr.bf16.mxu0 0
      %820 = vmatpush2.bf16.msra.mxu0 0
      %821 = vmatprep.subr.bf16.mxu0 0
      %822 = vmatpush2.bf16.msra.mxu0 0
      %823 = vmatprep.subr.bf16.mxu0 0
      %824 = vmatpush2.bf16.msra.mxu0 0
      %825 = vmatprep.subr.bf16.mxu0 0
      %826 = vmatpush2.bf16.msra.mxu0 0
      %827 = vmatprep.subr.bf16.mxu0 0
      %828 = vmatpush2.bf16.msra.mxu0 0
      %829 = vmatprep.subr.bf16.mxu0 0
      %830 = vmatpush2.bf16.msra.mxu0 0
      %831 = vmatprep.subr.bf16.mxu0 0
      %832 = vmatpush2.bf16.msra.mxu0 0
      %833 = vmatprep.subr.bf16.mxu0 0
      %834 = vmatpush2.bf16.msra.mxu0 0
      %835 = vmatprep.mubr.bf16.mxu0 0
      %836 = vmatmul.mubr.bf16.gmra.mxu0 %v792
      %v837 = vpop.f32.mrf.mxu0
      %v838 = vadd.f32 %v776, %v837
      %v839 = vpop.f32.mrf.mxu0
      %v840 = vpop.f32.mrf.mxu0
      %v841 = vadd.f32 %v776, %v840
      %v842 = vpop.f32.mrf.mxu0
      %843 = vmatprep.mubr.bf16.mxu0 0
      %844 = vmatmul.mubr.bf16.gmra.mxu0 %v795
      %v845 = vpop.f32.mrf.mxu0
      %v846 = vadd.f32 %v776, %v845
      %v847 = vpop.f32.mrf.mxu0
      %v848 = vpop.f32.mrf.mxu0
      %v849 = vadd.f32 %v776, %v848
      %v850 = vpop.f32.mrf.mxu0
      %851 = vmatprep.mubr.bf16.mxu0 0
      %852 = vmatmul.mubr.bf16.gmra.mxu0 %v798
      %v853 = vpop.f32.mrf.mxu0
      %v854 = vadd.f32 %v776, %v853
      %v855 = vpop.f32.mrf.mxu0
      %v856 = vpop.f32.mrf.mxu0
      %v857 = vadd.f32 %v776, %v856
      %v858 = vpop.f32.mrf.mxu0
      %859 = vmatprep.mubr.bf16.mxu0 0
      %860 = vmatmul.mubr.bf16.gmra.mxu0 %v801
      %v861 = vpop.f32.mrf.mxu0
      %v862 = vadd.f32 %v776, %v861
      %v863 = vpop.f32.mrf.mxu0
      %v864 = vpop.f32.mrf.mxu0
      %v865 = vadd.f32 %v776, %v864
      %v866 = vpop.f32.mrf.mxu0
      %867 = vdwg.mxu0
      %v868 = vld [vmem:[%s637] sm:$0xf]
      %v869 = vld [vmem:[%s637 + $0x4] sm:$0xf]
      %v870 = vld [vmem:[%s637 + $0x8] sm:$0xf]
      %v871 = vld [vmem:[%s637 + $0xc] sm:$0xf]
      %v872 = vld [vmem:[%s648] sm:$0x1]
      %v874 = vlaneseq
      %v875 = vshrl.u32 %v874, 7
      %v876 = vsub.s32 0, %v875
      %v877 = vrot.slane %v872, %v876
      %v883 = vunpack.c.l.b16 %v868
      %v884 = vunpack.c.l.b16 %v869
      %v885 = vunpack.c.l.b16 %v870
      %v886 = vunpack.c.l.b16 %v871
      %v887 = vpack.c.b16 %v884, %v883
      %v888 = vpack.c.b16 %v886, %v885
      %891 = vmatprep.subr.bf16.mxu0 0
      %892 = vmatpush1.bf16.msra.mxu0 0
      %893 = vmatprep.subr.bf16.mxu0 0
      %894 = vmatpush1.bf16.msra.mxu0 0
      %895 = vmatprep.subr.bf16.mxu0 0
      %896 = vmatpush1.bf16.msra.mxu0 0
      %897 = vmatprep.subr.bf16.mxu0 0
      %898 = vmatpush1.bf16.msra.mxu0 0
      %899 = vmatprep.subr.bf16.mxu0 0
      %900 = vmatpush1.bf16.msra.mxu0 0
      %901 = vmatprep.subr.bf16.mxu0 0
      %902 = vmatpush1.bf16.msra.mxu0 0
      %903 = vmatprep.subr.bf16.mxu0 0
      %904 = vmatpush1.bf16.msra.mxu0 %v888
      %905 = vmatprep.subr.bf16.mxu0 0
      %906 = vmatpush1.bf16.msra.mxu0 %v887
      %907 = vmatprep.subr.bf16.mxu0 0
      %908 = vmatpush2.bf16.msra.mxu0 0
      %909 = vmatprep.subr.bf16.mxu0 0
      %910 = vmatpush2.bf16.msra.mxu0 0
      %911 = vmatprep.subr.bf16.mxu0 0
      %912 = vmatpush2.bf16.msra.mxu0 0
      %913 = vmatprep.subr.bf16.mxu0 0
      %914 = vmatpush2.bf16.msra.mxu0 0
      %915 = vmatprep.subr.bf16.mxu0 0
      %916 = vmatpush2.bf16.msra.mxu0 0
      %917 = vmatprep.subr.bf16.mxu0 0
      %918 = vmatpush2.bf16.msra.mxu0 0
      %919 = vmatprep.subr.bf16.mxu0 0
      %920 = vmatpush2.bf16.msra.mxu0 0
      %921 = vmatprep.subr.bf16.mxu0 0
      %922 = vmatpush2.bf16.msra.mxu0 0
      %923 = vmatprep.mubr.bf16.mxu0 0
      %924 = vmatmul.mubr.bf16.gmra.mxu0 %v792
      %v925 = vpop.f32.mrf.mxu0
      %v926 = vadd.f32 %v877, %v925
      %v927 = vpop.f32.mrf.mxu0
      %v928 = vpop.f32.mrf.mxu0
      %v929 = vadd.f32 %v877, %v928
      %v930 = vpop.f32.mrf.mxu0
      %931 = vmatprep.mubr.bf16.mxu0 0
      %932 = vmatmul.mubr.bf16.gmra.mxu0 %v795
      %v933 = vpop.f32.mrf.mxu0
      %v934 = vadd.f32 %v877, %v933
      %v935 = vpop.f32.mrf.mxu0
      %v936 = vpop.f32.mrf.mxu0
      %v937 = vadd.f32 %v877, %v936
      %v938 = vpop.f32.mrf.mxu0
      %939 = vmatprep.mubr.bf16.mxu0 0
      %940 = vmatmul.mubr.bf16.gmra.mxu0 %v798
      %v941 = vpop.f32.mrf.mxu0
      %v942 = vadd.f32 %v877, %v941
      %v943 = vpop.f32.mrf.mxu0
      %v944 = vpop.f32.mrf.mxu0
      %v945 = vadd.f32 %v877, %v944
      %v946 = vpop.f32.mrf.mxu0
      %947 = vmatprep.mubr.bf16.mxu0 0
      %948 = vmatmul.mubr.bf16.gmra.mxu0 %v801
      %v949 = vpop.f32.mrf.mxu0
      %v950 = vadd.f32 %v877, %v949
      %v951 = vpop.f32.mrf.mxu0
      %v952 = vpop.f32.mrf.mxu0
      %v953 = vadd.f32 %v877, %v952
      %v954 = vpop.f32.mrf.mxu0
      %955 = vdwg.mxu0
      %v956 = vld [vmem:[%s642] sm:$0xf]
      %v957 = vld [vmem:[%s642 + $0x4] sm:$0xf]
      %v958 = vld [vmem:[%s642 + $0x8] sm:$0xf]
      %v959 = vld [vmem:[%s642 + $0xc] sm:$0xf]
      %v960 = vld [vmem:[%s651] sm:$0x1]
      %v962 = vlaneseq
      %v963 = vshrl.u32 %v962, 7
      %v964 = vsub.s32 0, %v963
      %v965 = vrot.slane %v960, %v964
      %v971 = vunpack.c.l.b16 %v956
      %v972 = vunpack.c.l.b16 %v957
      %v973 = vunpack.c.l.b16 %v958
      %v974 = vunpack.c.l.b16 %v959
      %v975 = vpack.c.b16 %v972, %v971
      %v976 = vpack.c.b16 %v974, %v973
      %979 = vmatprep.subr.bf16.mxu0 0
      %980 = vmatpush1.bf16.msra.mxu0 0
      %981 = vmatprep.subr.bf16.mxu0 0
      %982 = vmatpush1.bf16.msra.mxu0 0
      %983 = vmatprep.subr.bf16.mxu0 0
      %984 = vmatpush1.bf16.msra.mxu0 0
      %985 = vmatprep.subr.bf16.mxu0 0
      %986 = vmatpush1.bf16.msra.mxu0 0
      %987 = vmatprep.subr.bf16.mxu0 0
      %988 = vmatpush1.bf16.msra.mxu0 0
      %989 = vmatprep.subr.bf16.mxu0 0
      %990 = vmatpush1.bf16.msra.mxu0 0
      %991 = vmatprep.subr.bf16.mxu0 0
      %992 = vmatpush1.bf16.msra.mxu0 %v976
      %993 = vmatprep.subr.bf16.mxu0 0
      %994 = vmatpush1.bf16.msra.mxu0 %v975
      %995 = vmatprep.subr.bf16.mxu0 0
      %996 = vmatpush2.bf16.msra.mxu0 0
      %997 = vmatprep.subr.bf16.mxu0 0
      %998 = vmatpush2.bf16.msra.mxu0 0
      %999 = vmatprep.subr.bf16.mxu0 0
      %1000 = vmatpush2.bf16.msra.mxu0 0
      %1001 = vmatprep.subr.bf16.mxu0 0
      %1002 = vmatpush2.bf16.msra.mxu0 0
      %1003 = vmatprep.subr.bf16.mxu0 0
      %1004 = vmatpush2.bf16.msra.mxu0 0
      %1005 = vmatprep.subr.bf16.mxu0 0
      %1006 = vmatpush2.bf16.msra.mxu0 0
      %1007 = vmatprep.subr.bf16.mxu0 0
      %1008 = vmatpush2.bf16.msra.mxu0 0
      %1009 = vmatprep.subr.bf16.mxu0 0
      %1010 = vmatpush2.bf16.msra.mxu0 0
      %1011 = vmatprep.mubr.bf16.mxu0 0
      %1012 = vmatmul.mubr.bf16.gmra.mxu0 %v792
      %v1013 = vpop.f32.mrf.mxu0
      %v1014 = vadd.f32 %v965, %v1013
      %v1015 = vpop.f32.mrf.mxu0
      %v1016 = vpop.f32.mrf.mxu0
      %v1017 = vadd.f32 %v965, %v1016
      %v1018 = vpop.f32.mrf.mxu0
      %1019 = vmatprep.mubr.bf16.mxu0 0
      %1020 = vmatmul.mubr.bf16.gmra.mxu0 %v795
      %v1021 = vpop.f32.mrf.mxu0
      %v1022 = vadd.f32 %v965, %v1021
      %v1023 = vpop.f32.mrf.mxu0
      %v1024 = vpop.f32.mrf.mxu0
      %v1025 = vadd.f32 %v965, %v1024
      %v1026 = vpop.f32.mrf.mxu0
      %1027 = vmatprep.mubr.bf16.mxu0 0
      %1028 = vmatmul.mubr.bf16.gmra.mxu0 %v798
      %v1029 = vpop.f32.mrf.mxu0
      %v1030 = vadd.f32 %v965, %v1029
      %v1031 = vpop.f32.mrf.mxu0
      %v1032 = vpop.f32.mrf.mxu0
      %v1033 = vadd.f32 %v965, %v1032
      %v1034 = vpop.f32.mrf.mxu0
      %1035 = vmatprep.mubr.bf16.mxu0 0
      %1036 = vmatmul.mubr.bf16.gmra.mxu0 %v801
      %v1037 = vpop.f32.mrf.mxu0
      %v1038 = vadd.f32 %v965, %v1037
      %v1039 = vpop.f32.mrf.mxu0
      %v1040 = vpop.f32.mrf.mxu0
      %v1041 = vadd.f32 %v965, %v1040
      %v1042 = vpop.f32.mrf.mxu0
      %1043 = vdwg.mxu0
      %v1044 = vpack.c.bf16 %v841, %v838
      %v1045 = vpack.c.bf16 %v849, %v846
      %v1046 = vpack.c.bf16 %v857, %v854
      %v1047 = vpack.c.bf16 %v865, %v862
      %v1052 = vunpack.c.l.b16 %v1044
      %v1053 = vunpack.c.h.b16 %v1044
      %v1054 = vunpack.c.l.b16 %v1045
      %v1055 = vunpack.c.h.b16 %v1045
      %v1056 = vunpack.c.l.b16 %v1046
      %v1057 = vunpack.c.h.b16 %v1046
      %v1058 = vunpack.c.l.b16 %v1047
      %v1059 = vunpack.c.h.b16 %v1047
      %v1060 = vpack.c.b16 %v1052, %v1052
      %v1061 = vpack.c.b16 %v1053, %v1053
      %v1062 = vpack.c.b16 %v1054, %v1054
      %v1063 = vpack.c.b16 %v1055, %v1055
      %v1064 = vpack.c.b16 %v1056, %v1056
      %v1065 = vpack.c.b16 %v1057, %v1057
      %v1066 = vpack.c.b16 %v1058, %v1058
      %v1067 = vpack.c.b16 %v1059, %v1059
      %vm1076 = vcmask 60416
      %1077 = vst.msk [vmem:[%s664] sm:$0xf] %vm1076, %v1060
      %1078 = vst.msk [vmem:[%s664 + $0x4] sm:$0xf] %vm1076, %v1061
      %1079 = vst.msk [vmem:[%s664 + $0x8] sm:$0xf] %vm1076, %v1062
      %1080 = vst.msk [vmem:[%s664 + $0xc] sm:$0xf] %vm1076, %v1063
      %1081 = vst.msk [vmem:[%s664 + $0x10] sm:$0xf] %vm1076, %v1064
      %1082 = vst.msk [vmem:[%s664 + $0x14] sm:$0xf] %vm1076, %v1065
      %1083 = vst.msk [vmem:[%s664 + $0x18] sm:$0xf] %vm1076, %v1066
      %1084 = vst.msk [vmem:[%s664 + $0x1c] sm:$0xf] %vm1076, %v1067
      %v1085 = vpack.c.bf16 %v929, %v926
      %v1086 = vpack.c.bf16 %v937, %v934
      %v1087 = vpack.c.bf16 %v945, %v942
      %v1088 = vpack.c.bf16 %v953, %v950
      %v1093 = vunpack.c.l.b16 %v1085
      %v1094 = vunpack.c.h.b16 %v1085
      %v1095 = vunpack.c.l.b16 %v1086
      %v1096 = vunpack.c.h.b16 %v1086
      %v1097 = vunpack.c.l.b16 %v1087
      %v1098 = vunpack.c.h.b16 %v1087
      %v1099 = vunpack.c.l.b16 %v1088
      %v1100 = vunpack.c.h.b16 %v1088
      %v1101 = vpack.c.b16 %v1093, %v1093
      %v1102 = vpack.c.b16 %v1094, %v1094
      %v1103 = vpack.c.b16 %v1095, %v1095
      %v1104 = vpack.c.b16 %v1096, %v1096
      %v1105 = vpack.c.b16 %v1097, %v1097
      %v1106 = vpack.c.b16 %v1098, %v1098
      %v1107 = vpack.c.b16 %v1099, %v1099
      %v1108 = vpack.c.b16 %v1100, %v1100
      %1117 = vst.msk [vmem:[%s678] sm:$0xf] %vm1076, %v1101
      %1118 = vst.msk [vmem:[%s678 + $0x4] sm:$0xf] %vm1076, %v1102
      %1119 = vst.msk [vmem:[%s678 + $0x8] sm:$0xf] %vm1076, %v1103
      %1120 = vst.msk [vmem:[%s678 + $0xc] sm:$0xf] %vm1076, %v1104
      %1121 = vst.msk [vmem:[%s678 + $0x10] sm:$0xf] %vm1076, %v1105
      %1122 = vst.msk [vmem:[%s678 + $0x14] sm:$0xf] %vm1076, %v1106
      %1123 = vst.msk [vmem:[%s678 + $0x18] sm:$0xf] %vm1076, %v1107
      %1124 = vst.msk [vmem:[%s678 + $0x1c] sm:$0xf] %vm1076, %v1108
      %v1125 = vpack.c.bf16 %v1017, %v1014
      %v1126 = vpack.c.bf16 %v1025, %v1022
      %v1127 = vpack.c.bf16 %v1033, %v1030
      %v1128 = vpack.c.bf16 %v1041, %v1038
      %v1133 = vunpack.c.l.b16 %v1125
      %v1134 = vunpack.c.h.b16 %v1125
      %v1135 = vunpack.c.l.b16 %v1126
      %v1136 = vunpack.c.h.b16 %v1126
      %v1137 = vunpack.c.l.b16 %v1127
      %v1138 = vunpack.c.h.b16 %v1127
      %v1139 = vunpack.c.l.b16 %v1128
      %v1140 = vunpack.c.h.b16 %v1128
      %v1141 = vpack.c.b16 %v1133, %v1133
      %v1142 = vpack.c.b16 %v1134, %v1134
      %v1143 = vpack.c.b16 %v1135, %v1135
      %v1144 = vpack.c.b16 %v1136, %v1136
      %v1145 = vpack.c.b16 %v1137, %v1137
      %v1146 = vpack.c.b16 %v1138, %v1138
      %v1147 = vpack.c.b16 %v1139, %v1139
      %v1148 = vpack.c.b16 %v1140, %v1140
      %1157 = vst.msk [vmem:[%s692] sm:$0xf] %vm1076, %v1141
      %1158 = vst.msk [vmem:[%s692 + $0x4] sm:$0xf] %vm1076, %v1142
      %1159 = vst.msk [vmem:[%s692 + $0x8] sm:$0xf] %vm1076, %v1143
      %1160 = vst.msk [vmem:[%s692 + $0xc] sm:$0xf] %vm1076, %v1144
      %1161 = vst.msk [vmem:[%s692 + $0x10] sm:$0xf] %vm1076, %v1145
      %1162 = vst.msk [vmem:[%s692 + $0x14] sm:$0xf] %vm1076, %v1146
      %1163 = vst.msk [vmem:[%s692 + $0x18] sm:$0xf] %vm1076, %v1147
      %1164 = vst.msk [vmem:[%s692 + $0x1c] sm:$0xf] %vm1076, %v1148
      %s1165 = smul.u32 8, %s32
      %p1166 = scmp.lt.s32.totalorder %s30, 1
      %s1167 = scalar_select %p1166, %s30, 1
      %p1168 = scmp.lt.s32.totalorder %s31, 3
      %s1169 = scalar_select %p1168, %s31, 3
      %p1170 = scmp.lt.s32.totalorder %s1165, 7
      %s1171 = scalar_select %p1170, %s1165, 7
      %s1172 = smul.addr %s1169, 8
      %s1173 = sadd.s32 %s1171, %s1172
      %s1174 = smul.addr %s1167, 32
      %s1175 = sadd.s32 %s1173, %s1174
      %s1176 = smul.addr %s1175, 4
      %s1177 = scalar_lea.vmem %s11, %s1176
      %s1178 = smul.u32 8, %s32
      %p1179 = scmp.lt.s32.totalorder %s30, 1
      %s1180 = scalar_select %p1179, %s30, 1
      %p1181 = scmp.lt.s32.totalorder %s31, 3
      %s1182 = scalar_select %p1181, %s31, 3
      %p1183 = scmp.lt.s32.totalorder %s1178, 7
      %s1184 = scalar_select %p1183, %s1178, 7
      %s1185 = smul.addr %s1182, 8
      %s1186 = sadd.s32 %s1184, %s1185
      %s1187 = smul.addr %s1180, 32
      %s1188 = sadd.s32 %s1186, %s1187
      %s1189 = smul.addr %s1188, 4
      %s1190 = scalar_lea.vmem %s12, %s1189
      %s1191 = smul.u32 8, %s32
      %p1192 = scmp.lt.s32.totalorder %s30, 1
      %s1193 = scalar_select %p1192, %s30, 1
      %p1194 = scmp.lt.s32.totalorder %s31, 3
      %s1195 = scalar_select %p1194, %s31, 3
      %p1196 = scmp.lt.s32.totalorder %s1191, 7
      %s1197 = scalar_select %p1196, %s1191, 7
      %s1198 = smul.addr %s1195, 8
      %s1199 = sadd.s32 %s1197, %s1198
      %s1200 = smul.addr %s1193, 32
      %s1201 = sadd.s32 %s1199, %s1200
      %s1202 = smul.addr %s1201, 4
      %s1203 = scalar_lea.vmem %s13, %s1202
      // Predicated region
      $region65: #{quant_attention_block.5} parent=63 // pred_check
        %p1204 = pneg %p344
      $region66: #{quant_attention_block.5} parent=63 // pred_check_branch
        %1206 = sbr.rel (%p1204) target = $region68
      $region67: #{quant_attention_block.5} parent=63 // pred_region
        %s1207 = smul.u32 8, %s32
      $region68: #{quant_attention_block.5} parent=63 // pred_fallthru
        _
      // Predicated region
      $region69: #{quant_attention_block.5} parent=63 // pred_check
        %p1208 = pneg %p374
      $region70: #{quant_attention_block.5} parent=63 // pred_check_branch
        %1210 = sbr.rel (%p1208) target = $region72
      $region71: #{quant_attention_block.5} parent=63 // pred_region
        %s1211 = smul.u32 8, %s32
      $region72: #{quant_attention_block.5} parent=63 // pred_fallthru
        _
      // Predicated region
      $region73: #{quant_attention_block.5} parent=63 // pred_check
        %p1212 = pneg %p404
      $region74: #{quant_attention_block.5} parent=63 // pred_check_branch
        %1214 = sbr.rel (%p1212) target = $region76
      $region75: #{quant_attention_block.5} parent=63 // pred_region
        %s1215 = smul.u32 8, %s32
      $region76: #{quant_attention_block.5} parent=63 // pred_fallthru
        _
    $region64: #{quant_attention_block.5} parent=5 // pred_fallthru
      _
    %p1216 = scmp.le.s32.totalorder 2, %s20
    // Predicated region
    $region77: #{quant_attention_block.5} parent=5 // pred_check
      %p1217 = pneg %p1216
    $region78: #{quant_attention_block.5} parent=5 // pred_check_branch
      %1219 = sbr.rel (%p1217) target = $region80
    $region79: #{quant_attention_block.5} parent=5 // pred_region
      %s1220 = ssub.s32 %s20, 2
      // Predicated region
      $region81: #{quant_attention_block.5} parent=79 // pred_check
        %p1221 = pneg %p350
      $region82: #{quant_attention_block.5} parent=79 // pred_check_branch
        %1223 = sbr.rel (%p1221) target = $region84
      $region83: #{quant_attention_block.5} parent=79 // pred_region
        %s1224 = smul.u32 8, %s35
        %p1225 = scmp.lt.s32.totalorder %s33, 1
        %s1226 = scalar_select %p1225, %s33, 1
        %p1227 = scmp.lt.s32.totalorder %s34, 3
        %s1228 = scalar_select %p1227, %s34, 3
        %p1229 = scmp.lt.s32.totalorder %s1224, 7
        %s1230 = scalar_select %p1229, %s1224, 7
        %s1231 = smul.addr %s1228, 8
        %s1232 = sadd.s32 %s1230, %s1231
        %s1233 = smul.addr %s1226, 32
        %s1234 = sadd.s32 %s1232, %s1233
        %s1235 = smul.addr %s1234, 4
        %s1236 = scalar_lea.vmem %s11, %s1235
      $region84: #{quant_attention_block.5} parent=79 // pred_fallthru
        _
      // Predicated region
      $region85: #{quant_attention_block.5} parent=79 // pred_check
        %p1237 = pneg %p380
      $region86: #{quant_attention_block.5} parent=79 // pred_check_branch
        %1239 = sbr.rel (%p1237) target = $region88
      $region87: #{quant_attention_block.5} parent=79 // pred_region
        %s1240 = smul.u32 8, %s35
        %p1241 = scmp.lt.s32.totalorder %s33, 1
        %s1242 = scalar_select %p1241, %s33, 1
        %p1243 = scmp.lt.s32.totalorder %s34, 3
        %s1244 = scalar_select %p1243, %s34, 3
        %p1245 = scmp.lt.s32.totalorder %s1240, 7
        %s1246 = scalar_select %p1245, %s1240, 7
        %s1247 = smul.addr %s1244, 8
        %s1248 = sadd.s32 %s1246, %s1247
        %s1249 = smul.addr %s1242, 32
        %s1250 = sadd.s32 %s1248, %s1249
        %s1251 = smul.addr %s1250, 4
        %s1252 = scalar_lea.vmem %s12, %s1251
      $region88: #{quant_attention_block.5} parent=79 // pred_fallthru
        _
      // Predicated region
      $region89: #{quant_attention_block.5} parent=79 // pred_check
        %p1253 = pneg %p410
      $region90: #{quant_attention_block.5} parent=79 // pred_check_branch
        %1255 = sbr.rel (%p1253) target = $region92
      $region91: #{quant_attention_block.5} parent=79 // pred_region
        %s1256 = smul.u32 8, %s35
        %p1257 = scmp.lt.s32.totalorder %s33, 1
        %s1258 = scalar_select %p1257, %s33, 1
        %p1259 = scmp.lt.s32.totalorder %s34, 3
        %s1260 = scalar_select %p1259, %s34, 3
        %p1261 = scmp.lt.s32.totalorder %s1256, 7
        %s1262 = scalar_select %p1261, %s1256, 7
        %s1263 = smul.addr %s1260, 8
        %s1264 = sadd.s32 %s1262, %s1263
        %s1265 = smul.addr %s1258, 32
        %s1266 = sadd.s32 %s1264, %s1265
        %s1267 = smul.addr %s1266, 4
        %s1268 = scalar_lea.vmem %s13, %s1267
      $region92: #{quant_attention_block.5} parent=79 // pred_fallthru
        _
    $region80: #{quant_attention_block.5} parent=5 // pred_fallthru
      _
  $region6: #{quant_attention_block.5} parent=0 // loop_footer
    %s24 = sadd.s32 1, %s20
  $region7: #{quant_attention_block.5} parent=0 // loop_footer_branch
    %19 = sbr.rel target = $region3
  $region8: #{quant_attention_block.5} parent=0 // loop_exit
    _

// kernel: quant_attention_block.6
$region0: #{quant_attention_block.6}
  #allocation0 [shape = 'u32[]', space=smem, size = 0x4, offset = 0x4, fixed_abs, tag = 'smem constant byte address 0x4 - core index']
  #allocation1 [shape = 'u32[144,128]{1,0:T(1,128)}', space=vmem, size = 0x12000, scoped, tag = 'internal scratch']
  #allocation2 [shape = 'f32[64,1]{1,0:T(8,128)}', space=vmem, size = 0x8000, scoped, tag = 'scratch operand']
  #allocation3 [shape = 'f32[64,1]{1,0:T(8,128)}', space=vmem, size = 0x8000, scoped, tag = 'scratch operand']
  #allocation4 [shape = 'f32[64,8]{1,0:T(8,128)}', space=vmem, size = 0x8000, scoped, tag = 'scratch operand']
  %s0 = inlined_call_operand.vmem [shape: bf16[2,4,64,8], index: 0, kind: input, shape index: {}]
  %s1 = inlined_call_operand.vmem [shape: bf16[2,4,64,8], index: 1, kind: input, shape index: {}]
  %s2 = inlined_call_operand.vmem [shape: bf16[2,4,64,8], index: 2, kind: input, shape index: {}]
  %s3 = inlined_call_operand.vmem [shape: bf16[2,4,64,8], index: 3, kind: output, shape index: {}]
  %s4 = sld [smem:[#allocation0]]
  $region53: #{quant_attention_block.6} parent=0
    _
  %s6 = ssub.s32 1, %s4
  %s7 = scalar_select 0, %s6, %s4
  loop: start=0, step=1, limit=10
  $region2: #{quant_attention_block.6} parent=0 // loop_pre_header
    _
  $region3: #{quant_attention_block.6} parent=0 // loop_header
    %s9 = sphi 0, %s13
    %p10 = scmp.ge.s32.totalorder %s9, 10
    %s16 = sphi 0, %s42
    %s17 = sphi 0, %s38
    %s18 = sphi 0, %s34
    %s19 = sphi 0, %s30
    %s20 = sphi 0, %s16
    %s21 = sphi 0, %s17
    %s22 = sphi 0, %s18
    %s23 = sphi 0, %s19
    %s24 = sphi 0, %s20
    %s25 = sphi 0, %s21
    %s26 = sphi 0, %s22
    %s27 = sphi 0, %s23
    %s49 = sphi 0, %s51
    %s52 = sphi 0, %s49
    %s53 = sphi 0, %s52
    %s69 = sphi 0, %s53
    %s79 = sphi 0, %s81
    %s82 = sphi 0, %s79
    %s83 = sphi 0, %s82
    %s99 = sphi 0, %s83
    %s109 = sphi 0, %s111
    %s112 = sphi 0, %s109
    %s113 = sphi 0, %s112
    %s129 = sphi 0, %s113
    %s139 = sphi 0, %s141
    %s142 = sphi 0, %s139
    %s143 = sphi 0, %s142
    %s159 = sphi 0, %s143
  $region4: #{quant_attention_block.6} parent=0 // loop_header_branch
    %12 = sbr.rel (%p10) target = $region8
  $region5: #{quant_attention_block.6} parent=0 // loop_body
    %s14 = ssub.s32 %s9, 1
    %s15 = ssub.s32 %s9, 2
    %s28 = sadd.s32 1, %s19
    %p29 = scmp.ge.s32.totalorder %s28, 1
    %s30 = scalar_select %p29, 0, %s28
    %s31 = sadd.s32 1, %s18
    %s32 = scalar_select %p29, %s31, %s18
    %p33 = scmp.ge.s32.totalorder %s32, 1
    %s34 = scalar_select %p33, 0, %s32
    %s35 = sadd.s32 1, %s17
    %s36 = scalar_select %p33, %s35, %s17
    %p37 = scmp.ge.s32.totalorder %s36, 4
    %s38 = scalar_select %p37, 0, %s36
    %s39 = sadd.s32 1, %s16
    %s40 = scalar_select %p37, %s39, %s16
    %p41 = scmp.ge.s32.totalorder %s40, 2
    %s42 = scalar_select %p41, 0, %s40
    %s43 = ssub.s32 %s16, %s42
    %s44 = ssub.s32 %s17, %s38
    %s45 = sor.u32 %s43, %s44
    %s46 = ssub.s32 %s18, %s34
    %s47 = sor.u32 %s45, %s46
    %p48 = scmp.eq.s32.totalorder %s47, 0
    %s50 = sadd.s32 %s49, 1
    %s51 = scalar_select %p48, %s49, %s50
    %p54 = pneg %p48
    %p55 = scmp.eq.s32.totalorder %s9, 7
    %p56 = por %p54, %p55
    %p57 = scmp.ne.s32.totalorder %s49, %s52
    %p58 = scmp.eq.s32.totalorder %s9, 0
    %p59 = por %p57, %p58
    %p60 = scmp.ne.s32.totalorder %s49, %s52
    %p61 = scmp.eq.s32.totalorder %s14, 7
    %p62 = por %p60, %p61
    %p63 = scmp.ne.s32.totalorder %s52, %s53
    %p64 = scmp.eq.s32.totalorder %s14, 0
    %p65 = por %p63, %p64
    %p66 = scmp.ne.s32.totalorder %s52, %s53
    %p67 = scmp.eq.s32.totalorder %s15, 7
    %p68 = por %p66, %p67
    %p70 = scmp.ne.s32.totalorder %s53, %s69
    %p71 = scmp.eq.s32.totalorder %s15, 0
    %p72 = por %p70, %p71
    %s73 = ssub.s32 %s16, %s42
    %s74 = ssub.s32 %s17, %s38
    %s75 = sor.u32 %s73, %s74
    %s76 = ssub.s32 %s19, %s30
    %s77 = sor.u32 %s75, %s76
    %p78 = scmp.eq.s32.totalorder %s77, 0
    %s80 = sadd.s32 %s79, 1
    %s81 = scalar_select %p78, %s79, %s80
    %p84 = pneg %p78
    %p85 = scmp.eq.s32.totalorder %s9, 7
    %p86 = por %p84, %p85
    %p87 = scmp.ne.s32.totalorder %s79, %s82
    %p88 = scmp.eq.s32.totalorder %s9, 0
    %p89 = por %p87, %p88
    %p90 = scmp.ne.s32.totalorder %s79, %s82
    %p91 = scmp.eq.s32.totalorder %s14, 7
    %p92 = por %p90, %p91
    %p93 = scmp.ne.s32.totalorder %s82, %s83
    %p94 = scmp.eq.s32.totalorder %s14, 0
    %p95 = por %p93, %p94
    %p96 = scmp.ne.s32.totalorder %s82, %s83
    %p97 = scmp.eq.s32.totalorder %s15, 7
    %p98 = por %p96, %p97
    %p100 = scmp.ne.s32.totalorder %s83, %s99
    %p101 = scmp.eq.s32.totalorder %s15, 0
    %p102 = por %p100, %p101
    %s103 = ssub.s32 %s16, %s42
    %s104 = ssub.s32 %s17, %s38
    %s105 = sor.u32 %s103, %s104
    %s106 = ssub.s32 %s19, %s30
    %s107 = sor.u32 %s105, %s106
    %p108 = scmp.eq.s32.totalorder %s107, 0
    %s110 = sadd.s32 %s109, 1
    %s111 = scalar_select %p108, %s109, %s110
    %p114 = pneg %p108
    %p115 = scmp.eq.s32.totalorder %s9, 7
    %p116 = por %p114, %p115
    %p117 = scmp.ne.s32.totalorder %s109, %s112
    %p118 = scmp.eq.s32.totalorder %s9, 0
    %p119 = por %p117, %p118
    %p120 = scmp.ne.s32.totalorder %s109, %s112
    %p121 = scmp.eq.s32.totalorder %s14, 7
    %p122 = por %p120, %p121
    %p123 = scmp.ne.s32.totalorder %s112, %s113
    %p124 = scmp.eq.s32.totalorder %s14, 0
    %p125 = por %p123, %p124
    %p126 = scmp.ne.s32.totalorder %s112, %s113
    %p127 = scmp.eq.s32.totalorder %s15, 7
    %p128 = por %p126, %p127
    %p130 = scmp.ne.s32.totalorder %s113, %s129
    %p131 = scmp.eq.s32.totalorder %s15, 0
    %p132 = por %p130, %p131
    %s133 = ssub.s32 %s16, %s42
    %s134 = ssub.s32 %s17, %s38
    %s135 = sor.u32 %s133, %s134
    %s136 = ssub.s32 %s18, %s34
    %s137 = sor.u32 %s135, %s136
    %p138 = scmp.eq.s32.totalorder %s137, 0
    %s140 = sadd.s32 %s139, 1
    %s141 = scalar_select %p138, %s139, %s140
    %p144 = pneg %p138
    %p145 = scmp.eq.s32.totalorder %s9, 7
    %p146 = por %p144, %p145
    %p147 = scmp.ne.s32.totalorder %s139, %s142
    %p148 = scmp.eq.s32.totalorder %s9, 0
    %p149 = por %p147, %p148
    %p150 = scmp.ne.s32.totalorder %s139, %s142
    %p151 = scmp.eq.s32.totalorder %s14, 7
    %p152 = por %p150, %p151
    %p153 = scmp.ne.s32.totalorder %s142, %s143
    %p154 = scmp.eq.s32.totalorder %s14, 0
    %p155 = por %p153, %p154
    %p156 = scmp.ne.s32.totalorder %s142, %s143
    %p157 = scmp.eq.s32.totalorder %s15, 7
    %p158 = por %p156, %p157
    %p160 = scmp.ne.s32.totalorder %s143, %s159
    %p161 = scmp.eq.s32.totalorder %s15, 0
    %p162 = por %p160, %p161
    %p163 = scmp.le.s32.totalorder 1, %s9
    %p164 = scmp.lt.s32.totalorder %s9, 9
    %p165 = pnand %p163, %p164
    %p166 = pneg %p165
    // Predicated region
    $region9: #{quant_attention_block.6} parent=5 // pred_check
      _
    $region10: #{quant_attention_block.6} parent=5 // pred_check_branch
      %168 = sbr.rel (%p165) target = $region12
    $region11: #{quant_attention_block.6} parent=5 // pred_region
      %s169 = ssub.s32 %s9, 1
    $region12: #{quant_attention_block.6} parent=5 // pred_fallthru
      _
    %p170 = scmp.lt.s32.totalorder %s9, 8
    // Predicated region
    $region13: #{quant_attention_block.6} parent=5 // pred_check
      %p171 = pneg %p170
    $region14: #{quant_attention_block.6} parent=5 // pred_check_branch
      %173 = sbr.rel (%p171) target = $region16
    $region15: #{quant_attention_block.6} parent=5 // pred_region
      // Predicated region
      $region17: #{quant_attention_block.6} parent=15 // pred_check
        %p174 = pneg %p59
      $region18: #{quant_attention_block.6} parent=15 // pred_check_branch
        %176 = sbr.rel (%p174) target = $region20
      $region19: #{quant_attention_block.6} parent=15 // pred_region
        %s177 = smul.u32 8, %s18
        %p178 = scmp.lt.s32.totalorder %s16, 1
        %s179 = scalar_select %p178, %s16, 1
        %p180 = scmp.lt.s32.totalorder %s17, 3
        %s181 = scalar_select %p180, %s17, 3
        %p182 = scmp.lt.s32.totalorder %s177, 7
        %s183 = scalar_select %p182, %s177, 7
        %s184 = smul.addr %s181, 8
        %s185 = sadd.s32 %s183, %s184
        %s186 = smul.addr %s179, 32
        %s187 = sadd.s32 %s185, %s186
        %s188 = smul.addr %s187, 4
        %s189 = scalar_lea.vmem %s0, %s188
        %s190 = smul.u32 8, %s18
      $region20: #{quant_attention_block.6} parent=15 // pred_fallthru
        _
      // Predicated region
      $region21: #{quant_attention_block.6} parent=15 // pred_check
        %p191 = pneg %p89
      $region22: #{quant_attention_block.6} parent=15 // pred_check_branch
        %193 = sbr.rel (%p191) target = $region24
      $region23: #{quant_attention_block.6} parent=15 // pred_region
        %s194 = smul.u32 8, %s19
        %p195 = scmp.lt.s32.totalorder %s16, 1
        %s196 = scalar_select %p195, %s16, 1
        %p197 = scmp.lt.s32.totalorder %s17, 3
        %s198 = scalar_select %p197, %s17, 3
        %p199 = scmp.lt.s32.totalorder %s194, 7
        %s200 = scalar_select %p199, %s194, 7
        %s201 = smul.addr %s198, 8
        %s202 = sadd.s32 %s200, %s201
        %s203 = smul.addr %s196, 32
        %s204 = sadd.s32 %s202, %s203
        %s205 = smul.addr %s204, 4
        %s206 = scalar_lea.vmem %s1, %s205
        %s207 = smul.u32 8, %s19
      $region24: #{quant_attention_block.6} parent=15 // pred_fallthru
        _
      // Predicated region
      $region25: #{quant_attention_block.6} parent=15 // pred_check
        %p208 = pneg %p119
      $region26: #{quant_attention_block.6} parent=15 // pred_check_branch
        %210 = sbr.rel (%p208) target = $region28
      $region27: #{quant_attention_block.6} parent=15 // pred_region
        %s211 = smul.u32 8, %s19
        %p212 = scmp.lt.s32.totalorder %s16, 1
        %s213 = scalar_select %p212, %s16, 1
        %p214 = scmp.lt.s32.totalorder %s17, 3
        %s215 = scalar_select %p214, %s17, 3
        %p216 = scmp.lt.s32.totalorder %s211, 7
        %s217 = scalar_select %p216, %s211, 7
        %s218 = smul.addr %s215, 8
        %s219 = sadd.s32 %s217, %s218
        %s220 = smul.addr %s213, 32
        %s221 = sadd.s32 %s219, %s220
        %s222 = smul.addr %s221, 4
        %s223 = scalar_lea.vmem %s2, %s222
        %s224 = smul.u32 8, %s19
      $region28: #{quant_attention_block.6} parent=15 // pred_fallthru
        _
    $region16: #{quant_attention_block.6} parent=5 // pred_fallthru
      _
    %p225 = scmp.le.s32.totalorder 1, %s9
    %p226 = scmp.lt.s32.totalorder %s9, 9
    %p227 = pnand %p225, %p226
    %p228 = pneg %p227
    // Predicated region
    $region29: #{quant_attention_block.6} parent=5 // pred_check
      _
    $region30: #{quant_attention_block.6} parent=5 // pred_check_branch
      %230 = sbr.rel (%p227) target = $region32
    $region31: #{quant_attention_block.6} parent=5 // pred_region
      %s231 = ssub.s32 %s9, 1
      %s232 = smul.u32 8, %s22
      %p233 = scmp.lt.s32.totalorder %s20, 1
      %s234 = scalar_select %p233, %s20, 1
      %p235 = scmp.lt.s32.totalorder %s21, 3
      %s236 = scalar_select %p235, %s21, 3
      %p237 = scmp.lt.s32.totalorder %s232, 7
      %s238 = scalar_select %p237, %s232, 7
      %s239 = smul.addr %s236, 8
      %s240 = sadd.s32 %s238, %s239
      %s241 = smul.addr %s234, 32
      %s242 = sadd.s32 %s240, %s241
      %s243 = smul.addr %s242, 4
      %s244 = scalar_lea.vmem %s0, %s243
      %p245 = pneg %p65
      %p246 = pneg %p62
      %s247 = smul.u32 8, %s23
      %p248 = scmp.lt.s32.totalorder %s20, 1
      %s249 = scalar_select %p248, %s20, 1
      %p250 = scmp.lt.s32.totalorder %s21, 3
      %s251 = scalar_select %p250, %s21, 3
      %p252 = scmp.lt.s32.totalorder %s247, 7
      %s253 = scalar_select %p252, %s247, 7
      %s254 = smul.addr %s251, 8
      %s255 = sadd.s32 %s253, %s254
      %s256 = smul.addr %s249, 32
      %s257 = sadd.s32 %s255, %s256
      %s258 = smul.addr %s257, 4
      %s259 = scalar_lea.vmem %s1, %s258
      %p260 = pneg %p95
      %p261 = pneg %p92
      %s262 = smul.u32 8, %s23
      %p263 = scmp.lt.s32.totalorder %s20, 1
      %s264 = scalar_select %p263, %s20, 1
      %p265 = scmp.lt.s32.totalorder %s21, 3
      %s266 = scalar_select %p265, %s21, 3
      %p267 = scmp.lt.s32.totalorder %s262, 7
      %s268 = scalar_select %p267, %s262, 7
      %s269 = smul.addr %s266, 8
      %s270 = sadd.s32 %s268, %s269
      %s271 = smul.addr %s264, 32
      %s272 = sadd.s32 %s270, %s271
      %s273 = smul.addr %s272, 4
      %s274 = scalar_lea.vmem %s2, %s273
      %p275 = pneg %p125
      %p276 = pneg %p122
      %p277 = pneg %p155
      %p278 = pneg %p152
      %s279 = smul.u32 8, %s22
      %p280 = scmp.lt.s32.totalorder %s20, 1
      %s281 = scalar_select %p280, %s20, 1
      %p282 = scmp.lt.s32.totalorder %s21, 3
      %s283 = scalar_select %p282, %s21, 3
      %p284 = scmp.lt.s32.totalorder %s279, 7
      %s285 = scalar_select %p284, %s279, 7
      %s286 = smul.addr %s283, 8
      %s287 = sadd.s32 %s285, %s286
      %s288 = smul.addr %s281, 32
      %s289 = sadd.s32 %s287, %s288
      %s290 = smul.addr %s289, 4
      %s291 = scalar_lea.vmem %s3, %s290
      %s292 = smul.u32 8, %s22
      %p293 = scmp.lt.s32.totalorder %s20, 1
      %s294 = scalar_select %p293, %s20, 1
      %p295 = scmp.lt.s32.totalorder %s21, 3
      %s296 = scalar_select %p295, %s21, 3
      %p297 = scmp.lt.s32.totalorder %s292, 7
      %s298 = scalar_select %p297, %s292, 7
      %s299 = smul.addr %s296, 8
      %s300 = sadd.s32 %s298, %s299
      %s301 = smul.addr %s294, 32
      %s302 = sadd.s32 %s300, %s301
      %s303 = smul.addr %s302, 4
      %s304 = scalar_lea.vmem %s0, %s303
      %s305 = smul.u32 8, %s22
      %s306 = smul.u32 8, %s23
      %p307 = scmp.lt.s32.totalorder %s20, 1
      %s308 = scalar_select %p307, %s20, 1
      %p309 = scmp.lt.s32.totalorder %s21, 3
      %s310 = scalar_select %p309, %s21, 3
      %p311 = scmp.lt.s32.totalorder %s306, 7
      %s312 = scalar_select %p311, %s306, 7
      %s313 = smul.addr %s310, 8
      %s314 = sadd.s32 %s312, %s313
      %s315 = smul.addr %s308, 32
      %s316 = sadd.s32 %s314, %s315
      %s317 = smul.addr %s316, 4
      %s318 = scalar_lea.vmem %s1, %s317
      %s319 = smul.u32 8, %s23
      %s320 = smul.u32 8, %s23
      %p321 = scmp.lt.s32.totalorder %s20, 1
      %s322 = scalar_select %p321, %s20, 1
      %p323 = scmp.lt.s32.totalorder %s21, 3
      %s324 = scalar_select %p323, %s21, 3
      %p325 = scmp.lt.s32.totalorder %s320, 7
      %s326 = scalar_select %p325, %s320, 7
      %s327 = smul.addr %s324, 8
      %s328 = sadd.s32 %s326, %s327
      %s329 = smul.addr %s322, 32
      %s330 = sadd.s32 %s328, %s329
      %s331 = smul.addr %s330, 4
      %s332 = scalar_lea.vmem %s2, %s331
      %s333 = smul.u32 8, %s23
      %s334 = smul.u32 8, %s22
      %p335 = scmp.lt.s32.totalorder %s20, 1
      %s336 = scalar_select %p335, %s20, 1
      %p337 = scmp.lt.s32.totalorder %s21, 3
      %s338 = scalar_select %p337, %s21, 3
      %p339 = scmp.lt.s32.totalorder %s334, 7
      %s340 = scalar_select %p339, %s334, 7
      %s341 = smul.addr %s338, 8
      %s342 = sadd.s32 %s340, %s341
      %s343 = smul.addr %s336, 32
      %s344 = sadd.s32 %s342, %s343
      %s345 = smul.addr %s344, 4
      %s346 = scalar_lea.vmem %s3, %s345
      %s347 = smul.u32 8, %s22
      %p349 = scmp.eq.s32.totalorder %s23, 0
      // Predicated region
      $region33: #{quant_attention_block.6} parent=31 // pred_check
        %p350 = pneg %p349
      $region34: #{quant_attention_block.6} parent=31 // pred_check_branch
        %352 = sbr.rel (%p350) target = $region36
      $region35: #{quant_attention_block.6} parent=31 // pred_region
        %vm353 = vcmask 7168
        %354 = vst.msk [vmem:[#allocation2] sm:$0xff] %vm353, -inf
        %355 = vst.msk [vmem:[#allocation2 + $0x8] sm:$0xff] %vm353, -inf
        %356 = vst.msk [vmem:[#allocation2 + $0x10] sm:$0xff] %vm353, -inf
        %357 = vst.msk [vmem:[#allocation2 + $0x18] sm:$0xff] %vm353, -inf
        %358 = vst.msk [vmem:[#allocation2 + $0x20] sm:$0xff] %vm353, -inf
        %359 = vst.msk [vmem:[#allocation2 + $0x28] sm:$0xff] %vm353, -inf
        %360 = vst.msk [vmem:[#allocation2 + $0x30] sm:$0xff] %vm353, -inf
        %361 = vst.msk [vmem:[#allocation2 + $0x38] sm:$0xff] %vm353, -inf
        %362 = vst.msk [vmem:[#allocation3] sm:$0xff] %vm353, 0.0
        %363 = vst.msk [vmem:[#allocation3 + $0x8] sm:$0xff] %vm353, 0.0
        %364 = vst.msk [vmem:[#allocation3 + $0x10] sm:$0xff] %vm353, 0.0
        %365 = vst.msk [vmem:[#allocation3 + $0x18] sm:$0xff] %vm353, 0.0
        %366 = vst.msk [vmem:[#allocation3 + $0x20] sm:$0xff] %vm353, 0.0
        %367 = vst.msk [vmem:[#allocation3 + $0x28] sm:$0xff] %vm353, 0.0
        %368 = vst.msk [vmem:[#allocation3 + $0x30] sm:$0xff] %vm353, 0.0
        %369 = vst.msk [vmem:[#allocation3 + $0x38] sm:$0xff] %vm353, 0.0
        %vm370 = vcmask 64512
        %371 = vst.msk [vmem:[#allocation4] sm:$0xff] %vm370, 0.0
        %372 = vst.msk [vmem:[#allocation4 + $0x8] sm:$0xff] %vm370, 0.0
        %373 = vst.msk [vmem:[#allocation4 + $0x10] sm:$0xff] %vm370, 0.0
        %374 = vst.msk [vmem:[#allocation4 + $0x18] sm:$0xff] %vm370, 0.0
        %375 = vst.msk [vmem:[#allocation4 + $0x20] sm:$0xff] %vm370, 0.0
        %376 = vst.msk [vmem:[#allocation4 + $0x28] sm:$0xff] %vm370, 0.0
        %377 = vst.msk [vmem:[#allocation4 + $0x30] sm:$0xff] %vm370, 0.0
        %378 = vst.msk [vmem:[#allocation4 + $0x38] sm:$0xff] %vm370, 0.0
      $region36: #{quant_attention_block.6} parent=31 // pred_fallthru
        _
      %v379 = vld [vmem:[%s304] sm:$0xf]
      %v380 = vld [vmem:[%s304 + $0x4] sm:$0xf]
      %v381 = vld [vmem:[%s304 + $0x8] sm:$0xf]
      %v382 = vld [vmem:[%s304 + $0xc] sm:$0xf]
      %v383 = vld [vmem:[%s304 + $0x10] sm:$0xf]
      %v384 = vld [vmem:[%s304 + $0x14] sm:$0xf]
      %v385 = vld [vmem:[%s304 + $0x18] sm:$0xf]
      %v386 = vld [vmem:[%s304 + $0x1c] sm:$0xf]
      %v387 = vld [vmem:[%s318] sm:$0xf]
      %v388 = vld [vmem:[%s318 + $0x4] sm:$0xf]
      %v389 = vld [vmem:[%s318 + $0x8] sm:$0xf]
      %v390 = vld [vmem:[%s318 + $0xc] sm:$0xf]
      %v391 = vld [vmem:[%s318 + $0x10] sm:$0xf]
      %v392 = vld [vmem:[%s318 + $0x14] sm:$0xf]
      %v393 = vld [vmem:[%s318 + $0x18] sm:$0xf]
      %v394 = vld [vmem:[%s318 + $0x1c] sm:$0xf]
      %v403 = vunpack.c.l.b16 %v379
      %v404 = vunpack.c.l.b16 %v380
      %v405 = vunpack.c.l.b16 %v381
      %v406 = vunpack.c.l.b16 %v382
      %v407 = vunpack.c.l.b16 %v383
      %v408 = vunpack.c.l.b16 %v384
      %v409 = vunpack.c.l.b16 %v385
      %v410 = vunpack.c.l.b16 %v386
      %v411 = vpack.c.b16 %v404, %v403
      %v412 = vpack.c.b16 %v406, %v405
      %v413 = vpack.c.b16 %v408, %v407
      %v414 = vpack.c.b16 %v410, %v409
      %v423 = vunpack.c.l.b16 %v387
      %v424 = vunpack.c.l.b16 %v388
      %v425 = vunpack.c.l.b16 %v389
      %v426 = vunpack.c.l.b16 %v390
      %v427 = vunpack.c.l.b16 %v391
      %v428 = vunpack.c.l.b16 %v392
      %v429 = vunpack.c.l.b16 %v393
      %v430 = vunpack.c.l.b16 %v394
      %v431 = vpack.c.b16 %v424, %v423
      %v432 = vpack.c.b16 %v426, %v425
      %v433 = vpack.c.b16 %v428, %v427
      %v434 = vpack.c.b16 %v430, %v429
      %vm435 = vcmask 64512
      %v437 = vsel %vm435, %v411, 0
      %v440 = vsel %vm435, %v412, 0
      %v443 = vsel %vm435, %v413, 0
      %v446 = vsel %vm435, %v414, 0
      %v449 = vsel %vm435, %v431, 0
      %v452 = vsel %vm435, %v432, 0
      %v455 = vsel %vm435, %v433, 0
      %v458 = vsel %vm435, %v434, 0
      %460 = vmatprep.subr.bf16.mxu0 0
      %461 = vmatpush1.bf16.xpose.msra.mxu0 0
      %462 = vmatprep.subr.bf16.mxu0 0
      %463 = vmatpush1.bf16.xpose.msra.mxu0 0
      %464 = vmatprep.subr.bf16.mxu0 0
      %465 = vmatpush1.bf16.xpose.msra.mxu0 0
      %466 = vmatprep.subr.bf16.mxu0 0
      %467 = vmatpush1.bf16.xpose.msra.mxu0 0
      %468 = vmatprep.subr.bf16.mxu0 0
      %469 = vmatpush1.bf16.xpose.msra.mxu0 %v458
      %470 = vmatprep.subr.bf16.mxu0 0
      %471 = vmatpush1.bf16.xpose.msra.mxu0 %v455
      %472 = vmatprep.subr.bf16.mxu0 0
      %473 = vmatpush1.bf16.xpose.msra.mxu0 %v452
      %474 = vmatprep.subr.bf16.mxu0 0
      %475 = vmatpush1.bf16.xpose.msra.mxu0 %v449
      %476 = vmatprep.subr.bf16.mxu0 0
      %477 = vmatpush2.bf16.xpose.msra.mxu0 0
      %478 = vmatprep.subr.bf16.mxu0 0
      %479 = vmatpush2.bf16.xpose.msra.mxu0 0
      %480 = vmatprep.subr.bf16.mxu0 0
      %481 = vmatpush2.bf16.xpose.msra.mxu0 0
      %482 = vmatprep.subr.bf16.mxu0 0
      %483 = vmatpush2.bf16.xpose.msra.mxu0 0
      %484 = vmatprep.subr.bf16.mxu0 0
      %485 = vmatpush2.bf16.xpose.msra.mxu0 0
      %486 = vmatprep.subr.bf16.mxu0 0
      %487 = vmatpush2.bf16.xpose.msra.mxu0 0
      %488 = vmatprep.subr.bf16.mxu0 0
      %489 = vmatpush2.bf16.xpose.msra.mxu0 0
      %490 = vmatprep.subr.bf16.mxu0 0
      %491 = vmatpush2.bf16.xpose.msra.mxu0 0
      %492 = vmatprep.mubr.bf16.mxu0 0
      %493 = vmatmul.mubr.bf16.gmra.mxu0 %v437
      %v494 = vpop.f32.mrf.mxu0
      %v495 = vadd.f32 0.0, %v494
      %v496 = vpop.f32.mrf.mxu0
      %v497 = vpop.f32.mrf.mxu0
      %v498 = vadd.f32 0.0, %v497
      %v499 = vpop.f32.mrf.mxu0
      %500 = vmatprep.mubr.bf16.mxu0 0
      %501 = vmatmul.mubr.bf16.gmra.mxu0 %v440
      %v502 = vpop.f32.mrf.mxu0
      %v503 = vadd.f32 0.0, %v502
      %v504 = vpop.f32.mrf.mxu0
      %v505 = vpop.f32.mrf.mxu0
      %v506 = vadd.f32 0.0, %v505
      %v507 = vpop.f32.mrf.mxu0
      %508 = vmatprep.mubr.bf16.mxu0 0
      %509 = vmatmul.mubr.bf16.gmra.mxu0 %v443
      %v510 = vpop.f32.mrf.mxu0
      %v511 = vadd.f32 0.0, %v510
      %v512 = vpop.f32.mrf.mxu0
      %v513 = vpop.f32.mrf.mxu0
      %v514 = vadd.f32 0.0, %v513
      %v515 = vpop.f32.mrf.mxu0
      %516 = vmatprep.mubr.bf16.mxu0 0
      %517 = vmatmul.mubr.bf16.gmra.mxu0 %v446
      %v518 = vpop.f32.mrf.mxu0
      %v519 = vadd.f32 0.0, %v518
      %v520 = vpop.f32.mrf.mxu0
      %v521 = vpop.f32.mrf.mxu0
      %v522 = vadd.f32 0.0, %v521
      %v523 = vpop.f32.mrf.mxu0
      %524 = vdwg.mxu0
      %v525 = vld [vmem:[#allocation2] sm:$0xff]
      %v526 = vld [vmem:[#allocation2 + $0x8] sm:$0xff]
      %v527 = vld [vmem:[#allocation2 + $0x10] sm:$0xff]
      %v528 = vld [vmem:[#allocation2 + $0x18] sm:$0xff]
      %v529 = vld [vmem:[#allocation2 + $0x20] sm:$0xff]
      %v530 = vld [vmem:[#allocation2 + $0x28] sm:$0xff]
      %v531 = vld [vmem:[#allocation2 + $0x30] sm:$0xff]
      %v532 = vld [vmem:[#allocation2 + $0x38] sm:$0xff]
      %vm533 = vcmask 523264
      %v534 = vsel %vm533, %v495, -inf
      %535 = vmax.xlane.f32.xlu0 %v534
      %v536 = vpop.xlane.xlu0 %535
      %v537 = vsel %vm533, %v498, -inf
      %538 = vmax.xlane.f32.xlu0 %v537
      %v539 = vpop.xlane.xlu0 %538
      %v540 = vsel %vm533, %v503, -inf
      %541 = vmax.xlane.f32.xlu0 %v540
      %v542 = vpop.xlane.xlu0 %541
      %v543 = vsel %vm533, %v506, -inf
      %544 = vmax.xlane.f32.xlu0 %v543
      %v545 = vpop.xlane.xlu0 %544
      %v546 = vsel %vm533, %v511, -inf
      %547 = vmax.xlane.f32.xlu0 %v546
      %v548 = vpop.xlane.xlu0 %547
      %v549 = vsel %vm533, %v514, -inf
      %550 = vmax.xlane.f32.xlu0 %v549
      %v551 = vpop.xlane.xlu0 %550
      %v552 = vsel %vm533, %v519, -inf
      %553 = vmax.xlane.f32.xlu0 %v552
      %v554 = vpop.xlane.xlu0 %553
      %v555 = vsel %vm533, %v522, -inf
      %556 = vmax.xlane.f32.xlu0 %v555
      %v557 = vpop.xlane.xlu0 %556
      %v558 = vmax.f32 %v525, %v536
      %v559 = vmax.f32 %v526, %v539
      %v560 = vmax.f32 %v527, %v542
      %v561 = vmax.f32 %v528, %v545
      %v562 = vmax.f32 %v529, %v548
      %v563 = vmax.f32 %v530, %v551
      %v564 = vmax.f32 %v531, %v554
      %v565 = vmax.f32 %v532, %v557
      %v566 = vsub.f32 %v525, %v558
      %v567 = vsub.f32 %v526, %v559
      %v568 = vsub.f32 %v527, %v560
      %v569 = vsub.f32 %v528, %v561
      %v570 = vsub.f32 %v529, %v562
      %v571 = vsub.f32 %v530, %v563
      %v572 = vsub.f32 %v531, %v564
      %v573 = vsub.f32 %v532, %v565
      %v574 = vmul.f32 %v566, 1.442695
      %v575 = vpow.pop %v574
      %v576 = vmul.f32 %v567, 1.442695
      %v577 = vpow.pop %v576
      %v578 = vmul.f32 %v568, 1.442695
      %v579 = vpow.pop %v578
      %v580 = vmul.f32 %v569, 1.442695
      %v581 = vpow.pop %v580
      %v582 = vmul.f32 %v570, 1.442695
      %v583 = vpow.pop %v582
      %v584 = vmul.f32 %v571, 1.442695
      %v585 = vpow.pop %v584
      %v586 = vmul.f32 %v572, 1.442695
      %v587 = vpow.pop %v586
      %v588 = vmul.f32 %v573, 1.442695
      %v589 = vpow.pop %v588
      %591 = vset.pattern.permute.xlu0 0
      %592 = vperm.xlu0 %591, %v558
      %v593 = vpop.permute.xlu0 %592
      %596 = vset.pattern.permute.xlu0 0
      %597 = vperm.xlu0 %596, %v559
      %v598 = vpop.permute.xlu0 %597
      %601 = vset.pattern.permute.xlu0 0
      %602 = vperm.xlu0 %601, %v560
      %v603 = vpop.permute.xlu0 %602
      %606 = vset.pattern.permute.xlu0 0
      %607 = vperm.xlu0 %606, %v561
      %v608 = vpop.permute.xlu0 %607
      %611 = vset.pattern.permute.xlu0 0
      %612 = vperm.xlu0 %611, %v562
      %v613 = vpop.permute.xlu0 %612
      %616 = vset.pattern.permute.xlu0 0
      %617 = vperm.xlu0 %616, %v563
      %v618 = vpop.permute.xlu0 %617
      %621 = vset.pattern.permute.xlu0 0
      %622 = vperm.xlu0 %621, %v564
      %v623 = vpop.permute.xlu0 %622
      %626 = vset.pattern.permute.xlu0 0
      %627 = vperm.xlu0 %626, %v565
      %v628 = vpop.permute.xlu0 %627
      %v630 = vsub.f32 %v495, %v593
      %v631 = vsub.f32 %v498, %v598
      %v632 = vsub.f32 %v503, %v603
      %v633 = vsub.f32 %v506, %v608
      %v634 = vsub.f32 %v511, %v613
      %v635 = vsub.f32 %v514, %v618
      %v636 = vsub.f32 %v519, %v623
      %v637 = vsub.f32 %v522, %v628
      %v638 = vmul.f32 %v630, 1.442695
      %v639 = vpow.pop %v638
      %v640 = vmul.f32 %v631, 1.442695
      %v641 = vpow.pop %v640
      %v642 = vmul.f32 %v632, 1.442695
      %v643 = vpow.pop %v642
      %v644 = vmul.f32 %v633, 1.442695
      %v645 = vpow.pop %v644
      %v646 = vmul.f32 %v634, 1.442695
      %v647 = vpow.pop %v646
      %v648 = vmul.f32 %v635, 1.442695
      %v649 = vpow.pop %v648
      %v650 = vmul.f32 %v636, 1.442695
      %v651 = vpow.pop %v650
      %v652 = vmul.f32 %v637, 1.442695
      %v653 = vpow.pop %v652
      %v654 = vld [vmem:[#allocation3] sm:$0xff]
      %v655 = vld [vmem:[#allocation3 + $0x8] sm:$0xff]
      %v656 = vld [vmem:[#allocation3 + $0x10] sm:$0xff]
      %v657 = vld [vmem:[#allocation3 + $0x18] sm:$0xff]
      %v658 = vld [vmem:[#allocation3 + $0x20] sm:$0xff]
      %v659 = vld [vmem:[#allocation3 + $0x28] sm:$0xff]
      %v660 = vld [vmem:[#allocation3 + $0x30] sm:$0xff]
      %v661 = vld [vmem:[#allocation3 + $0x38] sm:$0xff]
      %v662 = vmul.f32 %v575, %v654
      %v663 = vmul.f32 %v577, %v655
      %v664 = vmul.f32 %v579, %v656
      %v665 = vmul.f32 %v581, %v657
      %v666 = vmul.f32 %v583, %v658
      %v667 = vmul.f32 %v585, %v659
      %v668 = vmul.f32 %v587, %v660
      %v669 = vmul.f32 %v589, %v661
      %v670 = vsel %vm533, %v639, 0.0
      %671 = vadd.xlane.f32.xlu0 %v670
      %v672 = vpop.xlane.xlu0 %671
      %v673 = vsel %vm533, %v641, 0.0
      %674 = vadd.xlane.f32.xlu0 %v673
      %v675 = vpop.xlane.xlu0 %674
      %v676 = vsel %vm533, %v643, 0.0
      %677 = vadd.xlane.f32.xlu0 %v676
      %v678 = vpop.xlane.xlu0 %677
      %v679 = vsel %vm533, %v645, 0.0
      %680 = vadd.xlane.f32.xlu0 %v679
      %v681 = vpop.xlane.xlu0 %680
      %v682 = vsel %vm533, %v647, 0.0
      %683 = vadd.xlane.f32.xlu0 %v682
      %v684 = vpop.xlane.xlu0 %683
      %v685 = vsel %vm533, %v649, 0.0
      %686 = vadd.xlane.f32.xlu0 %v685
      %v687 = vpop.xlane.xlu0 %686
      %v688 = vsel %vm533, %v651, 0.0
      %689 = vadd.xlane.f32.xlu0 %v688
      %v690 = vpop.xlane.xlu0 %689
      %v691 = vsel %vm533, %v653, 0.0
      %692 = vadd.xlane.f32.xlu0 %v691
      %v693 = vpop.xlane.xlu0 %692
      %v694 = vadd.f32 %v662, %v672
      %v695 = vadd.f32 %v663, %v675
      %v696 = vadd.f32 %v664, %v678
      %v697 = vadd.f32 %v665, %v681
      %v698 = vadd.f32 %v666, %v684
      %v699 = vadd.f32 %v667, %v687
      %v700 = vadd.f32 %v668, %v690
      %v701 = vadd.f32 %v669, %v693
      %vm702 = vcmask 7168
      %703 = vst.msk [vmem:[#allocation3] sm:$0xff] %vm702, %v694
      %704 = vst.msk [vmem:[#allocation3 + $0x8] sm:$0xff] %vm702, %v695
      %705 = vst.msk [vmem:[#allocation3 + $0x10] sm:$0xff] %vm702, %v696
      %706 = vst.msk [vmem:[#allocation3 + $0x18] sm:$0xff] %vm702, %v697
      %707 = vst.msk [vmem:[#allocation3 + $0x20] sm:$0xff] %vm702, %v698
      %708 = vst.msk [vmem:[#allocation3 + $0x28] sm:$0xff] %vm702, %v699
      %709 = vst.msk [vmem:[#allocation3 + $0x30] sm:$0xff] %vm702, %v700
      %710 = vst.msk [vmem:[#allocation3 + $0x38] sm:$0xff] %vm702, %v701
      %v711 = vld [vmem:[#allocation4] sm:$0xff]
      %v712 = vld [vmem:[#allocation4 + $0x8] sm:$0xff]
      %v713 = vld [vmem:[#allocation4 + $0x10] sm:$0xff]
      %v714 = vld [vmem:[#allocation4 + $0x18] sm:$0xff]
      %v715 = vld [vmem:[#allocation4 + $0x20] sm:$0xff]
      %v716 = vld [vmem:[#allocation4 + $0x28] sm:$0xff]
      %v717 = vld [vmem:[#allocation4 + $0x30] sm:$0xff]
      %v718 = vld [vmem:[#allocation4 + $0x38] sm:$0xff]
      %720 = vset.pattern.permute.xlu0 0
      %721 = vperm.xlu0 %720, %v575
      %v722 = vpop.permute.xlu0 %721
      %725 = vset.pattern.permute.xlu0 0
      %726 = vperm.xlu0 %725, %v577
      %v727 = vpop.permute.xlu0 %726
      %730 = vset.pattern.permute.xlu0 0
      %731 = vperm.xlu0 %730, %v579
      %v732 = vpop.permute.xlu0 %731
      %735 = vset.pattern.permute.xlu0 0
      %736 = vperm.xlu0 %735, %v581
      %v737 = vpop.permute.xlu0 %736
      %740 = vset.pattern.permute.xlu0 0
      %741 = vperm.xlu0 %740, %v583
      %v742 = vpop.permute.xlu0 %741
      %745 = vset.pattern.permute.xlu0 0
      %746 = vperm.xlu0 %745, %v585
      %v747 = vpop.permute.xlu0 %746
      %750 = vset.pattern.permute.xlu0 0
      %751 = vperm.xlu0 %750, %v587
      %v752 = vpop.permute.xlu0 %751
      %755 = vset.pattern.permute.xlu0 0
      %756 = vperm.xlu0 %755, %v589
      %v757 = vpop.permute.xlu0 %756
      %v759 = vmul.f32 %v722, %v711
      %v760 = vmul.f32 %v727, %v712
      %v761 = vmul.f32 %v732, %v713
      %v762 = vmul.f32 %v737, %v714
      %v763 = vmul.f32 %v742, %v715
      %v764 = vmul.f32 %v747, %v716
      %v765 = vmul.f32 %v752, %v717
      %v766 = vmul.f32 %v757, %v718
      %v767 = vpack.c.bf16 %v641, %v639
      %v768 = vpack.c.bf16 %v645, %v643
      %v769 = vpack.c.bf16 %v649, %v647
      %v770 = vpack.c.bf16 %v653, %v651
      %v771 = vld [vmem:[%s332] sm:$0xf]
      %v772 = vld [vmem:[%s332 + $0x4] sm:$0xf]
      %v773 = vld [vmem:[%s332 + $0x8] sm:$0xf]
      %v774 = vld [vmem:[%s332 + $0xc] sm:$0xf]
      %v775 = vld [vmem:[%s332 + $0x10] sm:$0xf]
      %v776 = vld [vmem:[%s332 + $0x14] sm:$0xf]
      %v777 = vld [vmem:[%s332 + $0x18] sm:$0xf]
      %v778 = vld [vmem:[%s332 + $0x1c] sm:$0xf]
      %v787 = vunpack.c.l.b16 %v771
      %v788 = vunpack.c.l.b16 %v772
      %v789 = vunpack.c.l.b16 %v773
      %v790 = vunpack.c.l.b16 %v774
      %v791 = vunpack.c.l.b16 %v775
      %v792 = vunpack.c.l.b16 %v776
      %v793 = vunpack.c.l.b16 %v777
      %v794 = vunpack.c.l.b16 %v778
      %v795 = vpack.c.b16 %v788, %v787
      %v796 = vpack.c.b16 %v790, %v789
      %v797 = vpack.c.b16 %v792, %v791
      %v798 = vpack.c.b16 %v794, %v793
      %v804 = vsel %vm533, %v767, 0
      %v807 = vsel %vm533, %v768, 0
      %v810 = vsel %vm533, %v769, 0
      %v813 = vsel %vm533, %v770, 0
      %815 = vmatprep.subr.bf16.mxu0 0
      %816 = vmatpush1.bf16.msra.mxu0 0
      %817 = vmatprep.subr.bf16.mxu0 0
      %818 = vmatpush1.bf16.msra.mxu0 0
      %819 = vmatprep.subr.bf16.mxu0 0
      %820 = vmatpush1.bf16.msra.mxu0 0
      %821 = vmatprep.subr.bf16.mxu0 0
      %822 = vmatpush1.bf16.msra.mxu0 0
      %823 = vmatprep.subr.bf16.mxu0 0
      %824 = vmatpush1.bf16.msra.mxu0 %v798
      %825 = vmatprep.subr.bf16.mxu0 0
      %826 = vmatpush1.bf16.msra.mxu0 %v797
      %827 = vmatprep.subr.bf16.mxu0 0
      %828 = vmatpush1.bf16.msra.mxu0 %v796
      %829 = vmatprep.subr.bf16.mxu0 0
      %830 = vmatpush1.bf16.msra.mxu0 %v795
      %831 = vmatprep.subr.bf16.mxu0 0
      %832 = vmatpush2.bf16.msra.mxu0 0
      %833 = vmatprep.subr.bf16.mxu0 0
      %834 = vmatpush2.bf16.msra.mxu0 0
      %835 = vmatprep.subr.bf16.mxu0 0
      %836 = vmatpush2.bf16.msra.mxu0 0
      %837 = vmatprep.subr.bf16.mxu0 0
      %838 = vmatpush2.bf16.msra.mxu0 0
      %839 = vmatprep.subr.bf16.mxu0 0
      %840 = vmatpush2.bf16.msra.mxu0 0
      %841 = vmatprep.subr.bf16.mxu0 0
      %842 = vmatpush2.bf16.msra.mxu0 0
      %843 = vmatprep.subr.bf16.mxu0 0
      %844 = vmatpush2.bf16.msra.mxu0 0
      %845 = vmatprep.subr.bf16.mxu0 0
      %846 = vmatpush2.bf16.msra.mxu0 0
      %847 = vmatprep.mubr.bf16.mxu0 0
      %848 = vmatmul.mubr.bf16.gmra.mxu0 %v804
      %v849 = vpop.f32.mrf.mxu0
      %v850 = vadd.f32 0.0, %v849
      %v851 = vpop.f32.mrf.mxu0
      %v852 = vpop.f32.mrf.mxu0
      %v853 = vadd.f32 0.0, %v852
      %v854 = vpop.f32.mrf.mxu0
      %855 = vmatprep.mubr.bf16.mxu0 0
      %856 = vmatmul.mubr.bf16.gmra.mxu0 %v807
      %v857 = vpop.f32.mrf.mxu0
      %v858 = vadd.f32 0.0, %v857
      %v859 = vpop.f32.mrf.mxu0
      %v860 = vpop.f32.mrf.mxu0
      %v861 = vadd.f32 0.0, %v860
      %v862 = vpop.f32.mrf.mxu0
      %863 = vmatprep.mubr.bf16.mxu0 0
      %864 = vmatmul.mubr.bf16.gmra.mxu0 %v810
      %v865 = vpop.f32.mrf.mxu0
      %v866 = vadd.f32 0.0, %v865
      %v867 = vpop.f32.mrf.mxu0
      %v868 = vpop.f32.mrf.mxu0
      %v869 = vadd.f32 0.0, %v868
      %v870 = vpop.f32.mrf.mxu0
      %871 = vmatprep.mubr.bf16.mxu0 0
      %872 = vmatmul.mubr.bf16.gmra.mxu0 %v813
      %v873 = vpop.f32.mrf.mxu0
      %v874 = vadd.f32 0.0, %v873
      %v875 = vpop.f32.mrf.mxu0
      %v876 = vpop.f32.mrf.mxu0
      %v877 = vadd.f32 0.0, %v876
      %v878 = vpop.f32.mrf.mxu0
      %879 = vdwg.mxu0
      %v880 = vadd.f32 %v759, %v850
      %v881 = vadd.f32 %v760, %v853
      %v882 = vadd.f32 %v761, %v858
      %v883 = vadd.f32 %v762, %v861
      %v884 = vadd.f32 %v763, %v866
      %v885 = vadd.f32 %v764, %v869
      %v886 = vadd.f32 %v765, %v874
      %v887 = vadd.f32 %v766, %v877
      %888 = vst.msk [vmem:[#allocation4] sm:$0xff] %vm435, %v880
      %889 = vst.msk [vmem:[#allocation4 + $0x8] sm:$0xff] %vm435, %v881
      %890 = vst.msk [vmem:[#allocation4 + $0x10] sm:$0xff] %vm435, %v882
      %891 = vst.msk [vmem:[#allocation4 + $0x18] sm:$0xff] %vm435, %v883
      %892 = vst.msk [vmem:[#allocation4 + $0x20] sm:$0xff] %vm435, %v884
      %893 = vst.msk [vmem:[#allocation4 + $0x28] sm:$0xff] %vm435, %v885
      %894 = vst.msk [vmem:[#allocation4 + $0x30] sm:$0xff] %vm435, %v886
      %895 = vst.msk [vmem:[#allocation4 + $0x38] sm:$0xff] %vm435, %v887
      %896 = vst.msk [vmem:[#allocation2] sm:$0xff] %vm702, %v558
      %897 = vst.msk [vmem:[#allocation2 + $0x8] sm:$0xff] %vm702, %v559
      %898 = vst.msk [vmem:[#allocation2 + $0x10] sm:$0xff] %vm702, %v560
      %899 = vst.msk [vmem:[#allocation2 + $0x18] sm:$0xff] %vm702, %v561
      %900 = vst.msk [vmem:[#allocation2 + $0x20] sm:$0xff] %vm702, %v562
      %901 = vst.msk [vmem:[#allocation2 + $0x28] sm:$0xff] %vm702, %v563
      %902 = vst.msk [vmem:[#allocation2 + $0x30] sm:$0xff] %vm702, %v564
      %903 = vst.msk [vmem:[#allocation2 + $0x38] sm:$0xff] %vm702, %v565
      // Predicated region
      $region37: #{quant_attention_block.6} parent=31 // pred_check
        %p904 = pneg %p349
      $region38: #{quant_attention_block.6} parent=31 // pred_check_branch
        %906 = sbr.rel (%p904) target = $region40
      $region39: #{quant_attention_block.6} parent=31 // pred_region
        %v907 = vld [vmem:[#allocation4] sm:$0xff]
        %v908 = vld [vmem:[#allocation4 + $0x8] sm:$0xff]
        %v909 = vld [vmem:[#allocation4 + $0x10] sm:$0xff]
        %v910 = vld [vmem:[#allocation4 + $0x18] sm:$0xff]
        %v911 = vld [vmem:[#allocation4 + $0x20] sm:$0xff]
        %v912 = vld [vmem:[#allocation4 + $0x28] sm:$0xff]
        %v913 = vld [vmem:[#allocation4 + $0x30] sm:$0xff]
        %v914 = vld [vmem:[#allocation4 + $0x38] sm:$0xff]
        %v915 = vld [vmem:[#allocation3] sm:$0xff]
        %v916 = vld [vmem:[#allocation3 + $0x8] sm:$0xff]
        %v917 = vld [vmem:[#allocation3 + $0x10] sm:$0xff]
        %v918 = vld [vmem:[#allocation3 + $0x18] sm:$0xff]
        %v919 = vld [vmem:[#allocation3 + $0x20] sm:$0xff]
        %v920 = vld [vmem:[#allocation3 + $0x28] sm:$0xff]
        %v921 = vld [vmem:[#allocation3 + $0x30] sm:$0xff]
        %v922 = vld [vmem:[#allocation3 + $0x38] sm:$0xff]
        %v923 = vrcp.pop %v915
        %v924 = vrcp.pop %v916
        %v925 = vrcp.pop %v917
        %v926 = vrcp.pop %v918
        %v927 = vrcp.pop %v919
        %v928 = vrcp.pop %v920
        %v929 = vrcp.pop %v921
        %v930 = vrcp.pop %v922
        %932 = vset.pattern.permute.xlu0 0
        %933 = vperm.xlu0 %932, %v923
        %v934 = vpop.permute.xlu0 %933
        %937 = vset.pattern.permute.xlu0 0
        %938 = vperm.xlu0 %937, %v924
        %v939 = vpop.permute.xlu0 %938
        %942 = vset.pattern.permute.xlu0 0
        %943 = vperm.xlu0 %942, %v925
        %v944 = vpop.permute.xlu0 %943
        %947 = vset.pattern.permute.xlu0 0
        %948 = vperm.xlu0 %947, %v926
        %v949 = vpop.permute.xlu0 %948
        %952 = vset.pattern.permute.xlu0 0
        %953 = vperm.xlu0 %952, %v927
        %v954 = vpop.permute.xlu0 %953
        %957 = vset.pattern.permute.xlu0 0
        %958 = vperm.xlu0 %957, %v928
        %v959 = vpop.permute.xlu0 %958
        %962 = vset.pattern.permute.xlu0 0
        %963 = vperm.xlu0 %962, %v929
        %v964 = vpop.permute.xlu0 %963
        %967 = vset.pattern.permute.xlu0 0
        %968 = vperm.xlu0 %967, %v930
        %v969 = vpop.permute.xlu0 %968
        %v971 = vmul.f32 %v907, %v934
        %v972 = vmul.f32 %v908, %v939
        %v973 = vmul.f32 %v909, %v944
        %v974 = vmul.f32 %v910, %v949
        %v975 = vmul.f32 %v911, %v954
        %v976 = vmul.f32 %v912, %v959
        %v977 = vmul.f32 %v913, %v964
        %v978 = vmul.f32 %v914, %v969
        %v979 = vpack.c.bf16 %v972, %v971
        %v980 = vpack.c.bf16 %v974, %v973
        %v981 = vpack.c.bf16 %v976, %v975
        %v982 = vpack.c.bf16 %v978, %v977
        %v987 = vunpack.c.l.b16 %v979
        %v988 = vunpack.c.h.b16 %v979
        %v989 = vunpack.c.l.b16 %v980
        %v990 = vunpack.c.h.b16 %v980
        %v991 = vunpack.c.l.b16 %v981
        %v992 = vunpack.c.h.b16 %v981
        %v993 = vunpack.c.l.b16 %v982
        %v994 = vunpack.c.h.b16 %v982
        %v995 = vpack.c.b16 %v987, %v987
        %v996 = vpack.c.b16 %v988, %v988
        %v997 = vpack.c.b16 %v989, %v989
        %v998 = vpack.c.b16 %v990, %v990
        %v999 = vpack.c.b16 %v991, %v991
        %v1000 = vpack.c.b16 %v992, %v992
        %v1001 = vpack.c.b16 %v993, %v993
        %v1002 = vpack.c.b16 %v994, %v994
        %vm1011 = vcmask 60416
        %1012 = vst.msk [vmem:[%s346] sm:$0xf] %vm1011, %v995
        %1013 = vst.msk [vmem:[%s346 + $0x4] sm:$0xf] %vm1011, %v996
        %1014 = vst.msk [vmem:[%s346 + $0x8] sm:$0xf] %vm1011, %v997
        %1015 = vst.msk [vmem:[%s346 + $0xc] sm:$0xf] %vm1011, %v998
        %1016 = vst.msk [vmem:[%s346 + $0x10] sm:$0xf] %vm1011, %v999
        %1017 = vst.msk [vmem:[%s346 + $0x14] sm:$0xf] %vm1011, %v1000
        %1018 = vst.msk [vmem:[%s346 + $0x18] sm:$0xf] %vm1011, %v1001
        %1019 = vst.msk [vmem:[%s346 + $0x1c] sm:$0xf] %vm1011, %v1002
      $region40: #{quant_attention_block.6} parent=31 // pred_fallthru
        _
      %s1020 = smul.u32 8, %s22
      %p1021 = scmp.lt.s32.totalorder %s20, 1
      %s1022 = scalar_select %p1021, %s20, 1
      %p1023 = scmp.lt.s32.totalorder %s21, 3
      %s1024 = scalar_select %p1023, %s21, 3
      %p1025 = scmp.lt.s32.totalorder %s1020, 7
      %s1026 = scalar_select %p1025, %s1020, 7
      %s1027 = smul.addr %s1024, 8
      %s1028 = sadd.s32 %s1026, %s1027
      %s1029 = smul.addr %s1022, 32
      %s1030 = sadd.s32 %s1028, %s1029
      %s1031 = smul.addr %s1030, 4
      %s1032 = scalar_lea.vmem %s3, %s1031
      // Predicated region
      $region41: #{quant_attention_block.6} parent=31 // pred_check
        %p1033 = pneg %p152
      $region42: #{quant_attention_block.6} parent=31 // pred_check_branch
        %1035 = sbr.rel (%p1033) target = $region44
      $region43: #{quant_attention_block.6} parent=31 // pred_region
        %s1036 = smul.u32 8, %s22
      $region44: #{quant_attention_block.6} parent=31 // pred_fallthru
        _
    $region32: #{quant_attention_block.6} parent=5 // pred_fallthru
      _
    %p1037 = scmp.le.s32.totalorder 2, %s9
    // Predicated region
    $region45: #{quant_attention_block.6} parent=5 // pred_check
      %p1038 = pneg %p1037
    $region46: #{quant_attention_block.6} parent=5 // pred_check_branch
      %1040 = sbr.rel (%p1038) target = $region48
    $region47: #{quant_attention_block.6} parent=5 // pred_region
      %s1041 = ssub.s32 %s9, 2
      // Predicated region
      $region49: #{quant_attention_block.6} parent=47 // pred_check
        %p1042 = pneg %p158
      $region50: #{quant_attention_block.6} parent=47 // pred_check_branch
        %1044 = sbr.rel (%p1042) target = $region52
      $region51: #{quant_attention_block.6} parent=47 // pred_region
        %s1045 = smul.u32 8, %s26
        %p1046 = scmp.lt.s32.totalorder %s24, 1
        %s1047 = scalar_select %p1046, %s24, 1
        %p1048 = scmp.lt.s32.totalorder %s25, 3
        %s1049 = scalar_select %p1048, %s25, 3
        %p1050 = scmp.lt.s32.totalorder %s1045, 7
        %s1051 = scalar_select %p1050, %s1045, 7
        %s1052 = smul.addr %s1049, 8
        %s1053 = sadd.s32 %s1051, %s1052
        %s1054 = smul.addr %s1047, 32
        %s1055 = sadd.s32 %s1053, %s1054
        %s1056 = smul.addr %s1055, 4
        %s1057 = scalar_lea.vmem %s3, %s1056
      $region52: #{quant_attention_block.6} parent=47 // pred_fallthru
        _
    $region48: #{quant_attention_block.6} parent=5 // pred_fallthru
      _
  $region6: #{quant_attention_block.6} parent=0 // loop_footer
    %s13 = sadd.s32 1, %s9
  $region7: #{quant_attention_block.6} parent=0 // loop_footer_branch
    %8 = sbr.rel target = $region3
  $region8: #{quant_attention_block.6} parent=0 // loop_exit
    _

</llo_original>
